<compile_context>
chip_gen: v6e
topology: v6e:2x2x1
jax: 0.10.0
libtpu: 0.0.40
codegen_flags: <defaults>
</compile_context>

<pallas_src>
import math

import jax
import jax.numpy as jnp
from jax.experimental import pallas as pl
from jax.experimental.pallas import tpu as pltpu


# ----------------------------------------------------------------------------
# Synthetic GATr-style model dimensions (embed_into_ga -> net -> extract_from_ga)
# ----------------------------------------------------------------------------
IN_DIM = 3          # 3D point coordinates
IN_PAD = 8          # padded to one sublane
MV_CHANNELS = 2     # multivector channels (16 PGA components each)
MV_DIM = 16
SCALAR_DIM = 8
FEAT = MV_CHANNELS * MV_DIM + SCALAR_DIM     # 40
HEADS = 2
HEAD_DIM = 16
HD = HEADS * HEAD_DIM                        # 32
RETURN_OTHER = False

LANE = 128
FEAT_PAD = 128      # FEAT  (40) padded to lane width
QKV_PAD = 128       # 3*HD  (96) padded to lane width
O_PAD = 128         # attention output slab (heads packed into lanes [0, HD))
EX_PAD = 128        # extraction output slab (real scalar output in column 0)

TILE = 128          # row tile for the fused linear kernels
TQ = 128            # flash attention query tile
TK = 128            # flash attention kv tile
VMEM_LIMIT = 32 * 1024 * 1024

NEG_INF = -0.7 * float(jnp.finfo(jnp.float32).max)   # dtype-aware mask value


def _round_up(a, b):
    return -(-a // b) * b


def _pad2d(a, rows, cols, dtype=None):
    """Zero-pad a (possibly 1-D) array into a (rows, cols) lane-dense slab."""
    a = a if a.ndim == 2 else a.reshape(1, -1)
    dtype = dtype or a.dtype
    out = jnp.zeros((rows, cols), dtype)
    return out.at[: a.shape[0], : a.shape[1]].set(a.astype(dtype))


# ----------------------------------------------------------------------------
# Kernel A: embed_into_ga (mv + scalars in one matmul) fused with qkv projection
# ----------------------------------------------------------------------------
def _embed_qkv_kernel(x_ref, we_ref, be_ref, wq_ref, bq_ref, feat_ref, qkv_ref):
    x = x_ref[...]                                                   # (TILE, IN_PAD) f32
    feats = jnp.dot(x, we_ref[...], preferred_element_type=jnp.float32) + be_ref[...]
    feat_ref[...] = feats                                            # f32, pad cols are 0
    qkv = jnp.dot(feats, wq_ref[...], preferred_element_type=jnp.float32) + bq_ref[...]
    qkv_ref[...] = qkv.astype(qkv_ref.dtype)                         # bf16 for the MXU


# ----------------------------------------------------------------------------
# Kernel B: flash-style attention with xformers block-diagonal mask
# ----------------------------------------------------------------------------
def _flash_blockdiag_kernel(seg_smem, segq_ref, segk_ref, qrow_ref, kvrow_ref,
                            o_ref, m_sc, l_sc, acc_sc):
    qi = pl.program_id(0)
    ki = pl.program_id(1)

    @pl.when(ki == 0)
    def _():
        m_sc[...] = jnp.full(m_sc.shape, NEG_INF, jnp.float32)
        l_sc[...] = jnp.zeros(l_sc.shape, jnp.float32)
        acc_sc[...] = jnp.zeros(acc_sc.shape, jnp.float32)

    # Tokens are sorted by graph id, so a q tile interacts with a kv tile only
    # if their segment-id ranges overlap (scalar test on prefetched SMEM ids).
    q0 = qi * TQ
    k0 = ki * TK
    sq_min = seg_smem[q0]
    sq_max = seg_smem[q0 + TQ - 1]
    sk_min = seg_smem[k0]
    sk_max = seg_smem[k0 + TK - 1]
    overlaps = jnp.logical_and(sq_min <= sk_max, sk_min <= sq_max)

    @pl.when(overlaps)
    def _():
        mask = segq_ref[...] == segk_ref[...]            # (TQ,1)==(1,TK) -> (TQ,TK)
        for h in range(HEADS):                           # static unroll, HEADS=2
            qh = qrow_ref[:, h * HEAD_DIM:(h + 1) * HEAD_DIM]           # (TQ, Dh) bf16
            kh = kvrow_ref[:, HD + h * HEAD_DIM: HD + (h + 1) * HEAD_DIM]
            vh = kvrow_ref[:, 2 * HD + h * HEAD_DIM: 2 * HD + (h + 1) * HEAD_DIM]
            s = jax.lax.dot_general(qh, kh, (((1,), (1,)), ((), ())),
                                    preferred_element_type=jnp.float32)
            s = jnp.where(mask, s, NEG_INF)              # f32 scores (q pre-scaled)
            m_prev = m_sc[h]                             # (TQ, 1)
            m_new = jnp.maximum(m_prev, s.max(axis=-1, keepdims=True))
            alpha = jnp.exp(m_prev - m_new)
            p = jnp.exp(s - m_new)
            l_sc[h] = alpha * l_sc[h] + p.sum(axis=-1, keepdims=True)
            acc_sc[h] = alpha * acc_sc[h] + jnp.dot(
                p.astype(vh.dtype), vh, preferred_element_type=jnp.float32)
            m_sc[h] = m_new

    @pl.when(ki == pl.num_programs(1) - 1)
    def _():
        parts = []
        for h in range(HEADS):
            l = l_sc[h]
            l = jnp.where(l == 0.0, 1.0, l)              # guard fully-masked pad rows
            parts.append(acc_sc[h] * pl.reciprocal(l, approx=True))
        parts.append(jnp.zeros((TQ, O_PAD - HD), jnp.float32))
        o_ref[...] = jnp.concatenate(parts, axis=-1).astype(o_ref.dtype)  # 128-lane store


# ----------------------------------------------------------------------------
# Kernel C: out-projection + residual + extract_from_ga
# ----------------------------------------------------------------------------
def _out_extract_kernel(attn_ref, feat_ref, wo_ref, bo_ref, wex_ref, bex_ref,
                        newfeat_ref, ex_ref):
    proj = jnp.dot(attn_ref[...], wo_ref[...],
                   preferred_element_type=jnp.float32) + bo_ref[...]
    newf = feat_ref[...] + proj                          # residual, f32
    newfeat_ref[...] = newf
    ex = jnp.dot(newf, wex_ref[...],
                 preferred_element_type=jnp.float32) + bex_ref[...]
    ex_ref[...] = ex


# ----------------------------------------------------------------------------
# Parameters
# ----------------------------------------------------------------------------
def init_params(key):
    def dense(k, d_in, d_out):
        kw, kb = jax.random.split(k)
        w = jax.random.normal(kw, (d_in, d_out), jnp.float32) / math.sqrt(d_in)
        b = 0.01 * jax.random.normal(kb, (d_out,), jnp.float32)
        return w, b

    keys = jax.random.split(key, 5)
    p = {}
    p["w_mv"], p["b_mv"] = dense(keys[0], IN_DIM, MV_CHANNELS * MV_DIM)
    p["w_s"], p["b_s"] = dense(keys[1], IN_DIM, SCALAR_DIM)
    p["w_qkv"], p["b_qkv"] = dense(keys[2], FEAT, 3 * HD)
    p["w_o"], p["b_o"] = dense(keys[3], HD, FEAT)
    p["w_ex"], p["b_ex"] = dense(keys[4], FEAT, 1)
    return p


# ----------------------------------------------------------------------------
# Forward pass (mirrors XFormersModelWrapper.forward)
# ----------------------------------------------------------------------------
def xformers_model_forward(params, x, batch_ids):
    n = x.shape[0]
    n_pad = _round_up(n, TILE)
    grid_rows = n_pad // TILE

    # ---- pack / pad inputs; pad tokens get a fresh segment id (stays sorted)
    x_pad = jnp.zeros((n_pad, IN_PAD), jnp.float32).at[:n, :IN_DIM].set(
        x.astype(jnp.float32))
    seg = batch_ids.astype(jnp.int32)
    pad_id = seg[n - 1] + 1
    seg_pad = jnp.concatenate(
        [seg, jnp.broadcast_to(pad_id, (n_pad - n,))]).astype(jnp.int32)
    seg_col = seg_pad.reshape(n_pad, 1)
    seg_row = seg_pad.reshape(1, n_pad)

    # ---- fold scale into q weights and pad all params to lane-dense slabs --
    w_embed = jnp.concatenate([params["w_mv"], params["w_s"]], axis=1)   # (3, FEAT)
    b_embed = jnp.concatenate([params["b_mv"], params["b_s"]])           # (FEAT,)
    scale = 1.0 / math.sqrt(HEAD_DIM)
    qscale = jnp.concatenate([jnp.full((HD,), scale, jnp.float32),
                              jnp.ones((2 * HD,), jnp.float32)])
    w_qkv = params["w_qkv"] * qscale[None, :]
    b_qkv = params["b_qkv"] * qscale

    w_embed_p = _pad2d(w_embed, IN_PAD, FEAT_PAD)
    b_embed_p = _pad2d(b_embed, 1, FEAT_PAD)
    w_qkv_p = _pad2d(w_qkv, FEAT_PAD, QKV_PAD)
    b_qkv_p = _pad2d(b_qkv, 1, QKV_PAD)
    w_o_p = _pad2d(params["w_o"], O_PAD, FEAT_PAD, jnp.bfloat16)
    b_o_p = _pad2d(params["b_o"], 1, FEAT_PAD)
    w_ex_p = _pad2d(params["w_ex"], FEAT_PAD, EX_PAD)
    b_ex_p = _pad2d(params["b_ex"], 1, EX_PAD)

    # ---- kernel A: embed_into_ga + qkv projection (row-tiled, fused) -------
    feats_pad, qkv_pad = pl.pallas_call(
        _embed_qkv_kernel,
        out_shape=(jax.ShapeDtypeStruct((n_pad, FEAT_PAD), jnp.float32),
                   jax.ShapeDtypeStruct((n_pad, QKV_PAD), jnp.bfloat16)),
        grid=(grid_rows,),
        in_specs=[pl.BlockSpec((TILE, IN_PAD), lambda i: (i, 0)),
                  pl.BlockSpec((IN_PAD, FEAT_PAD), lambda i: (0, 0)),
                  pl.BlockSpec((1, FEAT_PAD), lambda i: (0, 0)),
                  pl.BlockSpec((FEAT_PAD, QKV_PAD), lambda i: (0, 0)),
                  pl.BlockSpec((1, QKV_PAD), lambda i: (0, 0))],
        out_specs=(pl.BlockSpec((TILE, FEAT_PAD), lambda i: (i, 0)),
                   pl.BlockSpec((TILE, QKV_PAD), lambda i: (i, 0))),
        compiler_params=pltpu.CompilerParams(
            dimension_semantics=("parallel",), vmem_limit_bytes=VMEM_LIMIT),
    )(x_pad, w_embed_p, b_embed_p, w_qkv_p, b_qkv_p)

    # ---- kernel B: block-diagonal flash attention ---------------------------
    # qkv_pad is passed twice: once q-indexed, once kv-indexed; column slicing
    # (q / k / v per head) happens on the VMEM tile inside the kernel, so no
    # narrow 32-lane HBM slices are materialised.
    attn_pad = pl.pallas_call(
        _flash_blockdiag_kernel,
        out_shape=jax.ShapeDtypeStruct((n_pad, O_PAD), jnp.bfloat16),
        grid_spec=pltpu.PrefetchScalarGridSpec(
            num_scalar_prefetch=1,
            grid=(n_pad // TQ, n_pad // TK),
            in_specs=[pl.BlockSpec((TQ, 1), lambda qi, ki, seg: (qi, 0)),
                      pl.BlockSpec((1, TK), lambda qi, ki, seg: (0, ki)),
                      pl.BlockSpec((TQ, QKV_PAD), lambda qi, ki, seg: (qi, 0)),
                      pl.BlockSpec((TK, QKV_PAD), lambda qi, ki, seg: (ki, 0))],
            out_specs=pl.BlockSpec((TQ, O_PAD), lambda qi, ki, seg: (qi, 0)),
            scratch_shapes=[pltpu.VMEM((HEADS, TQ, 1), jnp.float32),
                            pltpu.VMEM((HEADS, TQ, 1), jnp.float32),
                            pltpu.VMEM((HEADS, TQ, HEAD_DIM), jnp.float32)]),
        compiler_params=pltpu.CompilerParams(
            dimension_semantics=("parallel", "arbitrary"),
            vmem_limit_bytes=VMEM_LIMIT),
    )(seg_pad, seg_col, seg_row, qkv_pad, qkv_pad)

    # ---- kernel C: out-projection + residual + extract_from_ga --------------
    newfeats_pad, ex_pad = pl.pallas_call(
        _out_extract_kernel,
        out_shape=(jax.ShapeDtypeStruct((n_pad, FEAT_PAD), jnp.float32),
                   jax.ShapeDtypeStruct((n_pad, EX_PAD), jnp.float32)),
        grid=(grid_rows,),
        in_specs=[pl.BlockSpec((TILE, O_PAD), lambda i: (i, 0)),
                  pl.BlockSpec((TILE, FEAT_PAD), lambda i: (i, 0)),
                  pl.BlockSpec((O_PAD, FEAT_PAD), lambda i: (0, 0)),
                  pl.BlockSpec((1, FEAT_PAD), lambda i: (0, 0)),
                  pl.BlockSpec((FEAT_PAD, EX_PAD), lambda i: (0, 0)),
                  pl.BlockSpec((1, EX_PAD), lambda i: (0, 0))],
        out_specs=(pl.BlockSpec((TILE, FEAT_PAD), lambda i: (i, 0)),
                   pl.BlockSpec((TILE, EX_PAD), lambda i: (i, 0))),
        compiler_params=pltpu.CompilerParams(
            dimension_semantics=("parallel",), vmem_limit_bytes=VMEM_LIMIT),
    )(attn_pad, feats_pad, w_o_p, b_o_p, w_ex_p, b_ex_p)

    # --- model.postprocess_results(inputs, outputs) ---
    # TODO(synk): original wrapper's postprocess is model-specific; identity here.
    outputs = ex_pad[:n, :1]
    if RETURN_OTHER:
        mv_out = newfeats_pad[:n, : MV_CHANNELS * MV_DIM].reshape(n, MV_CHANNELS, MV_DIM)
        other = newfeats_pad[:n, MV_CHANNELS * MV_DIM:FEAT]
        return outputs, (mv_out, other)
    return outputs


# ----------------------------------------------------------------------------
# Pure-JAX f32 reference (same math, no tiling / no bf16)
# ----------------------------------------------------------------------------
def reference_forward(params, x, batch_ids):
    feats = jnp.concatenate([x @ params["w_mv"] + params["b_mv"],
                             x @ params["w_s"] + params["b_s"]], axis=-1)
    qkv = feats @ params["w_qkv"] + params["b_qkv"]
    q, k, v = jnp.split(qkv, 3, axis=-1)

    def heads(t):
        return t.reshape(-1, HEADS, HEAD_DIM).transpose(1, 0, 2)

    qh, kh, vh = heads(q), heads(k), heads(v)
    s = jnp.einsum("hqd,hkd->hqk", qh, kh) / math.sqrt(HEAD_DIM)
    mask = batch_ids[:, None] == batch_ids[None, :]
    s = jnp.where(mask[None], s, -1e30)
    p = jax.nn.softmax(s, axis=-1)
    o = jnp.einsum("hqk,hkd->hqd", p, vh).transpose(1, 0, 2).reshape(-1, HD)
    feats2 = feats + o @ params["w_o"] + params["b_o"]
    return feats2 @ params["w_ex"] + params["b_ex"]


# ----------------------------------------------------------------------------
if __name__ == "__main__":
    key = jax.random.PRNGKey(0)
    k_param, k_x = jax.random.split(key)

    # Packed batch of 3 graphs (PyG Batch style); seqlens = bincount(batch).
    seqlens = [50, 78, 128]
    n_tokens = sum(seqlens)
    x = jax.random.normal(k_x, (n_tokens, IN_DIM), jnp.float32)
    batch_ids = jnp.concatenate(
        [jnp.full((l,), i, jnp.int32) for i, l in enumerate(seqlens)])

    params = init_params(k_param)

    fwd = jax.jit(xformers_model_forward)
    out = jax.block_until_ready(fwd(params, x, batch_ids))

    ref = reference_forward(params, x, batch_ids)
    max_err = float(jnp.max(jnp.abs(out - ref)))

    assert out.shape == (n_tokens, 1)
    assert bool(jnp.all(jnp.isfinite(out)))
    assert max_err < 0.3, f"max abs err vs f32 reference = {max_err}"
    print("KERNEL_OK")
</pallas_src>

<mosaic_0001>
module attributes {stable_mosaic.version = 11 : i64} {
  func.func @_embed_qkv_kernel(%arg0: i32, %arg1: memref<128x8xf32, #tpu.memory_space<vmem>>, %arg2: memref<8x128xf32, #tpu.memory_space<vmem>>, %arg3: memref<1x128xf32, #tpu.memory_space<vmem>>, %arg4: memref<128x128xf32, #tpu.memory_space<vmem>>, %arg5: memref<1x128xf32, #tpu.memory_space<vmem>>, %arg6: memref<128x128xf32, #tpu.memory_space<vmem>>, %arg7: memref<128x128xbf16, #tpu.memory_space<vmem>>) attributes {dimension_semantics = [#tpu.dimension_semantics<parallel>], iteration_bounds = array<i64: 2>, scalar_prefetch = 0 : i64, scratch_operands = 0 : i64, tpu.core_type = #tpu.core_type<tc>, window_params = [{transform_indices = @transform_0, window_bounds = array<i64: 128, 8>}, {pipeline_mode = #tpu.pipeline_mode<synchronous>, transform_indices = @transform_1, window_bounds = array<i64: 8, 128>}, {pipeline_mode = #tpu.pipeline_mode<synchronous>, transform_indices = @transform_2, window_bounds = array<i64: 1, 128>}, {pipeline_mode = #tpu.pipeline_mode<synchronous>, transform_indices = @transform_3, window_bounds = array<i64: 128, 128>}, {pipeline_mode = #tpu.pipeline_mode<synchronous>, transform_indices = @transform_4, window_bounds = array<i64: 1, 128>}, {transform_indices = @transform_5, window_bounds = array<i64: 128, 128>}, {transform_indices = @transform_6, window_bounds = array<i64: 128, 128>}]} {
    %c0 = arith.constant 0 : index
    %c0_0 = arith.constant 0 : index
    %0 = vector.load %arg1[%c0, %c0_0] : memref<128x8xf32, #tpu.memory_space<vmem>>, vector<128x8xf32>
    %c0_1 = arith.constant 0 : index
    %c0_2 = arith.constant 0 : index
    %1 = vector.load %arg2[%c0_1, %c0_2] : memref<8x128xf32, #tpu.memory_space<vmem>>, vector<8x128xf32>
    %cst = arith.constant dense<0.000000e+00> : vector<128x128xf32>
    %2 = tpu.matmul %0, %1, %cst {dimension_numbers = #tpu.dot_dimension_numbers<[1], [0], [0], [1], [0, 0, 1, 1], [], []>} : vector<128x8xf32>, vector<8x128xf32>, vector<128x128xf32> -> vector<128x128xf32>
    %c0_3 = arith.constant 0 : index
    %c0_4 = arith.constant 0 : index
    %3 = vector.load %arg3[%c0_3, %c0_4] : memref<1x128xf32, #tpu.memory_space<vmem>>, vector<1x128xf32>
    %4 = vector.broadcast %3 : vector<1x128xf32> to vector<128x128xf32>
    %5 = arith.addf %2, %4 : vector<128x128xf32>
    %c0_5 = arith.constant 0 : index
    %c0_6 = arith.constant 0 : index
    %6 = vector.load %arg6[%c0_5, %c0_6] : memref<128x128xf32, #tpu.memory_space<vmem>>, vector<128x128xf32>
    tpu.vector_store %arg6[%c0_5, %c0_6], %5 {strides = array<i32>} : memref<128x128xf32, #tpu.memory_space<vmem>>, vector<128x128xf32>,
    %c0_7 = arith.constant 0 : index
    %c0_8 = arith.constant 0 : index
    %7 = vector.load %arg4[%c0_7, %c0_8] : memref<128x128xf32, #tpu.memory_space<vmem>>, vector<128x128xf32>
    %cst_9 = arith.constant dense<0.000000e+00> : vector<128x128xf32>
    %8 = tpu.matmul %5, %7, %cst_9 {dimension_numbers = #tpu.dot_dimension_numbers<[1], [0], [0], [1], [0, 0, 1, 1], [], []>} : vector<128x128xf32>, vector<128x128xf32>, vector<128x128xf32> -> vector<128x128xf32>
    %c0_10 = arith.constant 0 : index
    %c0_11 = arith.constant 0 : index
    %9 = vector.load %arg5[%c0_10, %c0_11] : memref<1x128xf32, #tpu.memory_space<vmem>>, vector<1x128xf32>
    %10 = vector.broadcast %9 : vector<1x128xf32> to vector<128x128xf32>
    %11 = arith.addf %8, %10 : vector<128x128xf32>
    %12 = arith.truncf %11 : vector<128x128xf32> to vector<128x128xbf16>
    %c0_12 = arith.constant 0 : index
    %c0_13 = arith.constant 0 : index
    %13 = vector.load %arg7[%c0_12, %c0_13] : memref<128x128xbf16, #tpu.memory_space<vmem>>, vector<128x128xbf16>
    tpu.vector_store %arg7[%c0_12, %c0_13], %12 {strides = array<i32>} : memref<128x128xbf16, #tpu.memory_space<vmem>>, vector<128x128xbf16>,
    return
  }
  func.func @transform_0(%arg0: i32) -> (i32, i32) {
    %c0_i32 = arith.constant 0 : i32
    %c0_i32_0 = arith.constant 0 : i32
    return %arg0, %c0_i32 : i32, i32
  }
  func.func @transform_1(%arg0: i32) -> (i32, i32) {
    %c0_i32 = arith.constant 0 : i32
    %c0_i32_0 = arith.constant 0 : i32
    %c0_i32_1 = arith.constant 0 : i32
    return %c0_i32, %c0_i32_0 : i32, i32
  }
  func.func @transform_2(%arg0: i32) -> (i32, i32) {
    %c0_i32 = arith.constant 0 : i32
    %c0_i32_0 = arith.constant 0 : i32
    %c0_i32_1 = arith.constant 0 : i32
    return %c0_i32, %c0_i32_0 : i32, i32
  }
  func.func @transform_3(%arg0: i32) -> (i32, i32) {
    %c0_i32 = arith.constant 0 : i32
    %c0_i32_0 = arith.constant 0 : i32
    %c0_i32_1 = arith.constant 0 : i32
    return %c0_i32, %c0_i32_0 : i32, i32
  }
  func.func @transform_4(%arg0: i32) -> (i32, i32) {
    %c0_i32 = arith.constant 0 : i32
    %c0_i32_0 = arith.constant 0 : i32
    %c0_i32_1 = arith.constant 0 : i32
    return %c0_i32, %c0_i32_0 : i32, i32
  }
  func.func @transform_5(%arg0: i32) -> (i32, i32) {
    %c0_i32 = arith.constant 0 : i32
    %c0_i32_0 = arith.constant 0 : i32
    return %arg0, %c0_i32 : i32, i32
  }
  func.func @transform_6(%arg0: i32) -> (i32, i32) {
    %c0_i32 = arith.constant 0 : i32
    %c0_i32_0 = arith.constant 0 : i32
    return %arg0, %c0_i32 : i32, i32
  }
}

module attributes {stable_mosaic.version = 11 : i64} {
  func.func @_out_extract_kernel(%arg0: i32, %arg1: memref<128x128xbf16, #tpu.memory_space<vmem>>, %arg2: memref<128x128xf32, #tpu.memory_space<vmem>>, %arg3: memref<128x128xbf16, #tpu.memory_space<vmem>>, %arg4: memref<1x128xf32, #tpu.memory_space<vmem>>, %arg5: memref<128x128xf32, #tpu.memory_space<vmem>>, %arg6: memref<1x128xf32, #tpu.memory_space<vmem>>, %arg7: memref<128x128xf32, #tpu.memory_space<vmem>>, %arg8: memref<128x128xf32, #tpu.memory_space<vmem>>) attributes {dimension_semantics = [#tpu.dimension_semantics<parallel>], iteration_bounds = array<i64: 2>, scalar_prefetch = 0 : i64, scratch_operands = 0 : i64, tpu.core_type = #tpu.core_type<tc>, window_params = [{transform_indices = @transform_0, window_bounds = array<i64: 128, 128>}, {transform_indices = @transform_1, window_bounds = array<i64: 128, 128>}, {pipeline_mode = #tpu.pipeline_mode<synchronous>, transform_indices = @transform_2, window_bounds = array<i64: 128, 128>}, {pipeline_mode = #tpu.pipeline_mode<synchronous>, transform_indices = @transform_3, window_bounds = array<i64: 1, 128>}, {pipeline_mode = #tpu.pipeline_mode<synchronous>, transform_indices = @transform_4, window_bounds = array<i64: 128, 128>}, {pipeline_mode = #tpu.pipeline_mode<synchronous>, transform_indices = @transform_5, window_bounds = array<i64: 1, 128>}, {transform_indices = @transform_6, window_bounds = array<i64: 128, 128>}, {transform_indices = @transform_7, window_bounds = array<i64: 128, 128>}]} {
    %c0 = arith.constant 0 : index
    %c0_0 = arith.constant 0 : index
    %0 = vector.load %arg1[%c0, %c0_0] : memref<128x128xbf16, #tpu.memory_space<vmem>>, vector<128x128xbf16>
    %c0_1 = arith.constant 0 : index
    %c0_2 = arith.constant 0 : index
    %1 = vector.load %arg3[%c0_1, %c0_2] : memref<128x128xbf16, #tpu.memory_space<vmem>>, vector<128x128xbf16>
    %cst = arith.constant dense<0.000000e+00> : vector<128x128xf32>
    %2 = tpu.matmul %0, %1, %cst {dimension_numbers = #tpu.dot_dimension_numbers<[1], [0], [0], [1], [0, 0, 1, 1], [], []>} : vector<128x128xbf16>, vector<128x128xbf16>, vector<128x128xf32> -> vector<128x128xf32>
    %c0_3 = arith.constant 0 : index
    %c0_4 = arith.constant 0 : index
    %3 = vector.load %arg4[%c0_3, %c0_4] : memref<1x128xf32, #tpu.memory_space<vmem>>, vector<1x128xf32>
    %4 = vector.broadcast %3 : vector<1x128xf32> to vector<128x128xf32>
    %5 = arith.addf %2, %4 : vector<128x128xf32>
    %c0_5 = arith.constant 0 : index
    %c0_6 = arith.constant 0 : index
    %6 = vector.load %arg2[%c0_5, %c0_6] : memref<128x128xf32, #tpu.memory_space<vmem>>, vector<128x128xf32>
    %7 = arith.addf %6, %5 : vector<128x128xf32>
    %c0_7 = arith.constant 0 : index
    %c0_8 = arith.constant 0 : index
    %8 = vector.load %arg7[%c0_7, %c0_8] : memref<128x128xf32, #tpu.memory_space<vmem>>, vector<128x128xf32>
    tpu.vector_store %arg7[%c0_7, %c0_8], %7 {strides = array<i32>} : memref<128x128xf32, #tpu.memory_space<vmem>>, vector<128x128xf32>,
    %c0_9 = arith.constant 0 : index
    %c0_10 = arith.constant 0 : index
    %9 = vector.load %arg5[%c0_9, %c0_10] : memref<128x128xf32, #tpu.memory_space<vmem>>, vector<128x128xf32>
    %cst_11 = arith.constant dense<0.000000e+00> : vector<128x128xf32>
    %10 = tpu.matmul %7, %9, %cst_11 {dimension_numbers = #tpu.dot_dimension_numbers<[1], [0], [0], [1], [0, 0, 1, 1], [], []>} : vector<128x128xf32>, vector<128x128xf32>, vector<128x128xf32> -> vector<128x128xf32>
    %c0_12 = arith.constant 0 : index
    %c0_13 = arith.constant 0 : index
    %11 = vector.load %arg6[%c0_12, %c0_13] : memref<1x128xf32, #tpu.memory_space<vmem>>, vector<1x128xf32>
    %12 = vector.broadcast %11 : vector<1x128xf32> to vector<128x128xf32>
    %13 = arith.addf %10, %12 : vector<128x128xf32>
    %c0_14 = arith.constant 0 : index
    %c0_15 = arith.constant 0 : index
    %14 = vector.load %arg8[%c0_14, %c0_15] : memref<128x128xf32, #tpu.memory_space<vmem>>, vector<128x128xf32>
    tpu.vector_store %arg8[%c0_14, %c0_15], %13 {strides = array<i32>} : memref<128x128xf32, #tpu.memory_space<vmem>>, vector<128x128xf32>,
    return
  }
  func.func @transform_0(%arg0: i32) -> (i32, i32) {
    %c0_i32 = arith.constant 0 : i32
    %c0_i32_0 = arith.constant 0 : i32
    return %arg0, %c0_i32 : i32, i32
  }
  func.func @transform_1(%arg0: i32) -> (i32, i32) {
    %c0_i32 = arith.constant 0 : i32
    %c0_i32_0 = arith.constant 0 : i32
    return %arg0, %c0_i32 : i32, i32
  }
  func.func @transform_2(%arg0: i32) -> (i32, i32) {
    %c0_i32 = arith.constant 0 : i32
    %c0_i32_0 = arith.constant 0 : i32
    %c0_i32_1 = arith.constant 0 : i32
    return %c0_i32, %c0_i32_0 : i32, i32
  }
  func.func @transform_3(%arg0: i32) -> (i32, i32) {
    %c0_i32 = arith.constant 0 : i32
    %c0_i32_0 = arith.constant 0 : i32
    %c0_i32_1 = arith.constant 0 : i32
    return %c0_i32, %c0_i32_0 : i32, i32
  }
  func.func @transform_4(%arg0: i32) -> (i32, i32) {
    %c0_i32 = arith.constant 0 : i32
    %c0_i32_0 = arith.constant 0 : i32
    %c0_i32_1 = arith.constant 0 : i32
    return %c0_i32, %c0_i32_0 : i32, i32
  }
  func.func @transform_5(%arg0: i32) -> (i32, i32) {
    %c0_i32 = arith.constant 0 : i32
    %c0_i32_0 = arith.constant 0 : i32
    %c0_i32_1 = arith.constant 0 : i32
    return %c0_i32, %c0_i32_0 : i32, i32
  }
  func.func @transform_6(%arg0: i32) -> (i32, i32) {
    %c0_i32 = arith.constant 0 : i32
    %c0_i32_0 = arith.constant 0 : i32
    return %arg0, %c0_i32 : i32, i32
  }
  func.func @transform_7(%arg0: i32) -> (i32, i32) {
    %c0_i32 = arith.constant 0 : i32
    %c0_i32_0 = arith.constant 0 : i32
    return %arg0, %c0_i32 : i32, i32
  }
}

module attributes {stable_mosaic.version = 11 : i64} {
  func.func @_flash_blockdiag_kernel(%arg0: i32, %arg1: i32, %arg2: memref<256xi32, #tpu.memory_space<smem>>, %arg3: memref<128x1xi32, #tpu.memory_space<vmem>>, %arg4: memref<1x128xi32, #tpu.memory_space<vmem>>, %arg5: memref<128x128xbf16, #tpu.memory_space<vmem>>, %arg6: memref<128x128xbf16, #tpu.memory_space<vmem>>, %arg7: memref<128x128xbf16, #tpu.memory_space<vmem>>, %arg8: memref<2x128x1xf32, #tpu.memory_space<vmem>>, %arg9: memref<2x128x1xf32, #tpu.memory_space<vmem>>, %arg10: memref<2x128x16xf32, #tpu.memory_space<vmem>>) attributes {dimension_semantics = [#tpu.dimension_semantics<parallel>, #tpu.dimension_semantics<arbitrary>], iteration_bounds = array<i64: 2, 2>, scalar_prefetch = 1 : i64, scratch_operands = 3 : i64, tpu.core_type = #tpu.core_type<tc>, window_params = [{transform_indices = @transform_0, window_bounds = array<i64: 128, 1>}, {transform_indices = @transform_1, window_bounds = array<i64: 1, 128>}, {transform_indices = @transform_2, window_bounds = array<i64: 128, 128>}, {transform_indices = @transform_3, window_bounds = array<i64: 128, 128>}, {transform_indices = @transform_4, window_bounds = array<i64: 128, 128>}]} {
    %c0_i32 = arith.constant 0 : i32
    %0 = arith.cmpi eq, %arg1, %c0_i32 : i32
    %1 = arith.extui %0 : i1 to i32
    %c0_i32_0 = arith.constant 0 : i32
    %2 = arith.cmpi ne, %1, %c0_i32_0 : i32
    scf.if %2 {
      %cst = arith.constant -2.38197633E+38 : f32
      %25 = vector.broadcast %cst : f32 to vector<2x128x1xf32>
      %c0 = arith.constant 0 : index
      %c0_8 = arith.constant 0 : index
      %c0_9 = arith.constant 0 : index
      %26 = vector.load %arg8[%c0, %c0_8, %c0_9] : memref<2x128x1xf32, #tpu.memory_space<vmem>>, vector<2x128x1xf32>
      tpu.vector_store %arg8[%c0, %c0_8, %c0_9], %25 {strides = array<i32>} : memref<2x128x1xf32, #tpu.memory_space<vmem>>, vector<2x128x1xf32>,
      %cst_10 = arith.constant 0.000000e+00 : f32
      %27 = vector.broadcast %cst_10 : f32 to vector<2x128x1xf32>
      %c0_11 = arith.constant 0 : index
      %c0_12 = arith.constant 0 : index
      %c0_13 = arith.constant 0 : index
      %28 = vector.load %arg9[%c0_11, %c0_12, %c0_13] : memref<2x128x1xf32, #tpu.memory_space<vmem>>, vector<2x128x1xf32>
      tpu.vector_store %arg9[%c0_11, %c0_12, %c0_13], %27 {strides = array<i32>} : memref<2x128x1xf32, #tpu.memory_space<vmem>>, vector<2x128x1xf32>,
      %cst_14 = arith.constant 0.000000e+00 : f32
      %29 = vector.broadcast %cst_14 : f32 to vector<2x128x16xf32>
      %c0_15 = arith.constant 0 : index
      %c0_16 = arith.constant 0 : index
      %c0_17 = arith.constant 0 : index
      %30 = vector.load %arg10[%c0_15, %c0_16, %c0_17] : memref<2x128x16xf32, #tpu.memory_space<vmem>>, vector<2x128x16xf32>
      tpu.vector_store %arg10[%c0_15, %c0_16, %c0_17], %29 {strides = array<i32>} : memref<2x128x16xf32, #tpu.memory_space<vmem>>, vector<2x128x16xf32>,
    } else {
    }
    %c128_i32 = arith.constant 128 : i32
    %3 = arith.muli %arg0, %c128_i32 : i32
    %c128_i32_1 = arith.constant 128 : i32
    %4 = arith.muli %arg1, %c128_i32_1 : i32
    %5 = arith.index_cast %3 : i32 to index
    %6 = memref.load %arg2[%5] : memref<256xi32, #tpu.memory_space<smem>>
    %c128_i32_2 = arith.constant 128 : i32
    %7 = arith.addi %3, %c128_i32_2 : i32
    %c1_i32 = arith.constant 1 : i32
    %8 = arith.subi %7, %c1_i32 : i32
    %9 = arith.index_cast %8 : i32 to index
    %10 = memref.load %arg2[%9] : memref<256xi32, #tpu.memory_space<smem>>
    %11 = arith.index_cast %4 : i32 to index
    %12 = memref.load %arg2[%11] : memref<256xi32, #tpu.memory_space<smem>>
    %c128_i32_3 = arith.constant 128 : i32
    %13 = arith.addi %4, %c128_i32_3 : i32
    %c1_i32_4 = arith.constant 1 : i32
    %14 = arith.subi %13, %c1_i32_4 : i32
    %15 = arith.index_cast %14 : i32 to index
    %16 = memref.load %arg2[%15] : memref<256xi32, #tpu.memory_space<smem>>
    %17 = arith.cmpi sle, %6, %16 : i32
    %18 = arith.cmpi sle, %12, %10 : i32
    %19 = arith.andi %17, %18 : i1
    %20 = arith.extui %19 : i1 to i32
    %c0_i32_5 = arith.constant 0 : i32
    %21 = arith.cmpi ne, %20, %c0_i32_5 : i32
    scf.if %21 {
      %c0 = arith.constant 0 : index
      %c0_8 = arith.constant 0 : index
      %25 = vector.load %arg3[%c0, %c0_8] : memref<128x1xi32, #tpu.memory_space<vmem>>, vector<128x1xi32>
      %c0_9 = arith.constant 0 : index
      %c0_10 = arith.constant 0 : index
      %26 = vector.load %arg4[%c0_9, %c0_10] : memref<1x128xi32, #tpu.memory_space<vmem>>, vector<1x128xi32>
      %27 = vector.broadcast %25 : vector<128x1xi32> to vector<128x128xi32>
      %28 = vector.broadcast %26 : vector<1x128xi32> to vector<128x128xi32>
      %29 = arith.cmpi eq, %27, %28 : vector<128x128xi32>
      %c0_11 = arith.constant 0 : index
      %c0_12 = arith.constant 0 : index
      %30 = vector.load %arg5[%c0_11, %c0_12] : memref<128x128xbf16, #tpu.memory_space<vmem>>, vector<128x16xbf16>
      %c0_13 = arith.constant 0 : index
      %c32 = arith.constant 32 : index
      %31 = vector.load %arg6[%c0_13, %c32] : memref<128x128xbf16, #tpu.memory_space<vmem>>, vector<128x16xbf16>
      %c0_14 = arith.constant 0 : index
      %c64 = arith.constant 64 : index
      %32 = vector.load %arg6[%c0_14, %c64] : memref<128x128xbf16, #tpu.memory_space<vmem>>, vector<128x16xbf16>
      %cst = arith.constant dense<0.000000e+00> : vector<128x128xf32>
      %33 = tpu.matmul %30, %31, %cst {dimension_numbers = #tpu.dot_dimension_numbers<[1], [1], [0], [0], [0, 0, 1, 0], [], []>} : vector<128x16xbf16>, vector<128x16xbf16>, vector<128x128xf32> -> vector<128x128xf32>
      %cst_15 = arith.constant -2.38197633E+38 : f32
      %34 = vector.broadcast %cst_15 : f32 to vector<128x128xf32>
      %35 = arith.select %29, %33, %34 : vector<128x128xi1>, vector<128x128xf32>
      %c0_16 = arith.constant 0 : index
      %c0_17 = arith.constant 0 : index
      %c0_18 = arith.constant 0 : index
      %36 = vector.load %arg8[%c0_16, %c0_17, %c0_18] : memref<2x128x1xf32, #tpu.memory_space<vmem>>, vector<1x128x1xf32>
      %37 = vector.shape_cast %36 : vector<1x128x1xf32> to vector<128x1xf32>
      %cst_19 = arith.constant dense<0xFF800000> : vector<128xf32>
      %38 = vector.multi_reduction <maximumf>, %35, %cst_19 [1] : vector<128x128xf32> to vector<128xf32>
      %39 = vector.shape_cast %38 : vector<128xf32> to vector<128x1xf32>
      %40 = arith.maximumf %37, %39 : vector<128x1xf32>
      %41 = arith.subf %37, %40 : vector<128x1xf32>
      %42 = math.exp %41 : vector<128x1xf32>
      %43 = vector.broadcast %40 : vector<128x1xf32> to vector<128x128xf32>
      %44 = arith.subf %35, %43 : vector<128x128xf32>
      %45 = math.exp %44 : vector<128x128xf32>
      %c0_20 = arith.constant 0 : index
      %c0_21 = arith.constant 0 : index
      %c0_22 = arith.constant 0 : index
      %46 = vector.load %arg9[%c0_20, %c0_21, %c0_22] : memref<2x128x1xf32, #tpu.memory_space<vmem>>, vector<1x128x1xf32>
      %47 = vector.shape_cast %46 : vector<1x128x1xf32> to vector<128x1xf32>
      %48 = arith.mulf %42, %47 : vector<128x1xf32>
      %cst_23 = arith.constant dense<0.000000e+00> : vector<128xf32>
      %49 = vector.multi_reduction <add>, %45, %cst_23 [1] : vector<128x128xf32> to vector<128xf32>
      %50 = vector.shape_cast %49 : vector<128xf32> to vector<128x1xf32>
      %51 = arith.addf %48, %50 : vector<128x1xf32>
      %c0_24 = arith.constant 0 : index
      %c0_25 = arith.constant 0 : index
      %c0_26 = arith.constant 0 : index
      %52 = vector.load %arg9[%c0_24, %c0_25, %c0_26] : memref<2x128x1xf32, #tpu.memory_space<vmem>>, vector<1x128x1xf32>
      %53 = vector.shape_cast %52 : vector<1x128x1xf32> to vector<128x1xf32>
      %54 = vector.shape_cast %51 : vector<128x1xf32> to vector<1x128x1xf32>
      tpu.vector_store %arg9[%c0_24, %c0_25, %c0_26], %54 {strides = array<i32>} : memref<2x128x1xf32, #tpu.memory_space<vmem>>, vector<1x128x1xf32>,
      %c0_27 = arith.constant 0 : index
      %c0_28 = arith.constant 0 : index
      %c0_29 = arith.constant 0 : index
      %55 = vector.load %arg10[%c0_27, %c0_28, %c0_29] : memref<2x128x16xf32, #tpu.memory_space<vmem>>, vector<1x128x16xf32>
      %56 = vector.shape_cast %55 : vector<1x128x16xf32> to vector<128x16xf32>
      %57 = vector.broadcast %42 : vector<128x1xf32> to vector<128x16xf32>
      %58 = arith.mulf %57, %56 : vector<128x16xf32>
      %59 = arith.truncf %45 : vector<128x128xf32> to vector<128x128xbf16>
      %cst_30 = arith.constant dense<0.000000e+00> : vector<128x16xf32>
      %60 = tpu.matmul %59, %32, %cst_30 {dimension_numbers = #tpu.dot_dimension_numbers<[1], [0], [0], [1], [0, 0, 1, 1], [], []>} : vector<128x128xbf16>, vector<128x16xbf16>, vector<128x16xf32> -> vector<128x16xf32>
      %61 = arith.addf %58, %60 : vector<128x16xf32>
      %c0_31 = arith.constant 0 : index
      %c0_32 = arith.constant 0 : index
      %c0_33 = arith.constant 0 : index
      %62 = vector.load %arg10[%c0_31, %c0_32, %c0_33] : memref<2x128x16xf32, #tpu.memory_space<vmem>>, vector<1x128x16xf32>
      %63 = vector.shape_cast %62 : vector<1x128x16xf32> to vector<128x16xf32>
      %64 = vector.shape_cast %61 : vector<128x16xf32> to vector<1x128x16xf32>
      tpu.vector_store %arg10[%c0_31, %c0_32, %c0_33], %64 {strides = array<i32>} : memref<2x128x16xf32, #tpu.memory_space<vmem>>, vector<1x128x16xf32>,
      %c0_34 = arith.constant 0 : index
      %c0_35 = arith.constant 0 : index
      %c0_36 = arith.constant 0 : index
      %65 = vector.load %arg8[%c0_34, %c0_35, %c0_36] : memref<2x128x1xf32, #tpu.memory_space<vmem>>, vector<1x128x1xf32>
      %66 = vector.shape_cast %65 : vector<1x128x1xf32> to vector<128x1xf32>
      %67 = vector.shape_cast %40 : vector<128x1xf32> to vector<1x128x1xf32>
      tpu.vector_store %arg8[%c0_34, %c0_35, %c0_36], %67 {strides = array<i32>} : memref<2x128x1xf32, #tpu.memory_space<vmem>>, vector<1x128x1xf32>,
      %c0_37 = arith.constant 0 : index
      %c16 = arith.constant 16 : index
      %68 = vector.load %arg5[%c0_37, %c16] : memref<128x128xbf16, #tpu.memory_space<vmem>>, vector<128x16xbf16>
      %c0_38 = arith.constant 0 : index
      %c48 = arith.constant 48 : index
      %69 = vector.load %arg6[%c0_38, %c48] : memref<128x128xbf16, #tpu.memory_space<vmem>>, vector<128x16xbf16>
      %c0_39 = arith.constant 0 : index
      %c80 = arith.constant 80 : index
      %70 = vector.load %arg6[%c0_39, %c80] : memref<128x128xbf16, #tpu.memory_space<vmem>>, vector<128x16xbf16>
      %cst_40 = arith.constant dense<0.000000e+00> : vector<128x128xf32>
      %71 = tpu.matmul %68, %69, %cst_40 {dimension_numbers = #tpu.dot_dimension_numbers<[1], [1], [0], [0], [0, 0, 1, 0], [], []>} : vector<128x16xbf16>, vector<128x16xbf16>, vector<128x128xf32> -> vector<128x128xf32>
      %cst_41 = arith.constant -2.38197633E+38 : f32
      %72 = vector.broadcast %cst_41 : f32 to vector<128x128xf32>
      %73 = arith.select %29, %71, %72 : vector<128x128xi1>, vector<128x128xf32>
      %c1 = arith.constant 1 : index
      %c0_42 = arith.constant 0 : index
      %c0_43 = arith.constant 0 : index
      %74 = vector.load %arg8[%c1, %c0_42, %c0_43] : memref<2x128x1xf32, #tpu.memory_space<vmem>>, vector<1x128x1xf32>
      %75 = vector.shape_cast %74 : vector<1x128x1xf32> to vector<128x1xf32>
      %cst_44 = arith.constant dense<0xFF800000> : vector<128xf32>
      %76 = vector.multi_reduction <maximumf>, %73, %cst_44 [1] : vector<128x128xf32> to vector<128xf32>
      %77 = vector.shape_cast %76 : vector<128xf32> to vector<128x1xf32>
      %78 = arith.maximumf %75, %77 : vector<128x1xf32>
      %79 = arith.subf %75, %78 : vector<128x1xf32>
      %80 = math.exp %79 : vector<128x1xf32>
      %81 = vector.broadcast %78 : vector<128x1xf32> to vector<128x128xf32>
      %82 = arith.subf %73, %81 : vector<128x128xf32>
      %83 = math.exp %82 : vector<128x128xf32>
      %c1_45 = arith.constant 1 : index
      %c0_46 = arith.constant 0 : index
      %c0_47 = arith.constant 0 : index
      %84 = vector.load %arg9[%c1_45, %c0_46, %c0_47] : memref<2x128x1xf32, #tpu.memory_space<vmem>>, vector<1x128x1xf32>
      %85 = vector.shape_cast %84 : vector<1x128x1xf32> to vector<128x1xf32>
      %86 = arith.mulf %80, %85 : vector<128x1xf32>
      %cst_48 = arith.constant dense<0.000000e+00> : vector<128xf32>
      %87 = vector.multi_reduction <add>, %83, %cst_48 [1] : vector<128x128xf32> to vector<128xf32>
      %88 = vector.shape_cast %87 : vector<128xf32> to vector<128x1xf32>
      %89 = arith.addf %86, %88 : vector<128x1xf32>
      %c1_49 = arith.constant 1 : index
      %c0_50 = arith.constant 0 : index
      %c0_51 = arith.constant 0 : index
      %90 = vector.load %arg9[%c1_49, %c0_50, %c0_51] : memref<2x128x1xf32, #tpu.memory_space<vmem>>, vector<1x128x1xf32>
      %91 = vector.shape_cast %90 : vector<1x128x1xf32> to vector<128x1xf32>
      %92 = vector.shape_cast %89 : vector<128x1xf32> to vector<1x128x1xf32>
      tpu.vector_store %arg9[%c1_49, %c0_50, %c0_51], %92 {strides = array<i32>} : memref<2x128x1xf32, #tpu.memory_space<vmem>>, vector<1x128x1xf32>,
      %c1_52 = arith.constant 1 : index
      %c0_53 = arith.constant 0 : index
      %c0_54 = arith.constant 0 : index
      %93 = vector.load %arg10[%c1_52, %c0_53, %c0_54] : memref<2x128x16xf32, #tpu.memory_space<vmem>>, vector<1x128x16xf32>
      %94 = vector.shape_cast %93 : vector<1x128x16xf32> to vector<128x16xf32>
      %95 = vector.broadcast %80 : vector<128x1xf32> to vector<128x16xf32>
      %96 = arith.mulf %95, %94 : vector<128x16xf32>
      %97 = arith.truncf %83 : vector<128x128xf32> to vector<128x128xbf16>
      %cst_55 = arith.constant dense<0.000000e+00> : vector<128x16xf32>
      %98 = tpu.matmul %97, %70, %cst_55 {dimension_numbers = #tpu.dot_dimension_numbers<[1], [0], [0], [1], [0, 0, 1, 1], [], []>} : vector<128x128xbf16>, vector<128x16xbf16>, vector<128x16xf32> -> vector<128x16xf32>
      %99 = arith.addf %96, %98 : vector<128x16xf32>
      %c1_56 = arith.constant 1 : index
      %c0_57 = arith.constant 0 : index
      %c0_58 = arith.constant 0 : index
      %100 = vector.load %arg10[%c1_56, %c0_57, %c0_58] : memref<2x128x16xf32, #tpu.memory_space<vmem>>, vector<1x128x16xf32>
      %101 = vector.shape_cast %100 : vector<1x128x16xf32> to vector<128x16xf32>
      %102 = vector.shape_cast %99 : vector<128x16xf32> to vector<1x128x16xf32>
      tpu.vector_store %arg10[%c1_56, %c0_57, %c0_58], %102 {strides = array<i32>} : memref<2x128x16xf32, #tpu.memory_space<vmem>>, vector<1x128x16xf32>,
      %c1_59 = arith.constant 1 : index
      %c0_60 = arith.constant 0 : index
      %c0_61 = arith.constant 0 : index
      %103 = vector.load %arg8[%c1_59, %c0_60, %c0_61] : memref<2x128x1xf32, #tpu.memory_space<vmem>>, vector<1x128x1xf32>
      %104 = vector.shape_cast %103 : vector<1x128x1xf32> to vector<128x1xf32>
      %105 = vector.shape_cast %78 : vector<128x1xf32> to vector<1x128x1xf32>
      tpu.vector_store %arg8[%c1_59, %c0_60, %c0_61], %105 {strides = array<i32>} : memref<2x128x1xf32, #tpu.memory_space<vmem>>, vector<1x128x1xf32>,
    } else {
    }
    %c1_i32_6 = arith.constant 1 : i32
    %22 = arith.cmpi eq, %arg1, %c1_i32_6 : i32
    %23 = arith.extui %22 : i1 to i32
    %c0_i32_7 = arith.constant 0 : i32
    %24 = arith.cmpi ne, %23, %c0_i32_7 : i32
    scf.if %24 {
      %c0 = arith.constant 0 : index
      %c0_8 = arith.constant 0 : index
      %c0_9 = arith.constant 0 : index
      %25 = vector.load %arg9[%c0, %c0_8, %c0_9] : memref<2x128x1xf32, #tpu.memory_space<vmem>>, vector<1x128x1xf32>
      %26 = vector.shape_cast %25 : vector<1x128x1xf32> to vector<128x1xf32>
      %cst = arith.constant 0.000000e+00 : f32
      %27 = vector.broadcast %cst : f32 to vector<128x1xf32>
      %28 = arith.cmpf oeq, %26, %27 : vector<128x1xf32>
      %cst_10 = arith.constant 1.000000e+00 : f32
      %29 = vector.broadcast %cst_10 : f32 to vector<128x1xf32>
      %30 = arith.select %28, %29, %26 : vector<128x1xi1>, vector<128x1xf32>
      %c0_11 = arith.constant 0 : index
      %c0_12 = arith.constant 0 : index
      %c0_13 = arith.constant 0 : index
      %31 = vector.load %arg10[%c0_11, %c0_12, %c0_13] : memref<2x128x16xf32, #tpu.memory_space<vmem>>, vector<1x128x16xf32>
      %32 = vector.shape_cast %31 : vector<1x128x16xf32> to vector<128x16xf32>
      %33 = tpu.reciprocal %30 {approx = true} : vector<128x1xf32> -> vector<128x1xf32>
      %34 = vector.broadcast %33 : vector<128x1xf32> to vector<128x16xf32>
      %35 = arith.mulf %32, %34 : vector<128x16xf32>
      %c1 = arith.constant 1 : index
      %c0_14 = arith.constant 0 : index
      %c0_15 = arith.constant 0 : index
      %36 = vector.load %arg9[%c1, %c0_14, %c0_15] : memref<2x128x1xf32, #tpu.memory_space<vmem>>, vector<1x128x1xf32>
      %37 = vector.shape_cast %36 : vector<1x128x1xf32> to vector<128x1xf32>
      %cst_16 = arith.constant 0.000000e+00 : f32
      %38 = vector.broadcast %cst_16 : f32 to vector<128x1xf32>
      %39 = arith.cmpf oeq, %37, %38 : vector<128x1xf32>
      %cst_17 = arith.constant 1.000000e+00 : f32
      %40 = vector.broadcast %cst_17 : f32 to vector<128x1xf32>
      %41 = arith.select %39, %40, %37 : vector<128x1xi1>, vector<128x1xf32>
      %c1_18 = arith.constant 1 : index
      %c0_19 = arith.constant 0 : index
      %c0_20 = arith.constant 0 : index
      %42 = vector.load %arg10[%c1_18, %c0_19, %c0_20] : memref<2x128x16xf32, #tpu.memory_space<vmem>>, vector<1x128x16xf32>
      %43 = vector.shape_cast %42 : vector<1x128x16xf32> to vector<128x16xf32>
      %44 = tpu.reciprocal %41 {approx = true} : vector<128x1xf32> -> vector<128x1xf32>
      %45 = vector.broadcast %44 : vector<128x1xf32> to vector<128x16xf32>
      %46 = arith.mulf %43, %45 : vector<128x16xf32>
      %cst_21 = arith.constant 0.000000e+00 : f32
      %47 = vector.broadcast %cst_21 : f32 to vector<128x96xf32>
      %48 = tpu.concatenate %35, %46, %47 in 1 : vector<128x16xf32>, vector<128x16xf32>, vector<128x96xf32> -> vector<128x128xf32>
      %49 = arith.truncf %48 : vector<128x128xf32> to vector<128x128xbf16>
      %c0_22 = arith.constant 0 : index
      %c0_23 = arith.constant 0 : index
      %50 = vector.load %arg7[%c0_22, %c0_23] : memref<128x128xbf16, #tpu.memory_space<vmem>>, vector<128x128xbf16>
      tpu.vector_store %arg7[%c0_22, %c0_23], %49 {strides = array<i32>} : memref<128x128xbf16, #tpu.memory_space<vmem>>, vector<128x128xbf16>,
    } else {
    }
    return
  }
  func.func @transform_0(%arg0: i32, %arg1: i32, %arg2: memref<256xi32, #tpu.memory_space<smem>>) -> (i32, i32) {
    %c0_i32 = arith.constant 0 : i32
    %c0_i32_0 = arith.constant 0 : i32
    return %arg0, %c0_i32 : i32, i32
  }
  func.func @transform_1(%arg0: i32, %arg1: i32, %arg2: memref<256xi32, #tpu.memory_space<smem>>) -> (i32, i32) {
    %c0_i32 = arith.constant 0 : i32
    %c0_i32_0 = arith.constant 0 : i32
    return %c0_i32, %arg1 : i32, i32
  }
  func.func @transform_2(%arg0: i32, %arg1: i32, %arg2: memref<256xi32, #tpu.memory_space<smem>>) -> (i32, i32) {
    %c0_i32 = arith.constant 0 : i32
    %c0_i32_0 = arith.constant 0 : i32
    return %arg0, %c0_i32 : i32, i32
  }
  func.func @transform_3(%arg0: i32, %arg1: i32, %arg2: memref<256xi32, #tpu.memory_space<smem>>) -> (i32, i32) {
    %c0_i32 = arith.constant 0 : i32
    %c0_i32_0 = arith.constant 0 : i32
    return %arg1, %c0_i32 : i32, i32
  }
  func.func @transform_4(%arg0: i32, %arg1: i32, %arg2: memref<256xi32, #tpu.memory_space<smem>>) -> (i32, i32) {
    %c0_i32 = arith.constant 0 : i32
    %c0_i32_0 = arith.constant 0 : i32
    return %arg0, %c0_i32 : i32, i32
  }
}

</mosaic_0001>

<llo_original>
// kernel: xformers_model_forward.5
$region0: #{xformers_model_forward.5}
  #allocation0 [shape = 'u32[]', space=smem, size = 0x4, offset = 0x4, fixed_abs, tag = 'smem constant byte address 0x4 - core index']
  #allocation1 [shape = 'u32[144,128]{1,0:T(1,128)}', space=vmem, size = 0x12000, scoped, tag = 'internal scratch']
  %s0 = inlined_call_operand.vmem [shape: bf16[256,128], index: 0, kind: input, shape index: {}]
  %s1 = inlined_call_operand.vmem [shape: f32[256,128], index: 1, kind: input, shape index: {}]
  %s2 = inlined_call_operand.vmem [shape: bf16[128,128], index: 2, kind: input, shape index: {}]
  %s3 = inlined_call_operand.vmem [shape: f32[1,128], index: 3, kind: input, shape index: {}]
  %s4 = inlined_call_operand.vmem [shape: f32[128,128], index: 4, kind: input, shape index: {}]
  %s5 = inlined_call_operand.vmem [shape: f32[1,128], index: 5, kind: input, shape index: {}]
  %s6 = inlined_call_operand.hbm [shape: f32[256,128], index: 6, kind: output, shape index: {0}]
  %s7 = inlined_call_operand.vmem [shape: f32[256,128], index: 7, kind: output, shape index: {1}]
  %8 = xla_tuple %s6, %s7
  %s9 = sld [smem:[#allocation0]]
  $region65: #{xformers_model_forward.5} parent=0
    _
  %s11 = ssub.s32 1, %s9
  %s12 = scalar_select 0, %s11, %s9
  $region1: #{xformers_model_forward.5} parent=0
    #allocation2 [shape = 'u8[131072]{0}', space=vmem, size = 0x20000, scoped, tag = 'output window, operand 0']
    #allocation3 [shape = 's32[2]{0}', space=sflag, size = 0x8, scoped, tag = 'scoped memory for xformers_model_forward.5']
    %13 = vsyncpa [#allocation3], 0
    %s14 = scalar_lea.sflag [#allocation3], 1
    %15 = vsyncpa %s14, 0
    loop: start=0, step=1, limit=4
    $region2: #{xformers_model_forward.5} parent=1 // loop_pre_header
      _
    $region3: #{xformers_model_forward.5} parent=1 // loop_header
      %s17 = sphi 0, %s21
      %p18 = scmp.ge.s32.totalorder %s17, 4
      %s27 = sphi 0, %s29
      %s30 = sphi 0, %s27
      %s31 = sphi 0, %s30
      %s47 = sphi 0, %s31
      %s53 = sphi 0, %s55
      %s56 = sphi 0, %s53
      %s57 = sphi 0, %s56
      %s73 = sphi 0, %s57
      %s77 = sphi 0, %s77
      %s79 = sphi 0, %s77
      %s80 = sphi 0, %s79
      %s94 = sphi 0, %s80
      %s98 = sphi 0, %s98
      %s100 = sphi 0, %s98
      %s101 = sphi 0, %s100
      %s115 = sphi 0, %s101
      %s119 = sphi 0, %s119
      %s121 = sphi 0, %s119
      %s122 = sphi 0, %s121
      %s136 = sphi 0, %s122
      %s140 = sphi 0, %s140
      %s142 = sphi 0, %s140
      %s143 = sphi 0, %s142
      %s157 = sphi 0, %s143
      %s163 = sphi 0, %s165
      %s166 = sphi 0, %s163
      %s167 = sphi 0, %s166
      %s183 = sphi 0, %s167
      %s189 = sphi 0, %s191
      %s192 = sphi 0, %s189
      %s193 = sphi 0, %s192
      %s209 = sphi 0, %s193
    $region4: #{xformers_model_forward.5} parent=1 // loop_header_branch
      %20 = sbr.rel (%p18) target = $region8
    $region5: #{xformers_model_forward.5} parent=1 // loop_body
      %s22 = ssub.s32 %s17, 1
      %s23 = ssub.s32 %s17, 2
      %s24 = sadd.s32 %s17, 1
      %s25 = ssub.s32 %s17, %s24
      %p26 = scmp.eq.s32.totalorder %s25, 0
      %s28 = sadd.s32 %s27, 1
      %s29 = scalar_select %p26, %s27, %s28
      %p32 = pneg %p26
      %p33 = scmp.eq.s32.totalorder %s17, 1
      %p34 = por %p32, %p33
      %p35 = scmp.ne.s32.totalorder %s27, %s30
      %p36 = scmp.eq.s32.totalorder %s17, 0
      %p37 = por %p35, %p36
      %p38 = scmp.ne.s32.totalorder %s27, %s30
      %p39 = scmp.eq.s32.totalorder %s22, 1
      %p40 = por %p38, %p39
      %p41 = scmp.ne.s32.totalorder %s30, %s31
      %p42 = scmp.eq.s32.totalorder %s22, 0
      %p43 = por %p41, %p42
      %p44 = scmp.ne.s32.totalorder %s30, %s31
      %p45 = scmp.eq.s32.totalorder %s23, 1
      %p46 = por %p44, %p45
      %p48 = scmp.ne.s32.totalorder %s31, %s47
      %p49 = scmp.eq.s32.totalorder %s23, 0
      %p50 = por %p48, %p49
      %s51 = ssub.s32 %s17, %s24
      %p52 = scmp.eq.s32.totalorder %s51, 0
      %s54 = sadd.s32 %s53, 1
      %s55 = scalar_select %p52, %s53, %s54
      %p58 = pneg %p52
      %p59 = scmp.eq.s32.totalorder %s17, 1
      %p60 = por %p58, %p59
      %p61 = scmp.ne.s32.totalorder %s53, %s56
      %p62 = scmp.eq.s32.totalorder %s17, 0
      %p63 = por %p61, %p62
      %p64 = scmp.ne.s32.totalorder %s53, %s56
      %p65 = scmp.eq.s32.totalorder %s22, 1
      %p66 = por %p64, %p65
      %p67 = scmp.ne.s32.totalorder %s56, %s57
      %p68 = scmp.eq.s32.totalorder %s22, 0
      %p69 = por %p67, %p68
      %p70 = scmp.ne.s32.totalorder %s56, %s57
      %p71 = scmp.eq.s32.totalorder %s23, 1
      %p72 = por %p70, %p71
      %p74 = scmp.ne.s32.totalorder %s57, %s73
      %p75 = scmp.eq.s32.totalorder %s23, 0
      %p76 = por %p74, %p75
      %s78 = sadd.s32 %s77, 1
      %p81 = scmp.eq.s32.totalorder %s17, 1
      %p82 = scmp.ne.s32.totalorder %s77, %s79
      %p83 = scmp.eq.s32.totalorder %s17, 0
      %p84 = por %p82, %p83
      %p85 = scmp.ne.s32.totalorder %s77, %s79
      %p86 = scmp.eq.s32.totalorder %s22, 1
      %p87 = por %p85, %p86
      %p88 = scmp.ne.s32.totalorder %s79, %s80
      %p89 = scmp.eq.s32.totalorder %s22, 0
      %p90 = por %p88, %p89
      %p91 = scmp.ne.s32.totalorder %s79, %s80
      %p92 = scmp.eq.s32.totalorder %s23, 1
      %p93 = por %p91, %p92
      %p95 = scmp.ne.s32.totalorder %s80, %s94
      %p96 = scmp.eq.s32.totalorder %s23, 0
      %p97 = por %p95, %p96
      %s99 = sadd.s32 %s98, 1
      %p102 = scmp.eq.s32.totalorder %s17, 1
      %p103 = scmp.ne.s32.totalorder %s98, %s100
      %p104 = scmp.eq.s32.totalorder %s17, 0
      %p105 = por %p103, %p104
      %p106 = scmp.ne.s32.totalorder %s98, %s100
      %p107 = scmp.eq.s32.totalorder %s22, 1
      %p108 = por %p106, %p107
      %p109 = scmp.ne.s32.totalorder %s100, %s101
      %p110 = scmp.eq.s32.totalorder %s22, 0
      %p111 = por %p109, %p110
      %p112 = scmp.ne.s32.totalorder %s100, %s101
      %p113 = scmp.eq.s32.totalorder %s23, 1
      %p114 = por %p112, %p113
      %p116 = scmp.ne.s32.totalorder %s101, %s115
      %p117 = scmp.eq.s32.totalorder %s23, 0
      %p118 = por %p116, %p117
      %s120 = sadd.s32 %s119, 1
      %p123 = scmp.eq.s32.totalorder %s17, 1
      %p124 = scmp.ne.s32.totalorder %s119, %s121
      %p125 = scmp.eq.s32.totalorder %s17, 0
      %p126 = por %p124, %p125
      %p127 = scmp.ne.s32.totalorder %s119, %s121
      %p128 = scmp.eq.s32.totalorder %s22, 1
      %p129 = por %p127, %p128
      %p130 = scmp.ne.s32.totalorder %s121, %s122
      %p131 = scmp.eq.s32.totalorder %s22, 0
      %p132 = por %p130, %p131
      %p133 = scmp.ne.s32.totalorder %s121, %s122
      %p134 = scmp.eq.s32.totalorder %s23, 1
      %p135 = por %p133, %p134
      %p137 = scmp.ne.s32.totalorder %s122, %s136
      %p138 = scmp.eq.s32.totalorder %s23, 0
      %p139 = por %p137, %p138
      %s141 = sadd.s32 %s140, 1
      %p144 = scmp.eq.s32.totalorder %s17, 1
      %p145 = scmp.ne.s32.totalorder %s140, %s142
      %p146 = scmp.eq.s32.totalorder %s17, 0
      %p147 = por %p145, %p146
      %p148 = scmp.ne.s32.totalorder %s140, %s142
      %p149 = scmp.eq.s32.totalorder %s22, 1
      %p150 = por %p148, %p149
      %p151 = scmp.ne.s32.totalorder %s142, %s143
      %p152 = scmp.eq.s32.totalorder %s22, 0
      %p153 = por %p151, %p152
      %p154 = scmp.ne.s32.totalorder %s142, %s143
      %p155 = scmp.eq.s32.totalorder %s23, 1
      %p156 = por %p154, %p155
      %p158 = scmp.ne.s32.totalorder %s143, %s157
      %p159 = scmp.eq.s32.totalorder %s23, 0
      %p160 = por %p158, %p159
      %s161 = ssub.s32 %s17, %s24
      %p162 = scmp.eq.s32.totalorder %s161, 0
      %s164 = sadd.s32 %s163, 1
      %s165 = scalar_select %p162, %s163, %s164
      %p168 = pneg %p162
      %p169 = scmp.eq.s32.totalorder %s17, 1
      %p170 = por %p168, %p169
      %p171 = scmp.ne.s32.totalorder %s163, %s166
      %p172 = scmp.eq.s32.totalorder %s17, 0
      %p173 = por %p171, %p172
      %p174 = scmp.ne.s32.totalorder %s163, %s166
      %p175 = scmp.eq.s32.totalorder %s22, 1
      %p176 = por %p174, %p175
      %p177 = scmp.ne.s32.totalorder %s166, %s167
      %p178 = scmp.eq.s32.totalorder %s22, 0
      %p179 = por %p177, %p178
      %p180 = scmp.ne.s32.totalorder %s166, %s167
      %p181 = scmp.eq.s32.totalorder %s23, 1
      %p182 = por %p180, %p181
      %p184 = scmp.ne.s32.totalorder %s167, %s183
      %p185 = scmp.eq.s32.totalorder %s23, 0
      %p186 = por %p184, %p185
      %s187 = ssub.s32 %s17, %s24
      %p188 = scmp.eq.s32.totalorder %s187, 0
      %s190 = sadd.s32 %s189, 1
      %s191 = scalar_select %p188, %s189, %s190
      %p194 = pneg %p188
      %p195 = scmp.eq.s32.totalorder %s17, 1
      %p196 = por %p194, %p195
      %p197 = scmp.ne.s32.totalorder %s189, %s192
      %p198 = scmp.eq.s32.totalorder %s17, 0
      %p199 = por %p197, %p198
      %p200 = scmp.ne.s32.totalorder %s189, %s192
      %p201 = scmp.eq.s32.totalorder %s22, 1
      %p202 = por %p200, %p201
      %p203 = scmp.ne.s32.totalorder %s192, %s193
      %p204 = scmp.eq.s32.totalorder %s22, 0
      %p205 = por %p203, %p204
      %p206 = scmp.ne.s32.totalorder %s192, %s193
      %p207 = scmp.eq.s32.totalorder %s23, 1
      %p208 = por %p206, %p207
      %p210 = scmp.ne.s32.totalorder %s193, %s209
      %p211 = scmp.eq.s32.totalorder %s23, 0
      %p212 = por %p210, %p211
      %p213 = scmp.le.s32.totalorder 1, %s17
      %p214 = scmp.lt.s32.totalorder %s17, 3
      %p215 = pnand %p213, %p214
      %p216 = pneg %p215
      // Predicated region
      $region9: #{xformers_model_forward.5} parent=5 // pred_check
        _
      $region10: #{xformers_model_forward.5} parent=5 // pred_check_branch
        %218 = sbr.rel (%p215) target = $region12
      $region11: #{xformers_model_forward.5} parent=5 // pred_region
        %s219 = ssub.s32 %s17, 1
        // Predicated region
        $region13: #{xformers_model_forward.5} parent=11 // pred_check
          %p220 = pneg %p90
        $region14: #{xformers_model_forward.5} parent=11 // pred_check_branch
          %222 = sbr.rel (%p220) target = $region16
        $region15: #{xformers_model_forward.5} parent=11 // pred_region
          _
        $region16: #{xformers_model_forward.5} parent=11 // pred_fallthru
          _
        // Predicated region
        $region17: #{xformers_model_forward.5} parent=11 // pred_check
          %p223 = pneg %p111
        $region18: #{xformers_model_forward.5} parent=11 // pred_check_branch
          %225 = sbr.rel (%p223) target = $region20
        $region19: #{xformers_model_forward.5} parent=11 // pred_region
          _
        $region20: #{xformers_model_forward.5} parent=11 // pred_fallthru
          _
        // Predicated region
        $region21: #{xformers_model_forward.5} parent=11 // pred_check
          %p226 = pneg %p132
        $region22: #{xformers_model_forward.5} parent=11 // pred_check_branch
          %228 = sbr.rel (%p226) target = $region24
        $region23: #{xformers_model_forward.5} parent=11 // pred_region
          _
        $region24: #{xformers_model_forward.5} parent=11 // pred_fallthru
          _
        // Predicated region
        $region25: #{xformers_model_forward.5} parent=11 // pred_check
          %p229 = pneg %p153
        $region26: #{xformers_model_forward.5} parent=11 // pred_check_branch
          %231 = sbr.rel (%p229) target = $region28
        $region27: #{xformers_model_forward.5} parent=11 // pred_region
          _
        $region28: #{xformers_model_forward.5} parent=11 // pred_fallthru
          _
      $region12: #{xformers_model_forward.5} parent=5 // pred_fallthru
        _
      %p232 = scmp.lt.s32.totalorder %s17, 2
      // Predicated region
      $region29: #{xformers_model_forward.5} parent=5 // pred_check
        %p233 = pneg %p232
      $region30: #{xformers_model_forward.5} parent=5 // pred_check_branch
        %235 = sbr.rel (%p233) target = $region32
      $region31: #{xformers_model_forward.5} parent=5 // pred_region
        // Predicated region
        $region33: #{xformers_model_forward.5} parent=31 // pred_check
          %p236 = pneg %p37
        $region34: #{xformers_model_forward.5} parent=31 // pred_check_branch
          %238 = sbr.rel (%p236) target = $region36
        $region35: #{xformers_model_forward.5} parent=31 // pred_region
          %s239 = smul.u32 16, %s17
          %p240 = scmp.lt.s32.totalorder %s239, 31
          %s241 = scalar_select %p240, %s239, 31
          %s242 = smul.addr %s241, 4
          %s243 = scalar_lea.vmem %s0, %s242
          %s244 = smul.u32 16, %s17
        $region36: #{xformers_model_forward.5} parent=31 // pred_fallthru
          _
        // Predicated region
        $region37: #{xformers_model_forward.5} parent=31 // pred_check
          %p245 = pneg %p63
        $region38: #{xformers_model_forward.5} parent=31 // pred_check_branch
          %247 = sbr.rel (%p245) target = $region40
        $region39: #{xformers_model_forward.5} parent=31 // pred_region
          %s248 = smul.u32 16, %s17
          %p249 = scmp.lt.s32.totalorder %s248, 31
          %s250 = scalar_select %p249, %s248, 31
          %s251 = smul.addr %s250, 8
          %s252 = scalar_lea.vmem %s1, %s251
          %s253 = smul.u32 16, %s17
        $region40: #{xformers_model_forward.5} parent=31 // pred_fallthru
          _
      $region32: #{xformers_model_forward.5} parent=5 // pred_fallthru
        _
      %p254 = scmp.le.s32.totalorder 1, %s17
      %p255 = scmp.lt.s32.totalorder %s17, 3
      %p256 = pnand %p254, %p255
      %p257 = pneg %p256
      // Predicated region
      $region41: #{xformers_model_forward.5} parent=5 // pred_check
        _
      $region42: #{xformers_model_forward.5} parent=5 // pred_check_branch
        %259 = sbr.rel (%p256) target = $region44
      $region43: #{xformers_model_forward.5} parent=5 // pred_region
        %s260 = ssub.s32 %s17, 1
        %s261 = smul.u32 16, %s22
        %p262 = scmp.lt.s32.totalorder %s261, 31
        %s263 = scalar_select %p262, %s261, 31
        %s264 = smul.addr %s263, 4
        %s265 = scalar_lea.vmem %s0, %s264
        %p266 = pneg %p43
        %p267 = pneg %p40
        %s268 = smul.u32 16, %s22
        %p269 = scmp.lt.s32.totalorder %s268, 31
        %s270 = scalar_select %p269, %s268, 31
        %s271 = smul.addr %s270, 8
        %s272 = scalar_lea.vmem %s1, %s271
        %p273 = pneg %p69
        %p274 = pneg %p66
        %p275 = pneg %p90
        %p276 = pneg %p87
        %p277 = pneg %p111
        %p278 = pneg %p108
        %p279 = pneg %p132
        %p280 = pneg %p129
        %p281 = pneg %p153
        %p282 = pneg %p150
        %p283 = pneg %p179
        %p284 = pneg %p176
        %s285 = sand.u32 %s166, 1
        %s286 = scalar_lea.sflag [#allocation3], %s285
        %s287 = sand.u32 %s166, 1
        %s288 = smul.addr %s287, 128
        %s289 = scalar_lea.vmem [#allocation2], %s288
        %p290 = pneg %p205
        %p291 = pneg %p202
        %s292 = smul.u32 16, %s22
        %p293 = scmp.lt.s32.totalorder %s292, 31
        %s294 = scalar_select %p293, %s292, 31
        %s295 = smul.addr %s294, 8
        %s296 = scalar_lea.vmem %s7, %s295
        %s297 = smul.u32 16, %s22
        %p298 = scmp.lt.s32.totalorder %s297, 31
        %s299 = scalar_select %p298, %s297, 31
        %s300 = smul.addr %s299, 4
        %s301 = scalar_lea.vmem %s0, %s300
        %s302 = smul.u32 16, %s22
        %s303 = smul.u32 16, %s22
        %p304 = scmp.lt.s32.totalorder %s303, 31
        %s305 = scalar_select %p304, %s303, 31
        %s306 = smul.addr %s305, 8
        %s307 = scalar_lea.vmem %s1, %s306
        %s308 = smul.u32 16, %s22
        %s309 = smul.u32 16, %s22
        %s310 = smul.u32 16, %s22
        %p311 = scmp.lt.s32.totalorder %s310, 31
        %s312 = scalar_select %p311, %s310, 31
        %s313 = smul.addr %s312, 8
        %s314 = scalar_lea.vmem %s7, %s313
        %s315 = smul.u32 16, %s22
        %v317 = vld [vmem:[%s301] sm:$0xf]
        %v318 = vld [vmem:[%s301 + $0x4] sm:$0xf]
        %v319 = vld [vmem:[%s301 + $0x8] sm:$0xf]
        %v320 = vld [vmem:[%s301 + $0xc] sm:$0xf]
        %v321 = vld [vmem:[%s301 + $0x10] sm:$0xf]
        %v322 = vld [vmem:[%s301 + $0x14] sm:$0xf]
        %v323 = vld [vmem:[%s301 + $0x18] sm:$0xf]
        %v324 = vld [vmem:[%s301 + $0x1c] sm:$0xf]
        %v325 = vld [vmem:[%s301 + $0x20] sm:$0xf]
        %v326 = vld [vmem:[%s301 + $0x24] sm:$0xf]
        %v327 = vld [vmem:[%s301 + $0x28] sm:$0xf]
        %v328 = vld [vmem:[%s301 + $0x2c] sm:$0xf]
        %v329 = vld [vmem:[%s301 + $0x30] sm:$0xf]
        %v330 = vld [vmem:[%s301 + $0x34] sm:$0xf]
        %v331 = vld [vmem:[%s301 + $0x38] sm:$0xf]
        %v332 = vld [vmem:[%s301 + $0x3c] sm:$0xf]
        %v333 = vld [vmem:[%s2] sm:$0xf]
        %v334 = vld [vmem:[%s2 + $0x4] sm:$0xf]
        %v335 = vld [vmem:[%s2 + $0x8] sm:$0xf]
        %v336 = vld [vmem:[%s2 + $0xc] sm:$0xf]
        %v337 = vld [vmem:[%s2 + $0x10] sm:$0xf]
        %v338 = vld [vmem:[%s2 + $0x14] sm:$0xf]
        %v339 = vld [vmem:[%s2 + $0x18] sm:$0xf]
        %v340 = vld [vmem:[%s2 + $0x1c] sm:$0xf]
        %v341 = vld [vmem:[%s2 + $0x20] sm:$0xf]
        %v342 = vld [vmem:[%s2 + $0x24] sm:$0xf]
        %v343 = vld [vmem:[%s2 + $0x28] sm:$0xf]
        %v344 = vld [vmem:[%s2 + $0x2c] sm:$0xf]
        %v345 = vld [vmem:[%s2 + $0x30] sm:$0xf]
        %v346 = vld [vmem:[%s2 + $0x34] sm:$0xf]
        %v347 = vld [vmem:[%s2 + $0x38] sm:$0xf]
        %v348 = vld [vmem:[%s2 + $0x3c] sm:$0xf]
        %v349 = vld [vmem:[%s3] sm:$0x1]
        %v351 = vlaneseq
        %v352 = vshrl.u32 %v351, 7
        %v353 = vsub.s32 0, %v352
        %v354 = vrot.slane %v349, %v353
        %v372 = vunpack.c.l.b16 %v317
        %v373 = vunpack.c.l.b16 %v318
        %v374 = vunpack.c.l.b16 %v319
        %v375 = vunpack.c.l.b16 %v320
        %v376 = vunpack.c.l.b16 %v321
        %v377 = vunpack.c.l.b16 %v322
        %v378 = vunpack.c.l.b16 %v323
        %v379 = vunpack.c.l.b16 %v324
        %v380 = vunpack.c.l.b16 %v325
        %v381 = vunpack.c.l.b16 %v326
        %v382 = vunpack.c.l.b16 %v327
        %v383 = vunpack.c.l.b16 %v328
        %v384 = vunpack.c.l.b16 %v329
        %v385 = vunpack.c.l.b16 %v330
        %v386 = vunpack.c.l.b16 %v331
        %v387 = vunpack.c.l.b16 %v332
        %v388 = vpack.c.b16 %v373, %v372
        %v389 = vpack.c.b16 %v375, %v374
        %v390 = vpack.c.b16 %v377, %v376
        %v391 = vpack.c.b16 %v379, %v378
        %v392 = vpack.c.b16 %v381, %v380
        %v393 = vpack.c.b16 %v383, %v382
        %v394 = vpack.c.b16 %v385, %v384
        %v395 = vpack.c.b16 %v387, %v386
        %v420 = vunpack.c.l.b16 %v333
        %v421 = vunpack.c.l.b16 %v334
        %v422 = vunpack.c.l.b16 %v335
        %v423 = vunpack.c.l.b16 %v336
        %v424 = vunpack.c.l.b16 %v337
        %v425 = vunpack.c.l.b16 %v338
        %v426 = vunpack.c.l.b16 %v339
        %v427 = vunpack.c.l.b16 %v340
        %v428 = vunpack.c.l.b16 %v341
        %v429 = vunpack.c.l.b16 %v342
        %v430 = vunpack.c.l.b16 %v343
        %v431 = vunpack.c.l.b16 %v344
        %v432 = vunpack.c.l.b16 %v345
        %v433 = vunpack.c.l.b16 %v346
        %v434 = vunpack.c.l.b16 %v347
        %v435 = vunpack.c.l.b16 %v348
        %v436 = vpack.c.b16 %v421, %v420
        %v437 = vpack.c.b16 %v423, %v422
        %v438 = vpack.c.b16 %v425, %v424
        %v439 = vpack.c.b16 %v427, %v426
        %v440 = vpack.c.b16 %v429, %v428
        %v441 = vpack.c.b16 %v431, %v430
        %v442 = vpack.c.b16 %v433, %v432
        %v443 = vpack.c.b16 %v435, %v434
        %452 = vmatprep.subr.bf16.mxu0 0
        %453 = vmatpush1.bf16.msra.mxu0 %v443
        %454 = vmatprep.subr.bf16.mxu0 0
        %455 = vmatpush1.bf16.msra.mxu0 %v442
        %456 = vmatprep.subr.bf16.mxu0 0
        %457 = vmatpush1.bf16.msra.mxu0 %v441
        %458 = vmatprep.subr.bf16.mxu0 0
        %459 = vmatpush1.bf16.msra.mxu0 %v440
        %460 = vmatprep.subr.bf16.mxu0 0
        %461 = vmatpush1.bf16.msra.mxu0 %v439
        %462 = vmatprep.subr.bf16.mxu0 0
        %463 = vmatpush1.bf16.msra.mxu0 %v438
        %464 = vmatprep.subr.bf16.mxu0 0
        %465 = vmatpush1.bf16.msra.mxu0 %v437
        %466 = vmatprep.subr.bf16.mxu0 0
        %467 = vmatpush1.bf16.msra.mxu0 %v436
        %468 = vmatprep.subr.bf16.mxu0 0
        %469 = vmatpush2.bf16.msra.mxu0 0
        %470 = vmatprep.subr.bf16.mxu0 0
        %471 = vmatpush2.bf16.msra.mxu0 0
        %472 = vmatprep.subr.bf16.mxu0 0
        %473 = vmatpush2.bf16.msra.mxu0 0
        %474 = vmatprep.subr.bf16.mxu0 0
        %475 = vmatpush2.bf16.msra.mxu0 0
        %476 = vmatprep.subr.bf16.mxu0 0
        %477 = vmatpush2.bf16.msra.mxu0 0
        %478 = vmatprep.subr.bf16.mxu0 0
        %479 = vmatpush2.bf16.msra.mxu0 0
        %480 = vmatprep.subr.bf16.mxu0 0
        %481 = vmatpush2.bf16.msra.mxu0 0
        %482 = vmatprep.subr.bf16.mxu0 0
        %483 = vmatpush2.bf16.msra.mxu0 0
        %484 = vmatprep.mubr.bf16.mxu0 0
        %485 = vmatmul.mubr.bf16.gmra.mxu0 %v388
        %v486 = vpop.f32.mrf.mxu0
        %v487 = vadd.f32 %v354, %v486
        %v488 = vpop.f32.mrf.mxu0
        %v489 = vpop.f32.mrf.mxu0
        %v490 = vadd.f32 %v354, %v489
        %v491 = vpop.f32.mrf.mxu0
        %492 = vmatprep.mubr.bf16.mxu0 0
        %493 = vmatmul.mubr.bf16.gmra.mxu0 %v389
        %v494 = vpop.f32.mrf.mxu0
        %v495 = vadd.f32 %v354, %v494
        %v496 = vpop.f32.mrf.mxu0
        %v497 = vpop.f32.mrf.mxu0
        %v498 = vadd.f32 %v354, %v497
        %v499 = vpop.f32.mrf.mxu0
        %500 = vmatprep.mubr.bf16.mxu0 0
        %501 = vmatmul.mubr.bf16.gmra.mxu0 %v390
        %v502 = vpop.f32.mrf.mxu0
        %v503 = vadd.f32 %v354, %v502
        %v504 = vpop.f32.mrf.mxu0
        %v505 = vpop.f32.mrf.mxu0
        %v506 = vadd.f32 %v354, %v505
        %v507 = vpop.f32.mrf.mxu0
        %508 = vmatprep.mubr.bf16.mxu0 0
        %509 = vmatmul.mubr.bf16.gmra.mxu0 %v391
        %v510 = vpop.f32.mrf.mxu0
        %v511 = vadd.f32 %v354, %v510
        %v512 = vpop.f32.mrf.mxu0
        %v513 = vpop.f32.mrf.mxu0
        %v514 = vadd.f32 %v354, %v513
        %v515 = vpop.f32.mrf.mxu0
        %516 = vmatprep.mubr.bf16.mxu0 0
        %517 = vmatmul.mubr.bf16.gmra.mxu0 %v392
        %v518 = vpop.f32.mrf.mxu0
        %v519 = vadd.f32 %v354, %v518
        %v520 = vpop.f32.mrf.mxu0
        %v521 = vpop.f32.mrf.mxu0
        %v522 = vadd.f32 %v354, %v521
        %v523 = vpop.f32.mrf.mxu0
        %524 = vmatprep.mubr.bf16.mxu0 0
        %525 = vmatmul.mubr.bf16.gmra.mxu0 %v393
        %v526 = vpop.f32.mrf.mxu0
        %v527 = vadd.f32 %v354, %v526
        %v528 = vpop.f32.mrf.mxu0
        %v529 = vpop.f32.mrf.mxu0
        %v530 = vadd.f32 %v354, %v529
        %v531 = vpop.f32.mrf.mxu0
        %532 = vmatprep.mubr.bf16.mxu0 0
        %533 = vmatmul.mubr.bf16.gmra.mxu0 %v394
        %v534 = vpop.f32.mrf.mxu0
        %v535 = vadd.f32 %v354, %v534
        %v536 = vpop.f32.mrf.mxu0
        %v537 = vpop.f32.mrf.mxu0
        %v538 = vadd.f32 %v354, %v537
        %v539 = vpop.f32.mrf.mxu0
        %540 = vmatprep.mubr.bf16.mxu0 0
        %541 = vmatmul.mubr.bf16.gmra.mxu0 %v395
        %v542 = vpop.f32.mrf.mxu0
        %v543 = vadd.f32 %v354, %v542
        %v544 = vpop.f32.mrf.mxu0
        %v545 = vpop.f32.mrf.mxu0
        %v546 = vadd.f32 %v354, %v545
        %v547 = vpop.f32.mrf.mxu0
        %548 = vdwg.mxu0
        %v549 = vld [vmem:[%s307] sm:$0xff]
        %v550 = vld [vmem:[%s307 + $0x8] sm:$0xff]
        %v551 = vld [vmem:[%s307 + $0x10] sm:$0xff]
        %v552 = vld [vmem:[%s307 + $0x18] sm:$0xff]
        %v553 = vld [vmem:[%s307 + $0x20] sm:$0xff]
        %v554 = vld [vmem:[%s307 + $0x28] sm:$0xff]
        %v555 = vld [vmem:[%s307 + $0x30] sm:$0xff]
        %v556 = vld [vmem:[%s307 + $0x38] sm:$0xff]
        %v557 = vld [vmem:[%s307 + $0x40] sm:$0xff]
        %v558 = vld [vmem:[%s307 + $0x48] sm:$0xff]
        %v559 = vld [vmem:[%s307 + $0x50] sm:$0xff]
        %v560 = vld [vmem:[%s307 + $0x58] sm:$0xff]
        %v561 = vld [vmem:[%s307 + $0x60] sm:$0xff]
        %v562 = vld [vmem:[%s307 + $0x68] sm:$0xff]
        %v563 = vld [vmem:[%s307 + $0x70] sm:$0xff]
        %v564 = vld [vmem:[%s307 + $0x78] sm:$0xff]
        %v565 = vadd.f32 %v549, %v487
        %v566 = vadd.f32 %v550, %v490
        %v567 = vadd.f32 %v551, %v495
        %v568 = vadd.f32 %v552, %v498
        %v569 = vadd.f32 %v553, %v503
        %v570 = vadd.f32 %v554, %v506
        %v571 = vadd.f32 %v555, %v511
        %v572 = vadd.f32 %v556, %v514
        %v573 = vadd.f32 %v557, %v519
        %v574 = vadd.f32 %v558, %v522
        %v575 = vadd.f32 %v559, %v527
        %v576 = vadd.f32 %v560, %v530
        %v577 = vadd.f32 %v561, %v535
        %v578 = vadd.f32 %v562, %v538
        %v579 = vadd.f32 %v563, %v543
        %v580 = vadd.f32 %v564, %v546
        %581 = vst [vmem:[%s289] sm:$0xff] %v565
        %582 = vst [vmem:[%s289 + $0x8] sm:$0xff] %v566
        %583 = vst [vmem:[%s289 + $0x10] sm:$0xff] %v567
        %584 = vst [vmem:[%s289 + $0x18] sm:$0xff] %v568
        %585 = vst [vmem:[%s289 + $0x20] sm:$0xff] %v569
        %586 = vst [vmem:[%s289 + $0x28] sm:$0xff] %v570
        %587 = vst [vmem:[%s289 + $0x30] sm:$0xff] %v571
        %588 = vst [vmem:[%s289 + $0x38] sm:$0xff] %v572
        %589 = vst [vmem:[%s289 + $0x40] sm:$0xff] %v573
        %590 = vst [vmem:[%s289 + $0x48] sm:$0xff] %v574
        %591 = vst [vmem:[%s289 + $0x50] sm:$0xff] %v575
        %592 = vst [vmem:[%s289 + $0x58] sm:$0xff] %v576
        %593 = vst [vmem:[%s289 + $0x60] sm:$0xff] %v577
        %594 = vst [vmem:[%s289 + $0x68] sm:$0xff] %v578
        %595 = vst [vmem:[%s289 + $0x70] sm:$0xff] %v579
        %596 = vst [vmem:[%s289 + $0x78] sm:$0xff] %v580
        %v597 = vld [vmem:[%s4] sm:$0xff]
        %v598 = vld [vmem:[%s4 + $0x8] sm:$0xff]
        %v599 = vld [vmem:[%s4 + $0x10] sm:$0xff]
        %v600 = vld [vmem:[%s4 + $0x18] sm:$0xff]
        %v601 = vld [vmem:[%s4 + $0x20] sm:$0xff]
        %v602 = vld [vmem:[%s4 + $0x28] sm:$0xff]
        %v603 = vld [vmem:[%s4 + $0x30] sm:$0xff]
        %v604 = vld [vmem:[%s4 + $0x38] sm:$0xff]
        %v605 = vld [vmem:[%s4 + $0x40] sm:$0xff]
        %v606 = vld [vmem:[%s4 + $0x48] sm:$0xff]
        %v607 = vld [vmem:[%s4 + $0x50] sm:$0xff]
        %v608 = vld [vmem:[%s4 + $0x58] sm:$0xff]
        %v609 = vld [vmem:[%s4 + $0x60] sm:$0xff]
        %v610 = vld [vmem:[%s4 + $0x68] sm:$0xff]
        %v611 = vld [vmem:[%s4 + $0x70] sm:$0xff]
        %v612 = vld [vmem:[%s4 + $0x78] sm:$0xff]
        %v613 = vld [vmem:[%s5] sm:$0x1]
        %v615 = vlaneseq
        %v616 = vshrl.u32 %v615, 7
        %v617 = vsub.s32 0, %v616
        %v618 = vrot.slane %v613, %v617
        %620 = vmatprep.subr.mxu0 0.0
        %621 = vmatpush1.msra.mxu0 %v612
        %622 = vmatprep.subr.mxu0 0.0
        %623 = vmatpush1.msra.mxu0 %v611
        %624 = vmatprep.subr.mxu0 0.0
        %625 = vmatpush1.msra.mxu0 %v610
        %626 = vmatprep.subr.mxu0 0.0
        %627 = vmatpush1.msra.mxu0 %v609
        %628 = vmatprep.subr.mxu0 0.0
        %629 = vmatpush1.msra.mxu0 %v608
        %630 = vmatprep.subr.mxu0 0.0
        %631 = vmatpush1.msra.mxu0 %v607
        %632 = vmatprep.subr.mxu0 0.0
        %633 = vmatpush1.msra.mxu0 %v606
        %634 = vmatprep.subr.mxu0 0.0
        %635 = vmatpush1.msra.mxu0 %v605
        %636 = vmatprep.subr.mxu0 0.0
        %637 = vmatpush1.msra.mxu0 %v604
        %638 = vmatprep.subr.mxu0 0.0
        %639 = vmatpush1.msra.mxu0 %v603
        %640 = vmatprep.subr.mxu0 0.0
        %641 = vmatpush1.msra.mxu0 %v602
        %642 = vmatprep.subr.mxu0 0.0
        %643 = vmatpush1.msra.mxu0 %v601
        %644 = vmatprep.subr.mxu0 0.0
        %645 = vmatpush1.msra.mxu0 %v600
        %646 = vmatprep.subr.mxu0 0.0
        %647 = vmatpush1.msra.mxu0 %v599
        %648 = vmatprep.subr.mxu0 0.0
        %649 = vmatpush1.msra.mxu0 %v598
        %650 = vmatprep.subr.mxu0 0.0
        %651 = vmatpush1.msra.mxu0 %v597
        %652 = vmatprep.subr.mxu0 0.0
        %653 = vmatpush2.msra.mxu0 0.0
        %654 = vmatprep.subr.mxu0 0.0
        %655 = vmatpush2.msra.mxu0 0.0
        %656 = vmatprep.subr.mxu0 0.0
        %657 = vmatpush2.msra.mxu0 0.0
        %658 = vmatprep.subr.mxu0 0.0
        %659 = vmatpush2.msra.mxu0 0.0
        %660 = vmatprep.subr.mxu0 0.0
        %661 = vmatpush2.msra.mxu0 0.0
        %662 = vmatprep.subr.mxu0 0.0
        %663 = vmatpush2.msra.mxu0 0.0
        %664 = vmatprep.subr.mxu0 0.0
        %665 = vmatpush2.msra.mxu0 0.0
        %666 = vmatprep.subr.mxu0 0.0
        %667 = vmatpush2.msra.mxu0 0.0
        %668 = vmatprep.subr.mxu0 0.0
        %669 = vmatpush2.msra.mxu0 0.0
        %670 = vmatprep.subr.mxu0 0.0
        %671 = vmatpush2.msra.mxu0 0.0
        %672 = vmatprep.subr.mxu0 0.0
        %673 = vmatpush2.msra.mxu0 0.0
        %674 = vmatprep.subr.mxu0 0.0
        %675 = vmatpush2.msra.mxu0 0.0
        %676 = vmatprep.subr.mxu0 0.0
        %677 = vmatpush2.msra.mxu0 0.0
        %678 = vmatprep.subr.mxu0 0.0
        %679 = vmatpush2.msra.mxu0 0.0
        %680 = vmatprep.subr.mxu0 0.0
        %681 = vmatpush2.msra.mxu0 0.0
        %682 = vmatprep.subr.mxu0 0.0
        %683 = vmatpush2.msra.mxu0 0.0
        %684 = vmatprep.mubr.f32.mxu0 0.0
        %685 = vmatmul.mubr.f32.gmra.mxu0 %v565
        %v686 = vpop.f32.mrf.mxu0
        %v687 = vadd.f32 %v618, %v686
        %v688 = vpop.f32.mrf.mxu0
        %689 = vmatprep.mubr.f32.mxu0 0.0
        %690 = vmatmul.mubr.f32.gmra.mxu0 %v566
        %v691 = vpop.f32.mrf.mxu0
        %v692 = vadd.f32 %v618, %v691
        %v693 = vpop.f32.mrf.mxu0
        %694 = vmatprep.mubr.f32.mxu0 0.0
        %695 = vmatmul.mubr.f32.gmra.mxu0 %v567
        %v696 = vpop.f32.mrf.mxu0
        %v697 = vadd.f32 %v618, %v696
        %v698 = vpop.f32.mrf.mxu0
        %699 = vmatprep.mubr.f32.mxu0 0.0
        %700 = vmatmul.mubr.f32.gmra.mxu0 %v568
        %v701 = vpop.f32.mrf.mxu0
        %v702 = vadd.f32 %v618, %v701
        %v703 = vpop.f32.mrf.mxu0
        %704 = vmatprep.mubr.f32.mxu0 0.0
        %705 = vmatmul.mubr.f32.gmra.mxu0 %v569
        %v706 = vpop.f32.mrf.mxu0
        %v707 = vadd.f32 %v618, %v706
        %v708 = vpop.f32.mrf.mxu0
        %709 = vmatprep.mubr.f32.mxu0 0.0
        %710 = vmatmul.mubr.f32.gmra.mxu0 %v570
        %v711 = vpop.f32.mrf.mxu0
        %v712 = vadd.f32 %v618, %v711
        %v713 = vpop.f32.mrf.mxu0
        %714 = vmatprep.mubr.f32.mxu0 0.0
        %715 = vmatmul.mubr.f32.gmra.mxu0 %v571
        %v716 = vpop.f32.mrf.mxu0
        %v717 = vadd.f32 %v618, %v716
        %v718 = vpop.f32.mrf.mxu0
        %719 = vmatprep.mubr.f32.mxu0 0.0
        %720 = vmatmul.mubr.f32.gmra.mxu0 %v572
        %v721 = vpop.f32.mrf.mxu0
        %v722 = vadd.f32 %v618, %v721
        %v723 = vpop.f32.mrf.mxu0
        %724 = vmatprep.mubr.f32.mxu0 0.0
        %725 = vmatmul.mubr.f32.gmra.mxu0 %v573
        %v726 = vpop.f32.mrf.mxu0
        %v727 = vadd.f32 %v618, %v726
        %v728 = vpop.f32.mrf.mxu0
        %729 = vmatprep.mubr.f32.mxu0 0.0
        %730 = vmatmul.mubr.f32.gmra.mxu0 %v574
        %v731 = vpop.f32.mrf.mxu0
        %v732 = vadd.f32 %v618, %v731
        %v733 = vpop.f32.mrf.mxu0
        %734 = vmatprep.mubr.f32.mxu0 0.0
        %735 = vmatmul.mubr.f32.gmra.mxu0 %v575
        %v736 = vpop.f32.mrf.mxu0
        %v737 = vadd.f32 %v618, %v736
        %v738 = vpop.f32.mrf.mxu0
        %739 = vmatprep.mubr.f32.mxu0 0.0
        %740 = vmatmul.mubr.f32.gmra.mxu0 %v576
        %v741 = vpop.f32.mrf.mxu0
        %v742 = vadd.f32 %v618, %v741
        %v743 = vpop.f32.mrf.mxu0
        %744 = vmatprep.mubr.f32.mxu0 0.0
        %745 = vmatmul.mubr.f32.gmra.mxu0 %v577
        %v746 = vpop.f32.mrf.mxu0
        %v747 = vadd.f32 %v618, %v746
        %v748 = vpop.f32.mrf.mxu0
        %749 = vmatprep.mubr.f32.mxu0 0.0
        %750 = vmatmul.mubr.f32.gmra.mxu0 %v578
        %v751 = vpop.f32.mrf.mxu0
        %v752 = vadd.f32 %v618, %v751
        %v753 = vpop.f32.mrf.mxu0
        %754 = vmatprep.mubr.f32.mxu0 0.0
        %755 = vmatmul.mubr.f32.gmra.mxu0 %v579
        %v756 = vpop.f32.mrf.mxu0
        %v757 = vadd.f32 %v618, %v756
        %v758 = vpop.f32.mrf.mxu0
        %759 = vmatprep.mubr.f32.mxu0 0.0
        %760 = vmatmul.mubr.f32.gmra.mxu0 %v580
        %v761 = vpop.f32.mrf.mxu0
        %v762 = vadd.f32 %v618, %v761
        %v763 = vpop.f32.mrf.mxu0
        %764 = vdwg.mxu0
        %765 = vst [vmem:[%s314] sm:$0xff] %v687
        %766 = vst [vmem:[%s314 + $0x8] sm:$0xff] %v692
        %767 = vst [vmem:[%s314 + $0x10] sm:$0xff] %v697
        %768 = vst [vmem:[%s314 + $0x18] sm:$0xff] %v702
        %769 = vst [vmem:[%s314 + $0x20] sm:$0xff] %v707
        %770 = vst [vmem:[%s314 + $0x28] sm:$0xff] %v712
        %771 = vst [vmem:[%s314 + $0x30] sm:$0xff] %v717
        %772 = vst [vmem:[%s314 + $0x38] sm:$0xff] %v722
        %773 = vst [vmem:[%s314 + $0x40] sm:$0xff] %v727
        %774 = vst [vmem:[%s314 + $0x48] sm:$0xff] %v732
        %775 = vst [vmem:[%s314 + $0x50] sm:$0xff] %v737
        %776 = vst [vmem:[%s314 + $0x58] sm:$0xff] %v742
        %777 = vst [vmem:[%s314 + $0x60] sm:$0xff] %v747
        %778 = vst [vmem:[%s314 + $0x68] sm:$0xff] %v752
        %779 = vst [vmem:[%s314 + $0x70] sm:$0xff] %v757
        %780 = vst [vmem:[%s314 + $0x78] sm:$0xff] %v762
        %s781 = sand.u32 %s166, 1
        %s782 = scalar_lea.sflag [#allocation3], %s781
        %s783 = sand.u32 %s166, 1
        %s784 = smul.addr %s783, 128
        %s785 = scalar_lea.vmem [#allocation2], %s784
        %s786 = smul.u32 16, %s22
        %p787 = scmp.lt.s32.totalorder %s786, 31
        %s788 = scalar_select %p787, %s786, 31
        %s789 = smul.addr %s788, 8
        %s790 = scalar_lea.vmem %s7, %s789
        // Predicated region
        $region45: #{xformers_model_forward.5} parent=43 // pred_check
          %p791 = pneg %p176
        $region46: #{xformers_model_forward.5} parent=43 // pred_check_branch
          %793 = sbr.rel (%p791) target = $region48
        $region47: #{xformers_model_forward.5} parent=43 // pred_region
          %s794 = smul.u32 16, %s22
          %s796 = ssub.s32 2048, 2048
          %797 = vsyncadd %s782, %s796
          %s798 = smul.addr %s794, 128
          %s799 = scalar_lea.hbm %s6, %s798
          %s800 = sshll.u32 %s785, 4
          %s801 = int_to_ptr.vmem [resolvable:$true] %s800
          %806 = dma.vmem_to_hbm [thread:$0]  %s801, 2048, %s799, %s782, 128, 128, 8
        $region48: #{xformers_model_forward.5} parent=43 // pred_fallthru
          _
        // Predicated region
        $region49: #{xformers_model_forward.5} parent=43 // pred_check
          %p807 = pneg %p202
        $region50: #{xformers_model_forward.5} parent=43 // pred_check_branch
          %809 = sbr.rel (%p807) target = $region52
        $region51: #{xformers_model_forward.5} parent=43 // pred_region
          %s810 = smul.u32 16, %s22
        $region52: #{xformers_model_forward.5} parent=43 // pred_fallthru
          _
      $region44: #{xformers_model_forward.5} parent=5 // pred_fallthru
        _
      %p811 = scmp.le.s32.totalorder 2, %s17
      // Predicated region
      $region53: #{xformers_model_forward.5} parent=5 // pred_check
        %p812 = pneg %p811
      $region54: #{xformers_model_forward.5} parent=5 // pred_check_branch
        %814 = sbr.rel (%p812) target = $region56
      $region55: #{xformers_model_forward.5} parent=5 // pred_region
        %s815 = ssub.s32 %s17, 2
        // Predicated region
        $region57: #{xformers_model_forward.5} parent=55 // pred_check
          %p816 = pneg %p182
        $region58: #{xformers_model_forward.5} parent=55 // pred_check_branch
          %818 = sbr.rel (%p816) target = $region60
        $region59: #{xformers_model_forward.5} parent=55 // pred_region
          %s819 = sand.u32 %s167, 1
          %s820 = scalar_lea.sflag [#allocation3], %s819
          %s821 = sand.u32 %s167, 1
          %s822 = smul.addr %s821, 128
          %s823 = scalar_lea.vmem [#allocation2], %s822
          %824 = dma.done %s820, 2048
        $region60: #{xformers_model_forward.5} parent=55 // pred_fallthru
          _
        // Predicated region
        $region61: #{xformers_model_forward.5} parent=55 // pred_check
          %p825 = pneg %p208
        $region62: #{xformers_model_forward.5} parent=55 // pred_check_branch
          %827 = sbr.rel (%p825) target = $region64
        $region63: #{xformers_model_forward.5} parent=55 // pred_region
          %s828 = smul.u32 16, %s23
          %p829 = scmp.lt.s32.totalorder %s828, 31
          %s830 = scalar_select %p829, %s828, 31
          %s831 = smul.addr %s830, 8
          %s832 = scalar_lea.vmem %s7, %s831
        $region64: #{xformers_model_forward.5} parent=55 // pred_fallthru
          _
      $region56: #{xformers_model_forward.5} parent=5 // pred_fallthru
        _
    $region6: #{xformers_model_forward.5} parent=1 // loop_footer
      %s21 = sadd.s32 1, %s17
    $region7: #{xformers_model_forward.5} parent=1 // loop_footer_branch
      %16 = sbr.rel target = $region3
    $region8: #{xformers_model_forward.5} parent=1 // loop_exit
      _
    %833 = vsyncpa [#allocation3], 1
    %s834 = scalar_lea.sflag [#allocation3], 1
    %835 = vsyncpa %s834, 1

// kernel: xformers_model_forward.3
$region0: #{xformers_model_forward.3}
  #allocation0 [shape = 'u32[]', space=smem, size = 0x4, offset = 0x4, fixed_abs, tag = 'smem constant byte address 0x4 - core index']
  #allocation1 [shape = 'u32[144,128]{1,0:T(1,128)}', space=vmem, size = 0x12000, scoped, tag = 'internal scratch']
  %s0 = inlined_call_operand.vmem [shape: f32[256,8], index: 0, kind: input, shape index: {}]
  %s1 = inlined_call_operand.vmem [shape: f32[8,128], index: 1, kind: input, shape index: {}]
  %s2 = inlined_call_operand.vmem [shape: f32[1,128], index: 2, kind: input, shape index: {}]
  %s3 = inlined_call_operand.vmem [shape: f32[128,128], index: 3, kind: input, shape index: {}]
  %s4 = inlined_call_operand.vmem [shape: f32[1,128], index: 4, kind: input, shape index: {}]
  %s5 = inlined_call_operand.vmem [shape: f32[256,128], index: 5, kind: output, shape index: {0}]
  %s6 = inlined_call_operand.vmem [shape: bf16[256,128], index: 6, kind: output, shape index: {1}]
  %7 = xla_tuple %s5, %s6
  %s8 = sld [smem:[#allocation0]]
  $region61: #{xformers_model_forward.3} parent=0
    _
  %s10 = ssub.s32 1, %s8
  %s11 = scalar_select 0, %s10, %s8
  loop: start=0, step=1, limit=4
  $region2: #{xformers_model_forward.3} parent=0 // loop_pre_header
    _
  $region3: #{xformers_model_forward.3} parent=0 // loop_header
    %s13 = sphi 0, %s17
    %p14 = scmp.ge.s32.totalorder %s13, 4
    %s23 = sphi 0, %s25
    %s26 = sphi 0, %s23
    %s27 = sphi 0, %s26
    %s43 = sphi 0, %s27
    %s47 = sphi 0, %s47
    %s49 = sphi 0, %s47
    %s50 = sphi 0, %s49
    %s64 = sphi 0, %s50
    %s68 = sphi 0, %s68
    %s70 = sphi 0, %s68
    %s71 = sphi 0, %s70
    %s85 = sphi 0, %s71
    %s89 = sphi 0, %s89
    %s91 = sphi 0, %s89
    %s92 = sphi 0, %s91
    %s106 = sphi 0, %s92
    %s110 = sphi 0, %s110
    %s112 = sphi 0, %s110
    %s113 = sphi 0, %s112
    %s127 = sphi 0, %s113
    %s133 = sphi 0, %s135
    %s136 = sphi 0, %s133
    %s137 = sphi 0, %s136
    %s153 = sphi 0, %s137
    %s159 = sphi 0, %s161
    %s162 = sphi 0, %s159
    %s163 = sphi 0, %s162
    %s179 = sphi 0, %s163
  $region4: #{xformers_model_forward.3} parent=0 // loop_header_branch
    %16 = sbr.rel (%p14) target = $region8
  $region5: #{xformers_model_forward.3} parent=0 // loop_body
    %s18 = ssub.s32 %s13, 1
    %s19 = ssub.s32 %s13, 2
    %s20 = sadd.s32 %s13, 1
    %s21 = ssub.s32 %s13, %s20
    %p22 = scmp.eq.s32.totalorder %s21, 0
    %s24 = sadd.s32 %s23, 1
    %s25 = scalar_select %p22, %s23, %s24
    %p28 = pneg %p22
    %p29 = scmp.eq.s32.totalorder %s13, 1
    %p30 = por %p28, %p29
    %p31 = scmp.ne.s32.totalorder %s23, %s26
    %p32 = scmp.eq.s32.totalorder %s13, 0
    %p33 = por %p31, %p32
    %p34 = scmp.ne.s32.totalorder %s23, %s26
    %p35 = scmp.eq.s32.totalorder %s18, 1
    %p36 = por %p34, %p35
    %p37 = scmp.ne.s32.totalorder %s26, %s27
    %p38 = scmp.eq.s32.totalorder %s18, 0
    %p39 = por %p37, %p38
    %p40 = scmp.ne.s32.totalorder %s26, %s27
    %p41 = scmp.eq.s32.totalorder %s19, 1
    %p42 = por %p40, %p41
    %p44 = scmp.ne.s32.totalorder %s27, %s43
    %p45 = scmp.eq.s32.totalorder %s19, 0
    %p46 = por %p44, %p45
    %s48 = sadd.s32 %s47, 1
    %p51 = scmp.eq.s32.totalorder %s13, 1
    %p52 = scmp.ne.s32.totalorder %s47, %s49
    %p53 = scmp.eq.s32.totalorder %s13, 0
    %p54 = por %p52, %p53
    %p55 = scmp.ne.s32.totalorder %s47, %s49
    %p56 = scmp.eq.s32.totalorder %s18, 1
    %p57 = por %p55, %p56
    %p58 = scmp.ne.s32.totalorder %s49, %s50
    %p59 = scmp.eq.s32.totalorder %s18, 0
    %p60 = por %p58, %p59
    %p61 = scmp.ne.s32.totalorder %s49, %s50
    %p62 = scmp.eq.s32.totalorder %s19, 1
    %p63 = por %p61, %p62
    %p65 = scmp.ne.s32.totalorder %s50, %s64
    %p66 = scmp.eq.s32.totalorder %s19, 0
    %p67 = por %p65, %p66
    %s69 = sadd.s32 %s68, 1
    %p72 = scmp.eq.s32.totalorder %s13, 1
    %p73 = scmp.ne.s32.totalorder %s68, %s70
    %p74 = scmp.eq.s32.totalorder %s13, 0
    %p75 = por %p73, %p74
    %p76 = scmp.ne.s32.totalorder %s68, %s70
    %p77 = scmp.eq.s32.totalorder %s18, 1
    %p78 = por %p76, %p77
    %p79 = scmp.ne.s32.totalorder %s70, %s71
    %p80 = scmp.eq.s32.totalorder %s18, 0
    %p81 = por %p79, %p80
    %p82 = scmp.ne.s32.totalorder %s70, %s71
    %p83 = scmp.eq.s32.totalorder %s19, 1
    %p84 = por %p82, %p83
    %p86 = scmp.ne.s32.totalorder %s71, %s85
    %p87 = scmp.eq.s32.totalorder %s19, 0
    %p88 = por %p86, %p87
    %s90 = sadd.s32 %s89, 1
    %p93 = scmp.eq.s32.totalorder %s13, 1
    %p94 = scmp.ne.s32.totalorder %s89, %s91
    %p95 = scmp.eq.s32.totalorder %s13, 0
    %p96 = por %p94, %p95
    %p97 = scmp.ne.s32.totalorder %s89, %s91
    %p98 = scmp.eq.s32.totalorder %s18, 1
    %p99 = por %p97, %p98
    %p100 = scmp.ne.s32.totalorder %s91, %s92
    %p101 = scmp.eq.s32.totalorder %s18, 0
    %p102 = por %p100, %p101
    %p103 = scmp.ne.s32.totalorder %s91, %s92
    %p104 = scmp.eq.s32.totalorder %s19, 1
    %p105 = por %p103, %p104
    %p107 = scmp.ne.s32.totalorder %s92, %s106
    %p108 = scmp.eq.s32.totalorder %s19, 0
    %p109 = por %p107, %p108
    %s111 = sadd.s32 %s110, 1
    %p114 = scmp.eq.s32.totalorder %s13, 1
    %p115 = scmp.ne.s32.totalorder %s110, %s112
    %p116 = scmp.eq.s32.totalorder %s13, 0
    %p117 = por %p115, %p116
    %p118 = scmp.ne.s32.totalorder %s110, %s112
    %p119 = scmp.eq.s32.totalorder %s18, 1
    %p120 = por %p118, %p119
    %p121 = scmp.ne.s32.totalorder %s112, %s113
    %p122 = scmp.eq.s32.totalorder %s18, 0
    %p123 = por %p121, %p122
    %p124 = scmp.ne.s32.totalorder %s112, %s113
    %p125 = scmp.eq.s32.totalorder %s19, 1
    %p126 = por %p124, %p125
    %p128 = scmp.ne.s32.totalorder %s113, %s127
    %p129 = scmp.eq.s32.totalorder %s19, 0
    %p130 = por %p128, %p129
    %s131 = ssub.s32 %s13, %s20
    %p132 = scmp.eq.s32.totalorder %s131, 0
    %s134 = sadd.s32 %s133, 1
    %s135 = scalar_select %p132, %s133, %s134
    %p138 = pneg %p132
    %p139 = scmp.eq.s32.totalorder %s13, 1
    %p140 = por %p138, %p139
    %p141 = scmp.ne.s32.totalorder %s133, %s136
    %p142 = scmp.eq.s32.totalorder %s13, 0
    %p143 = por %p141, %p142
    %p144 = scmp.ne.s32.totalorder %s133, %s136
    %p145 = scmp.eq.s32.totalorder %s18, 1
    %p146 = por %p144, %p145
    %p147 = scmp.ne.s32.totalorder %s136, %s137
    %p148 = scmp.eq.s32.totalorder %s18, 0
    %p149 = por %p147, %p148
    %p150 = scmp.ne.s32.totalorder %s136, %s137
    %p151 = scmp.eq.s32.totalorder %s19, 1
    %p152 = por %p150, %p151
    %p154 = scmp.ne.s32.totalorder %s137, %s153
    %p155 = scmp.eq.s32.totalorder %s19, 0
    %p156 = por %p154, %p155
    %s157 = ssub.s32 %s13, %s20
    %p158 = scmp.eq.s32.totalorder %s157, 0
    %s160 = sadd.s32 %s159, 1
    %s161 = scalar_select %p158, %s159, %s160
    %p164 = pneg %p158
    %p165 = scmp.eq.s32.totalorder %s13, 1
    %p166 = por %p164, %p165
    %p167 = scmp.ne.s32.totalorder %s159, %s162
    %p168 = scmp.eq.s32.totalorder %s13, 0
    %p169 = por %p167, %p168
    %p170 = scmp.ne.s32.totalorder %s159, %s162
    %p171 = scmp.eq.s32.totalorder %s18, 1
    %p172 = por %p170, %p171
    %p173 = scmp.ne.s32.totalorder %s162, %s163
    %p174 = scmp.eq.s32.totalorder %s18, 0
    %p175 = por %p173, %p174
    %p176 = scmp.ne.s32.totalorder %s162, %s163
    %p177 = scmp.eq.s32.totalorder %s19, 1
    %p178 = por %p176, %p177
    %p180 = scmp.ne.s32.totalorder %s163, %s179
    %p181 = scmp.eq.s32.totalorder %s19, 0
    %p182 = por %p180, %p181
    %p183 = scmp.le.s32.totalorder 1, %s13
    %p184 = scmp.lt.s32.totalorder %s13, 3
    %p185 = pnand %p183, %p184
    %p186 = pneg %p185
    // Predicated region
    $region9: #{xformers_model_forward.3} parent=5 // pred_check
      _
    $region10: #{xformers_model_forward.3} parent=5 // pred_check_branch
      %188 = sbr.rel (%p185) target = $region12
    $region11: #{xformers_model_forward.3} parent=5 // pred_region
      %s189 = ssub.s32 %s13, 1
      // Predicated region
      $region13: #{xformers_model_forward.3} parent=11 // pred_check
        %p190 = pneg %p60
      $region14: #{xformers_model_forward.3} parent=11 // pred_check_branch
        %192 = sbr.rel (%p190) target = $region16
      $region15: #{xformers_model_forward.3} parent=11 // pred_region
        _
      $region16: #{xformers_model_forward.3} parent=11 // pred_fallthru
        _
      // Predicated region
      $region17: #{xformers_model_forward.3} parent=11 // pred_check
        %p193 = pneg %p81
      $region18: #{xformers_model_forward.3} parent=11 // pred_check_branch
        %195 = sbr.rel (%p193) target = $region20
      $region19: #{xformers_model_forward.3} parent=11 // pred_region
        _
      $region20: #{xformers_model_forward.3} parent=11 // pred_fallthru
        _
      // Predicated region
      $region21: #{xformers_model_forward.3} parent=11 // pred_check
        %p196 = pneg %p102
      $region22: #{xformers_model_forward.3} parent=11 // pred_check_branch
        %198 = sbr.rel (%p196) target = $region24
      $region23: #{xformers_model_forward.3} parent=11 // pred_region
        _
      $region24: #{xformers_model_forward.3} parent=11 // pred_fallthru
        _
      // Predicated region
      $region25: #{xformers_model_forward.3} parent=11 // pred_check
        %p199 = pneg %p123
      $region26: #{xformers_model_forward.3} parent=11 // pred_check_branch
        %201 = sbr.rel (%p199) target = $region28
      $region27: #{xformers_model_forward.3} parent=11 // pred_region
        _
      $region28: #{xformers_model_forward.3} parent=11 // pred_fallthru
        _
    $region12: #{xformers_model_forward.3} parent=5 // pred_fallthru
      _
    %p202 = scmp.lt.s32.totalorder %s13, 2
    // Predicated region
    $region29: #{xformers_model_forward.3} parent=5 // pred_check
      %p203 = pneg %p202
    $region30: #{xformers_model_forward.3} parent=5 // pred_check_branch
      %205 = sbr.rel (%p203) target = $region32
    $region31: #{xformers_model_forward.3} parent=5 // pred_region
      // Predicated region
      $region33: #{xformers_model_forward.3} parent=31 // pred_check
        %p206 = pneg %p33
      $region34: #{xformers_model_forward.3} parent=31 // pred_check_branch
        %208 = sbr.rel (%p206) target = $region36
      $region35: #{xformers_model_forward.3} parent=31 // pred_region
        %s209 = smul.u32 16, %s13
        %p210 = scmp.lt.s32.totalorder %s209, 31
        %s211 = scalar_select %p210, %s209, 31
        %s212 = smul.addr %s211, 8
        %s213 = scalar_lea.vmem %s0, %s212
        %s214 = smul.u32 16, %s13
      $region36: #{xformers_model_forward.3} parent=31 // pred_fallthru
        _
    $region32: #{xformers_model_forward.3} parent=5 // pred_fallthru
      _
    %p215 = scmp.le.s32.totalorder 1, %s13
    %p216 = scmp.lt.s32.totalorder %s13, 3
    %p217 = pnand %p215, %p216
    %p218 = pneg %p217
    // Predicated region
    $region37: #{xformers_model_forward.3} parent=5 // pred_check
      _
    $region38: #{xformers_model_forward.3} parent=5 // pred_check_branch
      %220 = sbr.rel (%p217) target = $region40
    $region39: #{xformers_model_forward.3} parent=5 // pred_region
      %s221 = ssub.s32 %s13, 1
      %s222 = smul.u32 16, %s18
      %p223 = scmp.lt.s32.totalorder %s222, 31
      %s224 = scalar_select %p223, %s222, 31
      %s225 = smul.addr %s224, 8
      %s226 = scalar_lea.vmem %s0, %s225
      %p227 = pneg %p39
      %p228 = pneg %p36
      %p229 = pneg %p60
      %p230 = pneg %p57
      %p231 = pneg %p81
      %p232 = pneg %p78
      %p233 = pneg %p102
      %p234 = pneg %p99
      %p235 = pneg %p123
      %p236 = pneg %p120
      %p237 = pneg %p149
      %p238 = pneg %p146
      %s239 = smul.u32 16, %s18
      %p240 = scmp.lt.s32.totalorder %s239, 31
      %s241 = scalar_select %p240, %s239, 31
      %s242 = smul.addr %s241, 8
      %s243 = scalar_lea.vmem %s5, %s242
      %p244 = pneg %p175
      %p245 = pneg %p172
      %s246 = smul.u32 16, %s18
      %p247 = scmp.lt.s32.totalorder %s246, 31
      %s248 = scalar_select %p247, %s246, 31
      %s249 = smul.addr %s248, 4
      %s250 = scalar_lea.vmem %s6, %s249
      %s251 = smul.u32 16, %s18
      %p252 = scmp.lt.s32.totalorder %s251, 31
      %s253 = scalar_select %p252, %s251, 31
      %s254 = smul.addr %s253, 8
      %s255 = scalar_lea.vmem %s0, %s254
      %s256 = smul.u32 16, %s18
      %s257 = smul.u32 16, %s18
      %p258 = scmp.lt.s32.totalorder %s257, 31
      %s259 = scalar_select %p258, %s257, 31
      %s260 = smul.addr %s259, 8
      %s261 = scalar_lea.vmem %s5, %s260
      %s262 = smul.u32 16, %s18
      %s263 = smul.u32 16, %s18
      %p264 = scmp.lt.s32.totalorder %s263, 31
      %s265 = scalar_select %p264, %s263, 31
      %s266 = smul.addr %s265, 4
      %s267 = scalar_lea.vmem %s6, %s266
      %s268 = smul.u32 16, %s18
      %v269 = vld [vmem:[%s255] sm:$0xff]
      %v270 = vld [vmem:[%s255 + $0x8] sm:$0xff]
      %v271 = vld [vmem:[%s255 + $0x10] sm:$0xff]
      %v272 = vld [vmem:[%s255 + $0x18] sm:$0xff]
      %v273 = vld [vmem:[%s255 + $0x20] sm:$0xff]
      %v274 = vld [vmem:[%s255 + $0x28] sm:$0xff]
      %v275 = vld [vmem:[%s255 + $0x30] sm:$0xff]
      %v276 = vld [vmem:[%s255 + $0x38] sm:$0xff]
      %v277 = vld [vmem:[%s255 + $0x40] sm:$0xff]
      %v278 = vld [vmem:[%s255 + $0x48] sm:$0xff]
      %v279 = vld [vmem:[%s255 + $0x50] sm:$0xff]
      %v280 = vld [vmem:[%s255 + $0x58] sm:$0xff]
      %v281 = vld [vmem:[%s255 + $0x60] sm:$0xff]
      %v282 = vld [vmem:[%s255 + $0x68] sm:$0xff]
      %v283 = vld [vmem:[%s255 + $0x70] sm:$0xff]
      %v284 = vld [vmem:[%s255 + $0x78] sm:$0xff]
      %v285 = vld [vmem:[%s1] sm:$0xff]
      %v286 = vld [vmem:[%s2] sm:$0x1]
      %v288 = vlaneseq
      %v289 = vshrl.u32 %v288, 7
      %v290 = vsub.s32 0, %v289
      %v291 = vrot.slane %v286, %v290
      %vm293 = vcmask 64512
      %v295 = vsel %vm293, %v269, 0
      %v298 = vsel %vm293, %v270, 0
      %v301 = vsel %vm293, %v271, 0
      %v304 = vsel %vm293, %v272, 0
      %v307 = vsel %vm293, %v273, 0
      %v310 = vsel %vm293, %v274, 0
      %v313 = vsel %vm293, %v275, 0
      %v316 = vsel %vm293, %v276, 0
      %v319 = vsel %vm293, %v277, 0
      %v322 = vsel %vm293, %v278, 0
      %v325 = vsel %vm293, %v279, 0
      %v328 = vsel %vm293, %v280, 0
      %v331 = vsel %vm293, %v281, 0
      %v334 = vsel %vm293, %v282, 0
      %v337 = vsel %vm293, %v283, 0
      %v340 = vsel %vm293, %v284, 0
      %342 = vmatprep.subr.mxu0 0.0
      %343 = vmatpush1.msra.mxu0 0.0
      %344 = vmatprep.subr.mxu0 0.0
      %345 = vmatpush1.msra.mxu0 0.0
      %346 = vmatprep.subr.mxu0 0.0
      %347 = vmatpush1.msra.mxu0 0.0
      %348 = vmatprep.subr.mxu0 0.0
      %349 = vmatpush1.msra.mxu0 0.0
      %350 = vmatprep.subr.mxu0 0.0
      %351 = vmatpush1.msra.mxu0 0.0
      %352 = vmatprep.subr.mxu0 0.0
      %353 = vmatpush1.msra.mxu0 0.0
      %354 = vmatprep.subr.mxu0 0.0
      %355 = vmatpush1.msra.mxu0 0.0
      %356 = vmatprep.subr.mxu0 0.0
      %357 = vmatpush1.msra.mxu0 0.0
      %358 = vmatprep.subr.mxu0 0.0
      %359 = vmatpush1.msra.mxu0 0.0
      %360 = vmatprep.subr.mxu0 0.0
      %361 = vmatpush1.msra.mxu0 0.0
      %362 = vmatprep.subr.mxu0 0.0
      %363 = vmatpush1.msra.mxu0 0.0
      %364 = vmatprep.subr.mxu0 0.0
      %365 = vmatpush1.msra.mxu0 0.0
      %366 = vmatprep.subr.mxu0 0.0
      %367 = vmatpush1.msra.mxu0 0.0
      %368 = vmatprep.subr.mxu0 0.0
      %369 = vmatpush1.msra.mxu0 0.0
      %370 = vmatprep.subr.mxu0 0.0
      %371 = vmatpush1.msra.mxu0 0.0
      %372 = vmatprep.subr.mxu0 0.0
      %373 = vmatpush1.msra.mxu0 %v285
      %374 = vmatprep.subr.mxu0 0.0
      %375 = vmatpush2.msra.mxu0 0.0
      %376 = vmatprep.subr.mxu0 0.0
      %377 = vmatpush2.msra.mxu0 0.0
      %378 = vmatprep.subr.mxu0 0.0
      %379 = vmatpush2.msra.mxu0 0.0
      %380 = vmatprep.subr.mxu0 0.0
      %381 = vmatpush2.msra.mxu0 0.0
      %382 = vmatprep.subr.mxu0 0.0
      %383 = vmatpush2.msra.mxu0 0.0
      %384 = vmatprep.subr.mxu0 0.0
      %385 = vmatpush2.msra.mxu0 0.0
      %386 = vmatprep.subr.mxu0 0.0
      %387 = vmatpush2.msra.mxu0 0.0
      %388 = vmatprep.subr.mxu0 0.0
      %389 = vmatpush2.msra.mxu0 0.0
      %390 = vmatprep.subr.mxu0 0.0
      %391 = vmatpush2.msra.mxu0 0.0
      %392 = vmatprep.subr.mxu0 0.0
      %393 = vmatpush2.msra.mxu0 0.0
      %394 = vmatprep.subr.mxu0 0.0
      %395 = vmatpush2.msra.mxu0 0.0
      %396 = vmatprep.subr.mxu0 0.0
      %397 = vmatpush2.msra.mxu0 0.0
      %398 = vmatprep.subr.mxu0 0.0
      %399 = vmatpush2.msra.mxu0 0.0
      %400 = vmatprep.subr.mxu0 0.0
      %401 = vmatpush2.msra.mxu0 0.0
      %402 = vmatprep.subr.mxu0 0.0
      %403 = vmatpush2.msra.mxu0 0.0
      %404 = vmatprep.subr.mxu0 0.0
      %405 = vmatpush2.msra.mxu0 0.0
      %406 = vmatprep.mubr.f32.mxu0 0.0
      %407 = vmatmul.mubr.f32.gmra.mxu0 %v295
      %v408 = vpop.f32.mrf.mxu0
      %v409 = vadd.f32 %v291, %v408
      %v410 = vpop.f32.mrf.mxu0
      %411 = vmatprep.mubr.f32.mxu0 0.0
      %412 = vmatmul.mubr.f32.gmra.mxu0 %v298
      %v413 = vpop.f32.mrf.mxu0
      %v414 = vadd.f32 %v291, %v413
      %v415 = vpop.f32.mrf.mxu0
      %416 = vmatprep.mubr.f32.mxu0 0.0
      %417 = vmatmul.mubr.f32.gmra.mxu0 %v301
      %v418 = vpop.f32.mrf.mxu0
      %v419 = vadd.f32 %v291, %v418
      %v420 = vpop.f32.mrf.mxu0
      %421 = vmatprep.mubr.f32.mxu0 0.0
      %422 = vmatmul.mubr.f32.gmra.mxu0 %v304
      %v423 = vpop.f32.mrf.mxu0
      %v424 = vadd.f32 %v291, %v423
      %v425 = vpop.f32.mrf.mxu0
      %426 = vmatprep.mubr.f32.mxu0 0.0
      %427 = vmatmul.mubr.f32.gmra.mxu0 %v307
      %v428 = vpop.f32.mrf.mxu0
      %v429 = vadd.f32 %v291, %v428
      %v430 = vpop.f32.mrf.mxu0
      %431 = vmatprep.mubr.f32.mxu0 0.0
      %432 = vmatmul.mubr.f32.gmra.mxu0 %v310
      %v433 = vpop.f32.mrf.mxu0
      %v434 = vadd.f32 %v291, %v433
      %v435 = vpop.f32.mrf.mxu0
      %436 = vmatprep.mubr.f32.mxu0 0.0
      %437 = vmatmul.mubr.f32.gmra.mxu0 %v313
      %v438 = vpop.f32.mrf.mxu0
      %v439 = vadd.f32 %v291, %v438
      %v440 = vpop.f32.mrf.mxu0
      %441 = vmatprep.mubr.f32.mxu0 0.0
      %442 = vmatmul.mubr.f32.gmra.mxu0 %v316
      %v443 = vpop.f32.mrf.mxu0
      %v444 = vadd.f32 %v291, %v443
      %v445 = vpop.f32.mrf.mxu0
      %446 = vmatprep.mubr.f32.mxu0 0.0
      %447 = vmatmul.mubr.f32.gmra.mxu0 %v319
      %v448 = vpop.f32.mrf.mxu0
      %v449 = vadd.f32 %v291, %v448
      %v450 = vpop.f32.mrf.mxu0
      %451 = vmatprep.mubr.f32.mxu0 0.0
      %452 = vmatmul.mubr.f32.gmra.mxu0 %v322
      %v453 = vpop.f32.mrf.mxu0
      %v454 = vadd.f32 %v291, %v453
      %v455 = vpop.f32.mrf.mxu0
      %456 = vmatprep.mubr.f32.mxu0 0.0
      %457 = vmatmul.mubr.f32.gmra.mxu0 %v325
      %v458 = vpop.f32.mrf.mxu0
      %v459 = vadd.f32 %v291, %v458
      %v460 = vpop.f32.mrf.mxu0
      %461 = vmatprep.mubr.f32.mxu0 0.0
      %462 = vmatmul.mubr.f32.gmra.mxu0 %v328
      %v463 = vpop.f32.mrf.mxu0
      %v464 = vadd.f32 %v291, %v463
      %v465 = vpop.f32.mrf.mxu0
      %466 = vmatprep.mubr.f32.mxu0 0.0
      %467 = vmatmul.mubr.f32.gmra.mxu0 %v331
      %v468 = vpop.f32.mrf.mxu0
      %v469 = vadd.f32 %v291, %v468
      %v470 = vpop.f32.mrf.mxu0
      %471 = vmatprep.mubr.f32.mxu0 0.0
      %472 = vmatmul.mubr.f32.gmra.mxu0 %v334
      %v473 = vpop.f32.mrf.mxu0
      %v474 = vadd.f32 %v291, %v473
      %v475 = vpop.f32.mrf.mxu0
      %476 = vmatprep.mubr.f32.mxu0 0.0
      %477 = vmatmul.mubr.f32.gmra.mxu0 %v337
      %v478 = vpop.f32.mrf.mxu0
      %v479 = vadd.f32 %v291, %v478
      %v480 = vpop.f32.mrf.mxu0
      %481 = vmatprep.mubr.f32.mxu0 0.0
      %482 = vmatmul.mubr.f32.gmra.mxu0 %v340
      %v483 = vpop.f32.mrf.mxu0
      %v484 = vadd.f32 %v291, %v483
      %v485 = vpop.f32.mrf.mxu0
      %486 = vdwg.mxu0
      %487 = vst [vmem:[%s261] sm:$0xff] %v409
      %488 = vst [vmem:[%s261 + $0x8] sm:$0xff] %v414
      %489 = vst [vmem:[%s261 + $0x10] sm:$0xff] %v419
      %490 = vst [vmem:[%s261 + $0x18] sm:$0xff] %v424
      %491 = vst [vmem:[%s261 + $0x20] sm:$0xff] %v429
      %492 = vst [vmem:[%s261 + $0x28] sm:$0xff] %v434
      %493 = vst [vmem:[%s261 + $0x30] sm:$0xff] %v439
      %494 = vst [vmem:[%s261 + $0x38] sm:$0xff] %v444
      %495 = vst [vmem:[%s261 + $0x40] sm:$0xff] %v449
      %496 = vst [vmem:[%s261 + $0x48] sm:$0xff] %v454
      %497 = vst [vmem:[%s261 + $0x50] sm:$0xff] %v459
      %498 = vst [vmem:[%s261 + $0x58] sm:$0xff] %v464
      %499 = vst [vmem:[%s261 + $0x60] sm:$0xff] %v469
      %500 = vst [vmem:[%s261 + $0x68] sm:$0xff] %v474
      %501 = vst [vmem:[%s261 + $0x70] sm:$0xff] %v479
      %502 = vst [vmem:[%s261 + $0x78] sm:$0xff] %v484
      %v503 = vld [vmem:[%s3] sm:$0xff]
      %v504 = vld [vmem:[%s3 + $0x8] sm:$0xff]
      %v505 = vld [vmem:[%s3 + $0x10] sm:$0xff]
      %v506 = vld [vmem:[%s3 + $0x18] sm:$0xff]
      %v507 = vld [vmem:[%s3 + $0x20] sm:$0xff]
      %v508 = vld [vmem:[%s3 + $0x28] sm:$0xff]
      %v509 = vld [vmem:[%s3 + $0x30] sm:$0xff]
      %v510 = vld [vmem:[%s3 + $0x38] sm:$0xff]
      %v511 = vld [vmem:[%s3 + $0x40] sm:$0xff]
      %v512 = vld [vmem:[%s3 + $0x48] sm:$0xff]
      %v513 = vld [vmem:[%s3 + $0x50] sm:$0xff]
      %v514 = vld [vmem:[%s3 + $0x58] sm:$0xff]
      %v515 = vld [vmem:[%s3 + $0x60] sm:$0xff]
      %v516 = vld [vmem:[%s3 + $0x68] sm:$0xff]
      %v517 = vld [vmem:[%s3 + $0x70] sm:$0xff]
      %v518 = vld [vmem:[%s3 + $0x78] sm:$0xff]
      %v519 = vld [vmem:[%s4] sm:$0x1]
      %v521 = vlaneseq
      %v522 = vshrl.u32 %v521, 7
      %v523 = vsub.s32 0, %v522
      %v524 = vrot.slane %v519, %v523
      %526 = vmatprep.subr.mxu0 0.0
      %527 = vmatpush1.msra.mxu0 %v518
      %528 = vmatprep.subr.mxu0 0.0
      %529 = vmatpush1.msra.mxu0 %v517
      %530 = vmatprep.subr.mxu0 0.0
      %531 = vmatpush1.msra.mxu0 %v516
      %532 = vmatprep.subr.mxu0 0.0
      %533 = vmatpush1.msra.mxu0 %v515
      %534 = vmatprep.subr.mxu0 0.0
      %535 = vmatpush1.msra.mxu0 %v514
      %536 = vmatprep.subr.mxu0 0.0
      %537 = vmatpush1.msra.mxu0 %v513
      %538 = vmatprep.subr.mxu0 0.0
      %539 = vmatpush1.msra.mxu0 %v512
      %540 = vmatprep.subr.mxu0 0.0
      %541 = vmatpush1.msra.mxu0 %v511
      %542 = vmatprep.subr.mxu0 0.0
      %543 = vmatpush1.msra.mxu0 %v510
      %544 = vmatprep.subr.mxu0 0.0
      %545 = vmatpush1.msra.mxu0 %v509
      %546 = vmatprep.subr.mxu0 0.0
      %547 = vmatpush1.msra.mxu0 %v508
      %548 = vmatprep.subr.mxu0 0.0
      %549 = vmatpush1.msra.mxu0 %v507
      %550 = vmatprep.subr.mxu0 0.0
      %551 = vmatpush1.msra.mxu0 %v506
      %552 = vmatprep.subr.mxu0 0.0
      %553 = vmatpush1.msra.mxu0 %v505
      %554 = vmatprep.subr.mxu0 0.0
      %555 = vmatpush1.msra.mxu0 %v504
      %556 = vmatprep.subr.mxu0 0.0
      %557 = vmatpush1.msra.mxu0 %v503
      %558 = vmatprep.subr.mxu0 0.0
      %559 = vmatpush2.msra.mxu0 0.0
      %560 = vmatprep.subr.mxu0 0.0
      %561 = vmatpush2.msra.mxu0 0.0
      %562 = vmatprep.subr.mxu0 0.0
      %563 = vmatpush2.msra.mxu0 0.0
      %564 = vmatprep.subr.mxu0 0.0
      %565 = vmatpush2.msra.mxu0 0.0
      %566 = vmatprep.subr.mxu0 0.0
      %567 = vmatpush2.msra.mxu0 0.0
      %568 = vmatprep.subr.mxu0 0.0
      %569 = vmatpush2.msra.mxu0 0.0
      %570 = vmatprep.subr.mxu0 0.0
      %571 = vmatpush2.msra.mxu0 0.0
      %572 = vmatprep.subr.mxu0 0.0
      %573 = vmatpush2.msra.mxu0 0.0
      %574 = vmatprep.subr.mxu0 0.0
      %575 = vmatpush2.msra.mxu0 0.0
      %576 = vmatprep.subr.mxu0 0.0
      %577 = vmatpush2.msra.mxu0 0.0
      %578 = vmatprep.subr.mxu0 0.0
      %579 = vmatpush2.msra.mxu0 0.0
      %580 = vmatprep.subr.mxu0 0.0
      %581 = vmatpush2.msra.mxu0 0.0
      %582 = vmatprep.subr.mxu0 0.0
      %583 = vmatpush2.msra.mxu0 0.0
      %584 = vmatprep.subr.mxu0 0.0
      %585 = vmatpush2.msra.mxu0 0.0
      %586 = vmatprep.subr.mxu0 0.0
      %587 = vmatpush2.msra.mxu0 0.0
      %588 = vmatprep.subr.mxu0 0.0
      %589 = vmatpush2.msra.mxu0 0.0
      %590 = vmatprep.mubr.f32.mxu0 0.0
      %591 = vmatmul.mubr.f32.gmra.mxu0 %v409
      %v592 = vpop.f32.mrf.mxu0
      %v593 = vadd.f32 %v524, %v592
      %v594 = vpop.f32.mrf.mxu0
      %595 = vmatprep.mubr.f32.mxu0 0.0
      %596 = vmatmul.mubr.f32.gmra.mxu0 %v414
      %v597 = vpop.f32.mrf.mxu0
      %v598 = vadd.f32 %v524, %v597
      %v599 = vpop.f32.mrf.mxu0
      %600 = vmatprep.mubr.f32.mxu0 0.0
      %601 = vmatmul.mubr.f32.gmra.mxu0 %v419
      %v602 = vpop.f32.mrf.mxu0
      %v603 = vadd.f32 %v524, %v602
      %v604 = vpop.f32.mrf.mxu0
      %605 = vmatprep.mubr.f32.mxu0 0.0
      %606 = vmatmul.mubr.f32.gmra.mxu0 %v424
      %v607 = vpop.f32.mrf.mxu0
      %v608 = vadd.f32 %v524, %v607
      %v609 = vpop.f32.mrf.mxu0
      %610 = vmatprep.mubr.f32.mxu0 0.0
      %611 = vmatmul.mubr.f32.gmra.mxu0 %v429
      %v612 = vpop.f32.mrf.mxu0
      %v613 = vadd.f32 %v524, %v612
      %v614 = vpop.f32.mrf.mxu0
      %615 = vmatprep.mubr.f32.mxu0 0.0
      %616 = vmatmul.mubr.f32.gmra.mxu0 %v434
      %v617 = vpop.f32.mrf.mxu0
      %v618 = vadd.f32 %v524, %v617
      %v619 = vpop.f32.mrf.mxu0
      %620 = vmatprep.mubr.f32.mxu0 0.0
      %621 = vmatmul.mubr.f32.gmra.mxu0 %v439
      %v622 = vpop.f32.mrf.mxu0
      %v623 = vadd.f32 %v524, %v622
      %v624 = vpop.f32.mrf.mxu0
      %625 = vmatprep.mubr.f32.mxu0 0.0
      %626 = vmatmul.mubr.f32.gmra.mxu0 %v444
      %v627 = vpop.f32.mrf.mxu0
      %v628 = vadd.f32 %v524, %v627
      %v629 = vpop.f32.mrf.mxu0
      %630 = vmatprep.mubr.f32.mxu0 0.0
      %631 = vmatmul.mubr.f32.gmra.mxu0 %v449
      %v632 = vpop.f32.mrf.mxu0
      %v633 = vadd.f32 %v524, %v632
      %v634 = vpop.f32.mrf.mxu0
      %635 = vmatprep.mubr.f32.mxu0 0.0
      %636 = vmatmul.mubr.f32.gmra.mxu0 %v454
      %v637 = vpop.f32.mrf.mxu0
      %v638 = vadd.f32 %v524, %v637
      %v639 = vpop.f32.mrf.mxu0
      %640 = vmatprep.mubr.f32.mxu0 0.0
      %641 = vmatmul.mubr.f32.gmra.mxu0 %v459
      %v642 = vpop.f32.mrf.mxu0
      %v643 = vadd.f32 %v524, %v642
      %v644 = vpop.f32.mrf.mxu0
      %645 = vmatprep.mubr.f32.mxu0 0.0
      %646 = vmatmul.mubr.f32.gmra.mxu0 %v464
      %v647 = vpop.f32.mrf.mxu0
      %v648 = vadd.f32 %v524, %v647
      %v649 = vpop.f32.mrf.mxu0
      %650 = vmatprep.mubr.f32.mxu0 0.0
      %651 = vmatmul.mubr.f32.gmra.mxu0 %v469
      %v652 = vpop.f32.mrf.mxu0
      %v653 = vadd.f32 %v524, %v652
      %v654 = vpop.f32.mrf.mxu0
      %655 = vmatprep.mubr.f32.mxu0 0.0
      %656 = vmatmul.mubr.f32.gmra.mxu0 %v474
      %v657 = vpop.f32.mrf.mxu0
      %v658 = vadd.f32 %v524, %v657
      %v659 = vpop.f32.mrf.mxu0
      %660 = vmatprep.mubr.f32.mxu0 0.0
      %661 = vmatmul.mubr.f32.gmra.mxu0 %v479
      %v662 = vpop.f32.mrf.mxu0
      %v663 = vadd.f32 %v524, %v662
      %v664 = vpop.f32.mrf.mxu0
      %665 = vmatprep.mubr.f32.mxu0 0.0
      %666 = vmatmul.mubr.f32.gmra.mxu0 %v484
      %v667 = vpop.f32.mrf.mxu0
      %v668 = vadd.f32 %v524, %v667
      %v669 = vpop.f32.mrf.mxu0
      %670 = vdwg.mxu0
      %v671 = vpack.c.bf16 %v598, %v593
      %v672 = vpack.c.bf16 %v608, %v603
      %v673 = vpack.c.bf16 %v618, %v613
      %v674 = vpack.c.bf16 %v628, %v623
      %v675 = vpack.c.bf16 %v638, %v633
      %v676 = vpack.c.bf16 %v648, %v643
      %v677 = vpack.c.bf16 %v658, %v653
      %v678 = vpack.c.bf16 %v668, %v663
      %v687 = vunpack.c.l.b16 %v671
      %v688 = vunpack.c.h.b16 %v671
      %v689 = vunpack.c.l.b16 %v672
      %v690 = vunpack.c.h.b16 %v672
      %v691 = vunpack.c.l.b16 %v673
      %v692 = vunpack.c.h.b16 %v673
      %v693 = vunpack.c.l.b16 %v674
      %v694 = vunpack.c.h.b16 %v674
      %v695 = vunpack.c.l.b16 %v675
      %v696 = vunpack.c.h.b16 %v675
      %v697 = vunpack.c.l.b16 %v676
      %v698 = vunpack.c.h.b16 %v676
      %v699 = vunpack.c.l.b16 %v677
      %v700 = vunpack.c.h.b16 %v677
      %v701 = vunpack.c.l.b16 %v678
      %v702 = vunpack.c.h.b16 %v678
      %v703 = vpack.c.b16 %v687, %v687
      %v704 = vpack.c.b16 %v688, %v688
      %v705 = vpack.c.b16 %v689, %v689
      %v706 = vpack.c.b16 %v690, %v690
      %v707 = vpack.c.b16 %v691, %v691
      %v708 = vpack.c.b16 %v692, %v692
      %v709 = vpack.c.b16 %v693, %v693
      %v710 = vpack.c.b16 %v694, %v694
      %v711 = vpack.c.b16 %v695, %v695
      %v712 = vpack.c.b16 %v696, %v696
      %v713 = vpack.c.b16 %v697, %v697
      %v714 = vpack.c.b16 %v698, %v698
      %v715 = vpack.c.b16 %v699, %v699
      %v716 = vpack.c.b16 %v700, %v700
      %v717 = vpack.c.b16 %v701, %v701
      %v718 = vpack.c.b16 %v702, %v702
      %735 = vst [vmem:[%s267] sm:$0xf] %v703
      %736 = vst [vmem:[%s267 + $0x4] sm:$0xf] %v704
      %737 = vst [vmem:[%s267 + $0x8] sm:$0xf] %v705
      %738 = vst [vmem:[%s267 + $0xc] sm:$0xf] %v706
      %739 = vst [vmem:[%s267 + $0x10] sm:$0xf] %v707
      %740 = vst [vmem:[%s267 + $0x14] sm:$0xf] %v708
      %741 = vst [vmem:[%s267 + $0x18] sm:$0xf] %v709
      %742 = vst [vmem:[%s267 + $0x1c] sm:$0xf] %v710
      %743 = vst [vmem:[%s267 + $0x20] sm:$0xf] %v711
      %744 = vst [vmem:[%s267 + $0x24] sm:$0xf] %v712
      %745 = vst [vmem:[%s267 + $0x28] sm:$0xf] %v713
      %746 = vst [vmem:[%s267 + $0x2c] sm:$0xf] %v714
      %747 = vst [vmem:[%s267 + $0x30] sm:$0xf] %v715
      %748 = vst [vmem:[%s267 + $0x34] sm:$0xf] %v716
      %749 = vst [vmem:[%s267 + $0x38] sm:$0xf] %v717
      %750 = vst [vmem:[%s267 + $0x3c] sm:$0xf] %v718
      %s751 = smul.u32 16, %s18
      %p752 = scmp.lt.s32.totalorder %s751, 31
      %s753 = scalar_select %p752, %s751, 31
      %s754 = smul.addr %s753, 8
      %s755 = scalar_lea.vmem %s5, %s754
      %s756 = smul.u32 16, %s18
      %p757 = scmp.lt.s32.totalorder %s756, 31
      %s758 = scalar_select %p757, %s756, 31
      %s759 = smul.addr %s758, 4
      %s760 = scalar_lea.vmem %s6, %s759
      // Predicated region
      $region41: #{xformers_model_forward.3} parent=39 // pred_check
        %p761 = pneg %p146
      $region42: #{xformers_model_forward.3} parent=39 // pred_check_branch
        %763 = sbr.rel (%p761) target = $region44
      $region43: #{xformers_model_forward.3} parent=39 // pred_region
        %s764 = smul.u32 16, %s18
      $region44: #{xformers_model_forward.3} parent=39 // pred_fallthru
        _
      // Predicated region
      $region45: #{xformers_model_forward.3} parent=39 // pred_check
        %p765 = pneg %p172
      $region46: #{xformers_model_forward.3} parent=39 // pred_check_branch
        %767 = sbr.rel (%p765) target = $region48
      $region47: #{xformers_model_forward.3} parent=39 // pred_region
        %s768 = smul.u32 16, %s18
      $region48: #{xformers_model_forward.3} parent=39 // pred_fallthru
        _
    $region40: #{xformers_model_forward.3} parent=5 // pred_fallthru
      _
    %p769 = scmp.le.s32.totalorder 2, %s13
    // Predicated region
    $region49: #{xformers_model_forward.3} parent=5 // pred_check
      %p770 = pneg %p769
    $region50: #{xformers_model_forward.3} parent=5 // pred_check_branch
      %772 = sbr.rel (%p770) target = $region52
    $region51: #{xformers_model_forward.3} parent=5 // pred_region
      %s773 = ssub.s32 %s13, 2
      // Predicated region
      $region53: #{xformers_model_forward.3} parent=51 // pred_check
        %p774 = pneg %p152
      $region54: #{xformers_model_forward.3} parent=51 // pred_check_branch
        %776 = sbr.rel (%p774) target = $region56
      $region55: #{xformers_model_forward.3} parent=51 // pred_region
        %s777 = smul.u32 16, %s19
        %p778 = scmp.lt.s32.totalorder %s777, 31
        %s779 = scalar_select %p778, %s777, 31
        %s780 = smul.addr %s779, 8
        %s781 = scalar_lea.vmem %s5, %s780
      $region56: #{xformers_model_forward.3} parent=51 // pred_fallthru
        _
      // Predicated region
      $region57: #{xformers_model_forward.3} parent=51 // pred_check
        %p782 = pneg %p178
      $region58: #{xformers_model_forward.3} parent=51 // pred_check_branch
        %784 = sbr.rel (%p782) target = $region60
      $region59: #{xformers_model_forward.3} parent=51 // pred_region
        %s785 = smul.u32 16, %s19
        %p786 = scmp.lt.s32.totalorder %s785, 31
        %s787 = scalar_select %p786, %s785, 31
        %s788 = smul.addr %s787, 4
        %s789 = scalar_lea.vmem %s6, %s788
      $region60: #{xformers_model_forward.3} parent=51 // pred_fallthru
        _
    $region52: #{xformers_model_forward.3} parent=5 // pred_fallthru
      _
  $region6: #{xformers_model_forward.3} parent=0 // loop_footer
    %s17 = sadd.s32 1, %s13
  $region7: #{xformers_model_forward.3} parent=0 // loop_footer_branch
    %12 = sbr.rel target = $region3
  $region8: #{xformers_model_forward.3} parent=0 // loop_exit
    _

// kernel: xformers_model_forward.4
$region0: #{xformers_model_forward.4}
  #allocation0 [shape = 'u32[]', space=smem, size = 0x4, offset = 0x4, fixed_abs, tag = 'smem constant byte address 0x4 - core index']
  #allocation1 [shape = 'u32[144,128]{1,0:T(1,128)}', space=vmem, size = 0x12000, scoped, tag = 'internal scratch']
  #allocation2 [shape = 'f32[2,128,1]{2,1,0:T(8,128)}', space=vmem, size = 0x20000, scoped, tag = 'scratch operand']
  #allocation3 [shape = 'f32[2,128,1]{2,1,0:T(8,128)}', space=vmem, size = 0x20000, scoped, tag = 'scratch operand']
  #allocation4 [shape = 'f32[2,128,16]{2,1,0:T(8,128)}', space=vmem, size = 0x20000, scoped, tag = 'scratch operand']
  #allocation5 [shape = 's32[1]{0}', space=sflag, size = 0x4, scoped, tag = 'scoped memory for xformers_model_forward.4']
  #allocation6 [shape = 'u8[1024]{0}', space=smem, size = 0x400, scoped, tag = 'prefetched SMEM operand 0']
  %s0 = inlined_call_operand.vmem [shape: s32[256], index: 0, kind: input, shape index: {}, may-alias: {0,2}]
  %s1 = inlined_call_operand.vmem [shape: s32[256,1], index: 1, kind: input, shape index: {}]
  %s2 = inlined_call_operand.vmem [shape: s32[1,256], index: 2, kind: input, shape index: {}, may-alias: {0,2}]
  %s3 = inlined_call_operand.vmem [shape: bf16[256,128], index: 3, kind: input, shape index: {}, may-alias: {3,4}]
  %s4 = inlined_call_operand.vmem [shape: bf16[256,128], index: 4, kind: input, shape index: {}, may-alias: {3,4}]
  %s5 = inlined_call_operand.vmem [shape: bf16[256,128], index: 5, kind: output, shape index: {}]
  %s6 = sld [smem:[#allocation0]]
  $region61: #{xformers_model_forward.4} parent=0
    _
  %s8 = ssub.s32 1, %s6
  %s9 = scalar_select 0, %s8, %s6
  %s10 = sshll.u32 %s0, 4
  %s11 = int_to_ptr.vmem [resolvable:$true] %s10
  %13 = dma.vmem_to_smem %s11, 32, [#allocation6], [#allocation5]
  %14 = dma.done [#allocation5], 32
  %15 = sfence
  loop: start=0, step=1, limit=6
  $region2: #{xformers_model_forward.4} parent=0 // loop_pre_header
    _
  $region3: #{xformers_model_forward.4} parent=0 // loop_header
    %s17 = sphi 0, %s21
    %p18 = scmp.ge.s32.totalorder %s17, 6
    %s24 = sphi 0, %s36
    %s25 = sphi 0, %s32
    %s26 = sphi 0, %s24
    %s27 = sphi 0, %s25
    %s28 = sphi 0, %s26
    %s29 = sphi 0, %s27
    %s39 = sphi 0, %s41
    %s42 = sphi 0, %s39
    %s43 = sphi 0, %s42
    %s59 = sphi 0, %s43
    %s65 = sphi 0, %s67
    %s68 = sphi 0, %s65
    %s69 = sphi 0, %s68
    %s85 = sphi 0, %s69
    %s91 = sphi 0, %s93
    %s94 = sphi 0, %s91
    %s95 = sphi 0, %s94
    %s111 = sphi 0, %s95
    %s117 = sphi 0, %s119
    %s120 = sphi 0, %s117
    %s121 = sphi 0, %s120
    %s137 = sphi 0, %s121
    %s143 = sphi 0, %s145
    %s146 = sphi 0, %s143
    %s147 = sphi 0, %s146
    %s163 = sphi 0, %s147
  $region4: #{xformers_model_forward.4} parent=0 // loop_header_branch
    %20 = sbr.rel (%p18) target = $region8
  $region5: #{xformers_model_forward.4} parent=0 // loop_body
    %s22 = ssub.s32 %s17, 1
    %s23 = ssub.s32 %s17, 2
    %s30 = sadd.s32 1, %s25
    %p31 = scmp.ge.s32.totalorder %s30, 2
    %s32 = scalar_select %p31, 0, %s30
    %s33 = sadd.s32 1, %s24
    %s34 = scalar_select %p31, %s33, %s24
    %p35 = scmp.ge.s32.totalorder %s34, 2
    %s36 = scalar_select %p35, 0, %s34
    %s37 = ssub.s32 %s24, %s36
    %p38 = scmp.eq.s32.totalorder %s37, 0
    %s40 = sadd.s32 %s39, 1
    %s41 = scalar_select %p38, %s39, %s40
    %p44 = pneg %p38
    %p45 = scmp.eq.s32.totalorder %s17, 3
    %p46 = por %p44, %p45
    %p47 = scmp.ne.s32.totalorder %s39, %s42
    %p48 = scmp.eq.s32.totalorder %s17, 0
    %p49 = por %p47, %p48
    %p50 = scmp.ne.s32.totalorder %s39, %s42
    %p51 = scmp.eq.s32.totalorder %s22, 3
    %p52 = por %p50, %p51
    %p53 = scmp.ne.s32.totalorder %s42, %s43
    %p54 = scmp.eq.s32.totalorder %s22, 0
    %p55 = por %p53, %p54
    %p56 = scmp.ne.s32.totalorder %s42, %s43
    %p57 = scmp.eq.s32.totalorder %s23, 3
    %p58 = por %p56, %p57
    %p60 = scmp.ne.s32.totalorder %s43, %s59
    %p61 = scmp.eq.s32.totalorder %s23, 0
    %p62 = por %p60, %p61
    %s63 = ssub.s32 %s25, %s32
    %p64 = scmp.eq.s32.totalorder %s63, 0
    %s66 = sadd.s32 %s65, 1
    %s67 = scalar_select %p64, %s65, %s66
    %p70 = pneg %p64
    %p71 = scmp.eq.s32.totalorder %s17, 3
    %p72 = por %p70, %p71
    %p73 = scmp.ne.s32.totalorder %s65, %s68
    %p74 = scmp.eq.s32.totalorder %s17, 0
    %p75 = por %p73, %p74
    %p76 = scmp.ne.s32.totalorder %s65, %s68
    %p77 = scmp.eq.s32.totalorder %s22, 3
    %p78 = por %p76, %p77
    %p79 = scmp.ne.s32.totalorder %s68, %s69
    %p80 = scmp.eq.s32.totalorder %s22, 0
    %p81 = por %p79, %p80
    %p82 = scmp.ne.s32.totalorder %s68, %s69
    %p83 = scmp.eq.s32.totalorder %s23, 3
    %p84 = por %p82, %p83
    %p86 = scmp.ne.s32.totalorder %s69, %s85
    %p87 = scmp.eq.s32.totalorder %s23, 0
    %p88 = por %p86, %p87
    %s89 = ssub.s32 %s24, %s36
    %p90 = scmp.eq.s32.totalorder %s89, 0
    %s92 = sadd.s32 %s91, 1
    %s93 = scalar_select %p90, %s91, %s92
    %p96 = pneg %p90
    %p97 = scmp.eq.s32.totalorder %s17, 3
    %p98 = por %p96, %p97
    %p99 = scmp.ne.s32.totalorder %s91, %s94
    %p100 = scmp.eq.s32.totalorder %s17, 0
    %p101 = por %p99, %p100
    %p102 = scmp.ne.s32.totalorder %s91, %s94
    %p103 = scmp.eq.s32.totalorder %s22, 3
    %p104 = por %p102, %p103
    %p105 = scmp.ne.s32.totalorder %s94, %s95
    %p106 = scmp.eq.s32.totalorder %s22, 0
    %p107 = por %p105, %p106
    %p108 = scmp.ne.s32.totalorder %s94, %s95
    %p109 = scmp.eq.s32.totalorder %s23, 3
    %p110 = por %p108, %p109
    %p112 = scmp.ne.s32.totalorder %s95, %s111
    %p113 = scmp.eq.s32.totalorder %s23, 0
    %p114 = por %p112, %p113
    %s115 = ssub.s32 %s25, %s32
    %p116 = scmp.eq.s32.totalorder %s115, 0
    %s118 = sadd.s32 %s117, 1
    %s119 = scalar_select %p116, %s117, %s118
    %p122 = pneg %p116
    %p123 = scmp.eq.s32.totalorder %s17, 3
    %p124 = por %p122, %p123
    %p125 = scmp.ne.s32.totalorder %s117, %s120
    %p126 = scmp.eq.s32.totalorder %s17, 0
    %p127 = por %p125, %p126
    %p128 = scmp.ne.s32.totalorder %s117, %s120
    %p129 = scmp.eq.s32.totalorder %s22, 3
    %p130 = por %p128, %p129
    %p131 = scmp.ne.s32.totalorder %s120, %s121
    %p132 = scmp.eq.s32.totalorder %s22, 0
    %p133 = por %p131, %p132
    %p134 = scmp.ne.s32.totalorder %s120, %s121
    %p135 = scmp.eq.s32.totalorder %s23, 3
    %p136 = por %p134, %p135
    %p138 = scmp.ne.s32.totalorder %s121, %s137
    %p139 = scmp.eq.s32.totalorder %s23, 0
    %p140 = por %p138, %p139
    %s141 = ssub.s32 %s24, %s36
    %p142 = scmp.eq.s32.totalorder %s141, 0
    %s144 = sadd.s32 %s143, 1
    %s145 = scalar_select %p142, %s143, %s144
    %p148 = pneg %p142
    %p149 = scmp.eq.s32.totalorder %s17, 3
    %p150 = por %p148, %p149
    %p151 = scmp.ne.s32.totalorder %s143, %s146
    %p152 = scmp.eq.s32.totalorder %s17, 0
    %p153 = por %p151, %p152
    %p154 = scmp.ne.s32.totalorder %s143, %s146
    %p155 = scmp.eq.s32.totalorder %s22, 3
    %p156 = por %p154, %p155
    %p157 = scmp.ne.s32.totalorder %s146, %s147
    %p158 = scmp.eq.s32.totalorder %s22, 0
    %p159 = por %p157, %p158
    %p160 = scmp.ne.s32.totalorder %s146, %s147
    %p161 = scmp.eq.s32.totalorder %s23, 3
    %p162 = por %p160, %p161
    %p164 = scmp.ne.s32.totalorder %s147, %s163
    %p165 = scmp.eq.s32.totalorder %s23, 0
    %p166 = por %p164, %p165
    %p167 = scmp.le.s32.totalorder 1, %s17
    %p168 = scmp.lt.s32.totalorder %s17, 5
    %p169 = pnand %p167, %p168
    %p170 = pneg %p169
    // Predicated region
    $region9: #{xformers_model_forward.4} parent=5 // pred_check
      _
    $region10: #{xformers_model_forward.4} parent=5 // pred_check_branch
      %172 = sbr.rel (%p169) target = $region12
    $region11: #{xformers_model_forward.4} parent=5 // pred_region
      %s173 = ssub.s32 %s17, 1
    $region12: #{xformers_model_forward.4} parent=5 // pred_fallthru
      _
    %p174 = scmp.lt.s32.totalorder %s17, 4
    // Predicated region
    $region13: #{xformers_model_forward.4} parent=5 // pred_check
      %p175 = pneg %p174
    $region14: #{xformers_model_forward.4} parent=5 // pred_check_branch
      %177 = sbr.rel (%p175) target = $region16
    $region15: #{xformers_model_forward.4} parent=5 // pred_region
      // Predicated region
      $region17: #{xformers_model_forward.4} parent=15 // pred_check
        %p178 = pneg %p49
      $region18: #{xformers_model_forward.4} parent=15 // pred_check_branch
        %180 = sbr.rel (%p178) target = $region20
      $region19: #{xformers_model_forward.4} parent=15 // pred_region
        %s181 = smul.u32 16, %s24
        %p182 = scmp.lt.s32.totalorder %s181, 31
        %s183 = scalar_select %p182, %s181, 31
        %s184 = smul.addr %s183, 8
        %s185 = scalar_lea.vmem %s1, %s184
        %s186 = smul.u32 16, %s24
      $region20: #{xformers_model_forward.4} parent=15 // pred_fallthru
        _
      // Predicated region
      $region21: #{xformers_model_forward.4} parent=15 // pred_check
        %p187 = pneg %p75
      $region22: #{xformers_model_forward.4} parent=15 // pred_check_branch
        %189 = sbr.rel (%p187) target = $region24
      $region23: #{xformers_model_forward.4} parent=15 // pred_region
        %p190 = scmp.lt.s32.totalorder %s25, 1
        %s191 = scalar_select %p190, %s25, 1
        %s192 = scalar_lea.vmem %s2, %s191
      $region24: #{xformers_model_forward.4} parent=15 // pred_fallthru
        _
      // Predicated region
      $region25: #{xformers_model_forward.4} parent=15 // pred_check
        %p193 = pneg %p101
      $region26: #{xformers_model_forward.4} parent=15 // pred_check_branch
        %195 = sbr.rel (%p193) target = $region28
      $region27: #{xformers_model_forward.4} parent=15 // pred_region
        %s196 = smul.u32 16, %s24
        %p197 = scmp.lt.s32.totalorder %s196, 31
        %s198 = scalar_select %p197, %s196, 31
        %s199 = smul.addr %s198, 4
        %s200 = scalar_lea.vmem %s3, %s199
        %s201 = smul.u32 16, %s24
      $region28: #{xformers_model_forward.4} parent=15 // pred_fallthru
        _
      // Predicated region
      $region29: #{xformers_model_forward.4} parent=15 // pred_check
        %p202 = pneg %p127
      $region30: #{xformers_model_forward.4} parent=15 // pred_check_branch
        %204 = sbr.rel (%p202) target = $region32
      $region31: #{xformers_model_forward.4} parent=15 // pred_region
        %s205 = smul.u32 16, %s25
        %p206 = scmp.lt.s32.totalorder %s205, 31
        %s207 = scalar_select %p206, %s205, 31
        %s208 = smul.addr %s207, 4
        %s209 = scalar_lea.vmem %s4, %s208
        %s210 = smul.u32 16, %s25
      $region32: #{xformers_model_forward.4} parent=15 // pred_fallthru
        _
    $region16: #{xformers_model_forward.4} parent=5 // pred_fallthru
      _
    %p211 = scmp.le.s32.totalorder 1, %s17
    %p212 = scmp.lt.s32.totalorder %s17, 5
    %p213 = pnand %p211, %p212
    %p214 = pneg %p213
    // Predicated region
    $region33: #{xformers_model_forward.4} parent=5 // pred_check
      _
    $region34: #{xformers_model_forward.4} parent=5 // pred_check_branch
      %216 = sbr.rel (%p213) target = $region36
    $region35: #{xformers_model_forward.4} parent=5 // pred_region
      %s217 = ssub.s32 %s17, 1
      %s218 = smul.u32 16, %s26
      %p219 = scmp.lt.s32.totalorder %s218, 31
      %s220 = scalar_select %p219, %s218, 31
      %s221 = smul.addr %s220, 8
      %s222 = scalar_lea.vmem %s1, %s221
      %p223 = pneg %p55
      %p224 = pneg %p52
      %p225 = scmp.lt.s32.totalorder %s27, 1
      %s226 = scalar_select %p225, %s27, 1
      %s227 = scalar_lea.vmem %s2, %s226
      %p228 = pneg %p81
      %p229 = pneg %p78
      %s230 = smul.u32 16, %s26
      %p231 = scmp.lt.s32.totalorder %s230, 31
      %s232 = scalar_select %p231, %s230, 31
      %s233 = smul.addr %s232, 4
      %s234 = scalar_lea.vmem %s3, %s233
      %p235 = pneg %p107
      %p236 = pneg %p104
      %s237 = smul.u32 16, %s27
      %p238 = scmp.lt.s32.totalorder %s237, 31
      %s239 = scalar_select %p238, %s237, 31
      %s240 = smul.addr %s239, 4
      %s241 = scalar_lea.vmem %s4, %s240
      %p242 = pneg %p133
      %p243 = pneg %p130
      %p244 = pneg %p159
      %p245 = pneg %p156
      %s246 = smul.u32 16, %s26
      %p247 = scmp.lt.s32.totalorder %s246, 31
      %s248 = scalar_select %p247, %s246, 31
      %s249 = smul.addr %s248, 4
      %s250 = scalar_lea.vmem %s5, %s249
      %s251 = smul.u32 16, %s26
      %p252 = scmp.lt.s32.totalorder %s251, 31
      %s253 = scalar_select %p252, %s251, 31
      %s254 = smul.addr %s253, 8
      %s255 = scalar_lea.vmem %s1, %s254
      %s256 = smul.u32 16, %s26
      %p257 = scmp.lt.s32.totalorder %s27, 1
      %s258 = scalar_select %p257, %s27, 1
      %s259 = scalar_lea.vmem %s2, %s258
      %s260 = smul.u32 16, %s26
      %p261 = scmp.lt.s32.totalorder %s260, 31
      %s262 = scalar_select %p261, %s260, 31
      %s263 = smul.addr %s262, 4
      %s264 = scalar_lea.vmem %s3, %s263
      %s265 = smul.u32 16, %s26
      %s266 = smul.u32 16, %s27
      %p267 = scmp.lt.s32.totalorder %s266, 31
      %s268 = scalar_select %p267, %s266, 31
      %s269 = smul.addr %s268, 4
      %s270 = scalar_lea.vmem %s4, %s269
      %s271 = smul.u32 16, %s27
      %s272 = smul.u32 16, %s26
      %p273 = scmp.lt.s32.totalorder %s272, 31
      %s274 = scalar_select %p273, %s272, 31
      %s275 = smul.addr %s274, 4
      %s276 = scalar_lea.vmem %s5, %s275
      %s277 = smul.u32 16, %s26
      %p279 = scmp.eq.s32.totalorder %s27, 0
      // Predicated region
      $region37: #{xformers_model_forward.4} parent=35 // pred_check
        %p280 = pneg %p279
      $region38: #{xformers_model_forward.4} parent=35 // pred_check_branch
        %282 = sbr.rel (%p280) target = $region40
      $region39: #{xformers_model_forward.4} parent=35 // pred_region
        %vm283 = vcmask 7168
        %284 = vst.msk [vmem:[#allocation2] sm:$0xff] %vm283, -2.3819763e+38
        %285 = vst.msk [vmem:[#allocation2 + $0x8] sm:$0xff] %vm283, -2.3819763e+38
        %286 = vst.msk [vmem:[#allocation2 + $0x10] sm:$0xff] %vm283, -2.3819763e+38
        %287 = vst.msk [vmem:[#allocation2 + $0x18] sm:$0xff] %vm283, -2.3819763e+38
        %288 = vst.msk [vmem:[#allocation2 + $0x20] sm:$0xff] %vm283, -2.3819763e+38
        %289 = vst.msk [vmem:[#allocation2 + $0x28] sm:$0xff] %vm283, -2.3819763e+38
        %290 = vst.msk [vmem:[#allocation2 + $0x30] sm:$0xff] %vm283, -2.3819763e+38
        %291 = vst.msk [vmem:[#allocation2 + $0x38] sm:$0xff] %vm283, -2.3819763e+38
        %292 = vst.msk [vmem:[#allocation2 + $0x40] sm:$0xff] %vm283, -2.3819763e+38
        %293 = vst.msk [vmem:[#allocation2 + $0x48] sm:$0xff] %vm283, -2.3819763e+38
        %294 = vst.msk [vmem:[#allocation2 + $0x50] sm:$0xff] %vm283, -2.3819763e+38
        %295 = vst.msk [vmem:[#allocation2 + $0x58] sm:$0xff] %vm283, -2.3819763e+38
        %296 = vst.msk [vmem:[#allocation2 + $0x60] sm:$0xff] %vm283, -2.3819763e+38
        %297 = vst.msk [vmem:[#allocation2 + $0x68] sm:$0xff] %vm283, -2.3819763e+38
        %298 = vst.msk [vmem:[#allocation2 + $0x70] sm:$0xff] %vm283, -2.3819763e+38
        %299 = vst.msk [vmem:[#allocation2 + $0x78] sm:$0xff] %vm283, -2.3819763e+38
        %300 = vst.msk [vmem:[#allocation2 + $0x80] sm:$0xff] %vm283, -2.3819763e+38
        %301 = vst.msk [vmem:[#allocation2 + $0x88] sm:$0xff] %vm283, -2.3819763e+38
        %302 = vst.msk [vmem:[#allocation2 + $0x90] sm:$0xff] %vm283, -2.3819763e+38
        %303 = vst.msk [vmem:[#allocation2 + $0x98] sm:$0xff] %vm283, -2.3819763e+38
        %304 = vst.msk [vmem:[#allocation2 + $0xa0] sm:$0xff] %vm283, -2.3819763e+38
        %305 = vst.msk [vmem:[#allocation2 + $0xa8] sm:$0xff] %vm283, -2.3819763e+38
        %306 = vst.msk [vmem:[#allocation2 + $0xb0] sm:$0xff] %vm283, -2.3819763e+38
        %307 = vst.msk [vmem:[#allocation2 + $0xb8] sm:$0xff] %vm283, -2.3819763e+38
        %308 = vst.msk [vmem:[#allocation2 + $0xc0] sm:$0xff] %vm283, -2.3819763e+38
        %309 = vst.msk [vmem:[#allocation2 + $0xc8] sm:$0xff] %vm283, -2.3819763e+38
        %310 = vst.msk [vmem:[#allocation2 + $0xd0] sm:$0xff] %vm283, -2.3819763e+38
        %311 = vst.msk [vmem:[#allocation2 + $0xd8] sm:$0xff] %vm283, -2.3819763e+38
        %312 = vst.msk [vmem:[#allocation2 + $0xe0] sm:$0xff] %vm283, -2.3819763e+38
        %313 = vst.msk [vmem:[#allocation2 + $0xe8] sm:$0xff] %vm283, -2.3819763e+38
        %314 = vst.msk [vmem:[#allocation2 + $0xf0] sm:$0xff] %vm283, -2.3819763e+38
        %315 = vst.msk [vmem:[#allocation2 + $0xf8] sm:$0xff] %vm283, -2.3819763e+38
        %316 = vst.msk [vmem:[#allocation3] sm:$0xff] %vm283, 0.0
        %317 = vst.msk [vmem:[#allocation3 + $0x8] sm:$0xff] %vm283, 0.0
        %318 = vst.msk [vmem:[#allocation3 + $0x10] sm:$0xff] %vm283, 0.0
        %319 = vst.msk [vmem:[#allocation3 + $0x18] sm:$0xff] %vm283, 0.0
        %320 = vst.msk [vmem:[#allocation3 + $0x20] sm:$0xff] %vm283, 0.0
        %321 = vst.msk [vmem:[#allocation3 + $0x28] sm:$0xff] %vm283, 0.0
        %322 = vst.msk [vmem:[#allocation3 + $0x30] sm:$0xff] %vm283, 0.0
        %323 = vst.msk [vmem:[#allocation3 + $0x38] sm:$0xff] %vm283, 0.0
        %324 = vst.msk [vmem:[#allocation3 + $0x40] sm:$0xff] %vm283, 0.0
        %325 = vst.msk [vmem:[#allocation3 + $0x48] sm:$0xff] %vm283, 0.0
        %326 = vst.msk [vmem:[#allocation3 + $0x50] sm:$0xff] %vm283, 0.0
        %327 = vst.msk [vmem:[#allocation3 + $0x58] sm:$0xff] %vm283, 0.0
        %328 = vst.msk [vmem:[#allocation3 + $0x60] sm:$0xff] %vm283, 0.0
        %329 = vst.msk [vmem:[#allocation3 + $0x68] sm:$0xff] %vm283, 0.0
        %330 = vst.msk [vmem:[#allocation3 + $0x70] sm:$0xff] %vm283, 0.0
        %331 = vst.msk [vmem:[#allocation3 + $0x78] sm:$0xff] %vm283, 0.0
        %332 = vst.msk [vmem:[#allocation3 + $0x80] sm:$0xff] %vm283, 0.0
        %333 = vst.msk [vmem:[#allocation3 + $0x88] sm:$0xff] %vm283, 0.0
        %334 = vst.msk [vmem:[#allocation3 + $0x90] sm:$0xff] %vm283, 0.0
        %335 = vst.msk [vmem:[#allocation3 + $0x98] sm:$0xff] %vm283, 0.0
        %336 = vst.msk [vmem:[#allocation3 + $0xa0] sm:$0xff] %vm283, 0.0
        %337 = vst.msk [vmem:[#allocation3 + $0xa8] sm:$0xff] %vm283, 0.0
        %338 = vst.msk [vmem:[#allocation3 + $0xb0] sm:$0xff] %vm283, 0.0
        %339 = vst.msk [vmem:[#allocation3 + $0xb8] sm:$0xff] %vm283, 0.0
        %340 = vst.msk [vmem:[#allocation3 + $0xc0] sm:$0xff] %vm283, 0.0
        %341 = vst.msk [vmem:[#allocation3 + $0xc8] sm:$0xff] %vm283, 0.0
        %342 = vst.msk [vmem:[#allocation3 + $0xd0] sm:$0xff] %vm283, 0.0
        %343 = vst.msk [vmem:[#allocation3 + $0xd8] sm:$0xff] %vm283, 0.0
        %344 = vst.msk [vmem:[#allocation3 + $0xe0] sm:$0xff] %vm283, 0.0
        %345 = vst.msk [vmem:[#allocation3 + $0xe8] sm:$0xff] %vm283, 0.0
        %346 = vst.msk [vmem:[#allocation3 + $0xf0] sm:$0xff] %vm283, 0.0
        %347 = vst.msk [vmem:[#allocation3 + $0xf8] sm:$0xff] %vm283, 0.0
        %vm348 = vcmask 130048
        %349 = vst.msk [vmem:[#allocation4] sm:$0xff] %vm348, 0.0
        %350 = vst.msk [vmem:[#allocation4 + $0x8] sm:$0xff] %vm348, 0.0
        %351 = vst.msk [vmem:[#allocation4 + $0x10] sm:$0xff] %vm348, 0.0
        %352 = vst.msk [vmem:[#allocation4 + $0x18] sm:$0xff] %vm348, 0.0
        %353 = vst.msk [vmem:[#allocation4 + $0x20] sm:$0xff] %vm348, 0.0
        %354 = vst.msk [vmem:[#allocation4 + $0x28] sm:$0xff] %vm348, 0.0
        %355 = vst.msk [vmem:[#allocation4 + $0x30] sm:$0xff] %vm348, 0.0
        %356 = vst.msk [vmem:[#allocation4 + $0x38] sm:$0xff] %vm348, 0.0
        %357 = vst.msk [vmem:[#allocation4 + $0x40] sm:$0xff] %vm348, 0.0
        %358 = vst.msk [vmem:[#allocation4 + $0x48] sm:$0xff] %vm348, 0.0
        %359 = vst.msk [vmem:[#allocation4 + $0x50] sm:$0xff] %vm348, 0.0
        %360 = vst.msk [vmem:[#allocation4 + $0x58] sm:$0xff] %vm348, 0.0
        %361 = vst.msk [vmem:[#allocation4 + $0x60] sm:$0xff] %vm348, 0.0
        %362 = vst.msk [vmem:[#allocation4 + $0x68] sm:$0xff] %vm348, 0.0
        %363 = vst.msk [vmem:[#allocation4 + $0x70] sm:$0xff] %vm348, 0.0
        %364 = vst.msk [vmem:[#allocation4 + $0x78] sm:$0xff] %vm348, 0.0
        %365 = vst.msk [vmem:[#allocation4 + $0x80] sm:$0xff] %vm348, 0.0
        %366 = vst.msk [vmem:[#allocation4 + $0x88] sm:$0xff] %vm348, 0.0
        %367 = vst.msk [vmem:[#allocation4 + $0x90] sm:$0xff] %vm348, 0.0
        %368 = vst.msk [vmem:[#allocation4 + $0x98] sm:$0xff] %vm348, 0.0
        %369 = vst.msk [vmem:[#allocation4 + $0xa0] sm:$0xff] %vm348, 0.0
        %370 = vst.msk [vmem:[#allocation4 + $0xa8] sm:$0xff] %vm348, 0.0
        %371 = vst.msk [vmem:[#allocation4 + $0xb0] sm:$0xff] %vm348, 0.0
        %372 = vst.msk [vmem:[#allocation4 + $0xb8] sm:$0xff] %vm348, 0.0
        %373 = vst.msk [vmem:[#allocation4 + $0xc0] sm:$0xff] %vm348, 0.0
        %374 = vst.msk [vmem:[#allocation4 + $0xc8] sm:$0xff] %vm348, 0.0
        %375 = vst.msk [vmem:[#allocation4 + $0xd0] sm:$0xff] %vm348, 0.0
        %376 = vst.msk [vmem:[#allocation4 + $0xd8] sm:$0xff] %vm348, 0.0
        %377 = vst.msk [vmem:[#allocation4 + $0xe0] sm:$0xff] %vm348, 0.0
        %378 = vst.msk [vmem:[#allocation4 + $0xe8] sm:$0xff] %vm348, 0.0
        %379 = vst.msk [vmem:[#allocation4 + $0xf0] sm:$0xff] %vm348, 0.0
        %380 = vst.msk [vmem:[#allocation4 + $0xf8] sm:$0xff] %vm348, 0.0
      $region40: #{xformers_model_forward.4} parent=35 // pred_fallthru
        _
      %s381 = smul.u32 %s26, 128
      %s382 = smul.u32 %s27, 128
      %s383 = sld [smem:[#allocation6 + %s381]]
      %s384 = sadd.s32 %s381, 127
      %s385 = sld [smem:[#allocation6 + %s384]]
      %s386 = sld [smem:[#allocation6 + %s382]]
      %s387 = sadd.s32 %s382, 127
      %s388 = sld [smem:[#allocation6 + %s387]]
      %p389 = scmp.le.s32.totalorder %s383, %s388
      %p390 = scmp.le.s32.totalorder %s386, %s385
      %p391 = pnand %p389, %p390
      %p392 = pneg %p391
      // Predicated region
      $region41: #{xformers_model_forward.4} parent=35 // pred_check
        _
      $region42: #{xformers_model_forward.4} parent=35 // pred_check_branch
        %394 = sbr.rel (%p391) target = $region44
      $region43: #{xformers_model_forward.4} parent=35 // pred_region
        %v395 = vld [vmem:[%s255] sm:$0xff]
        %v396 = vld [vmem:[%s255 + $0x8] sm:$0xff]
        %v397 = vld [vmem:[%s255 + $0x10] sm:$0xff]
        %v398 = vld [vmem:[%s255 + $0x18] sm:$0xff]
        %v399 = vld [vmem:[%s255 + $0x20] sm:$0xff]
        %v400 = vld [vmem:[%s255 + $0x28] sm:$0xff]
        %v401 = vld [vmem:[%s255 + $0x30] sm:$0xff]
        %v402 = vld [vmem:[%s255 + $0x38] sm:$0xff]
        %v403 = vld [vmem:[%s255 + $0x40] sm:$0xff]
        %v404 = vld [vmem:[%s255 + $0x48] sm:$0xff]
        %v405 = vld [vmem:[%s255 + $0x50] sm:$0xff]
        %v406 = vld [vmem:[%s255 + $0x58] sm:$0xff]
        %v407 = vld [vmem:[%s255 + $0x60] sm:$0xff]
        %v408 = vld [vmem:[%s255 + $0x68] sm:$0xff]
        %v409 = vld [vmem:[%s255 + $0x70] sm:$0xff]
        %v410 = vld [vmem:[%s255 + $0x78] sm:$0xff]
        %v411 = vld [vmem:[%s259] sm:$0x1]
        %412 = vset.pattern.permute.xlu0 0
        %413 = vperm.xlu0 %412, %v395
        %v414 = vpop.permute.xlu0 %413
        %415 = vset.pattern.permute.xlu0 0
        %416 = vperm.xlu0 %415, %v396
        %v417 = vpop.permute.xlu0 %416
        %418 = vset.pattern.permute.xlu0 0
        %419 = vperm.xlu0 %418, %v397
        %v420 = vpop.permute.xlu0 %419
        %421 = vset.pattern.permute.xlu0 0
        %422 = vperm.xlu0 %421, %v398
        %v423 = vpop.permute.xlu0 %422
        %424 = vset.pattern.permute.xlu0 0
        %425 = vperm.xlu0 %424, %v399
        %v426 = vpop.permute.xlu0 %425
        %427 = vset.pattern.permute.xlu0 0
        %428 = vperm.xlu0 %427, %v400
        %v429 = vpop.permute.xlu0 %428
        %430 = vset.pattern.permute.xlu0 0
        %431 = vperm.xlu0 %430, %v401
        %v432 = vpop.permute.xlu0 %431
        %433 = vset.pattern.permute.xlu0 0
        %434 = vperm.xlu0 %433, %v402
        %v435 = vpop.permute.xlu0 %434
        %436 = vset.pattern.permute.xlu0 0
        %437 = vperm.xlu0 %436, %v403
        %v438 = vpop.permute.xlu0 %437
        %439 = vset.pattern.permute.xlu0 0
        %440 = vperm.xlu0 %439, %v404
        %v441 = vpop.permute.xlu0 %440
        %442 = vset.pattern.permute.xlu0 0
        %443 = vperm.xlu0 %442, %v405
        %v444 = vpop.permute.xlu0 %443
        %445 = vset.pattern.permute.xlu0 0
        %446 = vperm.xlu0 %445, %v406
        %v447 = vpop.permute.xlu0 %446
        %448 = vset.pattern.permute.xlu0 0
        %449 = vperm.xlu0 %448, %v407
        %v450 = vpop.permute.xlu0 %449
        %451 = vset.pattern.permute.xlu0 0
        %452 = vperm.xlu0 %451, %v408
        %v453 = vpop.permute.xlu0 %452
        %454 = vset.pattern.permute.xlu0 0
        %455 = vperm.xlu0 %454, %v409
        %v456 = vpop.permute.xlu0 %455
        %457 = vset.pattern.permute.xlu0 0
        %458 = vperm.xlu0 %457, %v410
        %v459 = vpop.permute.xlu0 %458
        %v460 = vlaneseq
        %v461 = vshrl.u32 %v460, 7
        %v462 = vsub.s32 0, %v461
        %v463 = vrot.slane %v411, %v462
        %vm464 = vcmp.eq.s32.totalorder %v414, %v463
        %vm465 = vcmp.eq.s32.totalorder %v417, %v463
        %vm466 = vcmp.eq.s32.totalorder %v420, %v463
        %vm467 = vcmp.eq.s32.totalorder %v423, %v463
        %vm468 = vcmp.eq.s32.totalorder %v426, %v463
        %vm469 = vcmp.eq.s32.totalorder %v429, %v463
        %vm470 = vcmp.eq.s32.totalorder %v432, %v463
        %vm471 = vcmp.eq.s32.totalorder %v435, %v463
        %vm472 = vcmp.eq.s32.totalorder %v438, %v463
        %vm473 = vcmp.eq.s32.totalorder %v441, %v463
        %vm474 = vcmp.eq.s32.totalorder %v444, %v463
        %vm475 = vcmp.eq.s32.totalorder %v447, %v463
        %vm476 = vcmp.eq.s32.totalorder %v450, %v463
        %vm477 = vcmp.eq.s32.totalorder %v453, %v463
        %vm478 = vcmp.eq.s32.totalorder %v456, %v463
        %vm479 = vcmp.eq.s32.totalorder %v459, %v463
        %v480 = vld [vmem:[%s264] sm:$0xf]
        %v481 = vld [vmem:[%s264 + $0x4] sm:$0xf]
        %v482 = vld [vmem:[%s264 + $0x8] sm:$0xf]
        %v483 = vld [vmem:[%s264 + $0xc] sm:$0xf]
        %v484 = vld [vmem:[%s264 + $0x10] sm:$0xf]
        %v485 = vld [vmem:[%s264 + $0x14] sm:$0xf]
        %v486 = vld [vmem:[%s264 + $0x18] sm:$0xf]
        %v487 = vld [vmem:[%s264 + $0x1c] sm:$0xf]
        %v488 = vld [vmem:[%s264 + $0x20] sm:$0xf]
        %v489 = vld [vmem:[%s264 + $0x24] sm:$0xf]
        %v490 = vld [vmem:[%s264 + $0x28] sm:$0xf]
        %v491 = vld [vmem:[%s264 + $0x2c] sm:$0xf]
        %v492 = vld [vmem:[%s264 + $0x30] sm:$0xf]
        %v493 = vld [vmem:[%s264 + $0x34] sm:$0xf]
        %v494 = vld [vmem:[%s264 + $0x38] sm:$0xf]
        %v495 = vld [vmem:[%s264 + $0x3c] sm:$0xf]
        %v496 = vld [vmem:[%s270] sm:$0xf]
        %v497 = vld [vmem:[%s270 + $0x4] sm:$0xf]
        %v498 = vld [vmem:[%s270 + $0x8] sm:$0xf]
        %v499 = vld [vmem:[%s270 + $0xc] sm:$0xf]
        %v500 = vld [vmem:[%s270 + $0x10] sm:$0xf]
        %v501 = vld [vmem:[%s270 + $0x14] sm:$0xf]
        %v502 = vld [vmem:[%s270 + $0x18] sm:$0xf]
        %v503 = vld [vmem:[%s270 + $0x1c] sm:$0xf]
        %v504 = vld [vmem:[%s270 + $0x20] sm:$0xf]
        %v505 = vld [vmem:[%s270 + $0x24] sm:$0xf]
        %v506 = vld [vmem:[%s270 + $0x28] sm:$0xf]
        %v507 = vld [vmem:[%s270 + $0x2c] sm:$0xf]
        %v508 = vld [vmem:[%s270 + $0x30] sm:$0xf]
        %v509 = vld [vmem:[%s270 + $0x34] sm:$0xf]
        %v510 = vld [vmem:[%s270 + $0x38] sm:$0xf]
        %v511 = vld [vmem:[%s270 + $0x3c] sm:$0xf]
        %v528 = vunpack.c.l.b16 %v480
        %v529 = vunpack.c.l.b16 %v481
        %v530 = vunpack.c.l.b16 %v482
        %v531 = vunpack.c.l.b16 %v483
        %v532 = vunpack.c.l.b16 %v484
        %v533 = vunpack.c.l.b16 %v485
        %v534 = vunpack.c.l.b16 %v486
        %v535 = vunpack.c.l.b16 %v487
        %v536 = vunpack.c.l.b16 %v488
        %v537 = vunpack.c.l.b16 %v489
        %v538 = vunpack.c.l.b16 %v490
        %v539 = vunpack.c.l.b16 %v491
        %v540 = vunpack.c.l.b16 %v492
        %v541 = vunpack.c.l.b16 %v493
        %v542 = vunpack.c.l.b16 %v494
        %v543 = vunpack.c.l.b16 %v495
        %v544 = vpack.c.b16 %v529, %v528
        %v545 = vpack.c.b16 %v531, %v530
        %v546 = vpack.c.b16 %v533, %v532
        %v547 = vpack.c.b16 %v535, %v534
        %v548 = vpack.c.b16 %v537, %v536
        %v549 = vpack.c.b16 %v539, %v538
        %v550 = vpack.c.b16 %v541, %v540
        %v551 = vpack.c.b16 %v543, %v542
        %v568 = vunpack.c.l.b16 %v496
        %v569 = vunpack.c.l.b16 %v497
        %v570 = vunpack.c.l.b16 %v498
        %v571 = vunpack.c.l.b16 %v499
        %v572 = vunpack.c.l.b16 %v500
        %v573 = vunpack.c.l.b16 %v501
        %v574 = vunpack.c.l.b16 %v502
        %v575 = vunpack.c.l.b16 %v503
        %v576 = vunpack.c.l.b16 %v504
        %v577 = vunpack.c.l.b16 %v505
        %v578 = vunpack.c.l.b16 %v506
        %v579 = vunpack.c.l.b16 %v507
        %v580 = vunpack.c.l.b16 %v508
        %v581 = vunpack.c.l.b16 %v509
        %v582 = vunpack.c.l.b16 %v510
        %v583 = vunpack.c.l.b16 %v511
        %v584 = vpack.c.b16 %v569, %v568
        %v585 = vpack.c.b16 %v571, %v570
        %v586 = vpack.c.b16 %v573, %v572
        %v587 = vpack.c.b16 %v575, %v574
        %v588 = vpack.c.b16 %v577, %v576
        %v589 = vpack.c.b16 %v579, %v578
        %v590 = vpack.c.b16 %v581, %v580
        %v591 = vpack.c.b16 %v583, %v582
        %592 = vrot.lane.b32.xlu0 %v584, 96
        %v593 = vpop.permute.xlu0 %592
        %594 = vrot.lane.b32.xlu0 %v585, 96
        %v595 = vpop.permute.xlu0 %594
        %596 = vrot.lane.b32.xlu0 %v586, 96
        %v597 = vpop.permute.xlu0 %596
        %598 = vrot.lane.b32.xlu0 %v587, 96
        %v599 = vpop.permute.xlu0 %598
        %600 = vrot.lane.b32.xlu0 %v588, 96
        %v601 = vpop.permute.xlu0 %600
        %602 = vrot.lane.b32.xlu0 %v589, 96
        %v603 = vpop.permute.xlu0 %602
        %604 = vrot.lane.b32.xlu0 %v590, 96
        %v605 = vpop.permute.xlu0 %604
        %606 = vrot.lane.b32.xlu0 %v591, 96
        %v607 = vpop.permute.xlu0 %606
        %vm608 = vcmask 130048
        %v610 = vsel %vm608, %v544, 0
        %v613 = vsel %vm608, %v545, 0
        %v616 = vsel %vm608, %v546, 0
        %v619 = vsel %vm608, %v547, 0
        %v622 = vsel %vm608, %v548, 0
        %v625 = vsel %vm608, %v549, 0
        %v628 = vsel %vm608, %v550, 0
        %v631 = vsel %vm608, %v551, 0
        %v634 = vsel %vm608, %v593, 0
        %v637 = vsel %vm608, %v595, 0
        %v640 = vsel %vm608, %v597, 0
        %v643 = vsel %vm608, %v599, 0
        %v646 = vsel %vm608, %v601, 0
        %v649 = vsel %vm608, %v603, 0
        %v652 = vsel %vm608, %v605, 0
        %v655 = vsel %vm608, %v607, 0
        %657 = vmatprep.subr.bf16.mxu0 0
        %658 = vmatpush1.bf16.xpose.msra.mxu0 %v655
        %659 = vmatprep.subr.bf16.mxu0 0
        %660 = vmatpush1.bf16.xpose.msra.mxu0 %v652
        %661 = vmatprep.subr.bf16.mxu0 0
        %662 = vmatpush1.bf16.xpose.msra.mxu0 %v649
        %663 = vmatprep.subr.bf16.mxu0 0
        %664 = vmatpush1.bf16.xpose.msra.mxu0 %v646
        %665 = vmatprep.subr.bf16.mxu0 0
        %666 = vmatpush1.bf16.xpose.msra.mxu0 %v643
        %667 = vmatprep.subr.bf16.mxu0 0
        %668 = vmatpush1.bf16.xpose.msra.mxu0 %v640
        %669 = vmatprep.subr.bf16.mxu0 0
        %670 = vmatpush1.bf16.xpose.msra.mxu0 %v637
        %671 = vmatprep.subr.bf16.mxu0 0
        %672 = vmatpush1.bf16.xpose.msra.mxu0 %v634
        %673 = vmatprep.subr.bf16.mxu0 0
        %674 = vmatpush2.bf16.xpose.msra.mxu0 0
        %675 = vmatprep.subr.bf16.mxu0 0
        %676 = vmatpush2.bf16.xpose.msra.mxu0 0
        %677 = vmatprep.subr.bf16.mxu0 0
        %678 = vmatpush2.bf16.xpose.msra.mxu0 0
        %679 = vmatprep.subr.bf16.mxu0 0
        %680 = vmatpush2.bf16.xpose.msra.mxu0 0
        %681 = vmatprep.subr.bf16.mxu0 0
        %682 = vmatpush2.bf16.xpose.msra.mxu0 0
        %683 = vmatprep.subr.bf16.mxu0 0
        %684 = vmatpush2.bf16.xpose.msra.mxu0 0
        %685 = vmatprep.subr.bf16.mxu0 0
        %686 = vmatpush2.bf16.xpose.msra.mxu0 0
        %687 = vmatprep.subr.bf16.mxu0 0
        %688 = vmatpush2.bf16.xpose.msra.mxu0 0
        %689 = vmatprep.mubr.bf16.mxu0 0
        %690 = vmatmul.mubr.bf16.gmra.mxu0 %v610
        %v691 = vpop.f32.mrf.mxu0
        %v692 = vadd.f32 0.0, %v691
        %v693 = vpop.f32.mrf.mxu0
        %v694 = vpop.f32.mrf.mxu0
        %v695 = vadd.f32 0.0, %v694
        %v696 = vpop.f32.mrf.mxu0
        %697 = vmatprep.mubr.bf16.mxu0 0
        %698 = vmatmul.mubr.bf16.gmra.mxu0 %v613
        %v699 = vpop.f32.mrf.mxu0
        %v700 = vadd.f32 0.0, %v699
        %v701 = vpop.f32.mrf.mxu0
        %v702 = vpop.f32.mrf.mxu0
        %v703 = vadd.f32 0.0, %v702
        %v704 = vpop.f32.mrf.mxu0
        %705 = vmatprep.mubr.bf16.mxu0 0
        %706 = vmatmul.mubr.bf16.gmra.mxu0 %v616
        %v707 = vpop.f32.mrf.mxu0
        %v708 = vadd.f32 0.0, %v707
        %v709 = vpop.f32.mrf.mxu0
        %v710 = vpop.f32.mrf.mxu0
        %v711 = vadd.f32 0.0, %v710
        %v712 = vpop.f32.mrf.mxu0
        %713 = vmatprep.mubr.bf16.mxu0 0
        %714 = vmatmul.mubr.bf16.gmra.mxu0 %v619
        %v715 = vpop.f32.mrf.mxu0
        %v716 = vadd.f32 0.0, %v715
        %v717 = vpop.f32.mrf.mxu0
        %v718 = vpop.f32.mrf.mxu0
        %v719 = vadd.f32 0.0, %v718
        %v720 = vpop.f32.mrf.mxu0
        %721 = vmatprep.mubr.bf16.mxu0 0
        %722 = vmatmul.mubr.bf16.gmra.mxu0 %v622
        %v723 = vpop.f32.mrf.mxu0
        %v724 = vadd.f32 0.0, %v723
        %v725 = vpop.f32.mrf.mxu0
        %v726 = vpop.f32.mrf.mxu0
        %v727 = vadd.f32 0.0, %v726
        %v728 = vpop.f32.mrf.mxu0
        %729 = vmatprep.mubr.bf16.mxu0 0
        %730 = vmatmul.mubr.bf16.gmra.mxu0 %v625
        %v731 = vpop.f32.mrf.mxu0
        %v732 = vadd.f32 0.0, %v731
        %v733 = vpop.f32.mrf.mxu0
        %v734 = vpop.f32.mrf.mxu0
        %v735 = vadd.f32 0.0, %v734
        %v736 = vpop.f32.mrf.mxu0
        %737 = vmatprep.mubr.bf16.mxu0 0
        %738 = vmatmul.mubr.bf16.gmra.mxu0 %v628
        %v739 = vpop.f32.mrf.mxu0
        %v740 = vadd.f32 0.0, %v739
        %v741 = vpop.f32.mrf.mxu0
        %v742 = vpop.f32.mrf.mxu0
        %v743 = vadd.f32 0.0, %v742
        %v744 = vpop.f32.mrf.mxu0
        %745 = vmatprep.mubr.bf16.mxu0 0
        %746 = vmatmul.mubr.bf16.gmra.mxu0 %v631
        %v747 = vpop.f32.mrf.mxu0
        %v748 = vadd.f32 0.0, %v747
        %v749 = vpop.f32.mrf.mxu0
        %v750 = vpop.f32.mrf.mxu0
        %v751 = vadd.f32 0.0, %v750
        %v752 = vpop.f32.mrf.mxu0
        %753 = vdwg.mxu0
        %v754 = vsel %vm464, %v692, -2.3819763e+38
        %v755 = vsel %vm465, %v695, -2.3819763e+38
        %v756 = vsel %vm466, %v700, -2.3819763e+38
        %v757 = vsel %vm467, %v703, -2.3819763e+38
        %v758 = vsel %vm468, %v708, -2.3819763e+38
        %v759 = vsel %vm469, %v711, -2.3819763e+38
        %v760 = vsel %vm470, %v716, -2.3819763e+38
        %v761 = vsel %vm471, %v719, -2.3819763e+38
        %v762 = vsel %vm472, %v724, -2.3819763e+38
        %v763 = vsel %vm473, %v727, -2.3819763e+38
        %v764 = vsel %vm474, %v732, -2.3819763e+38
        %v765 = vsel %vm475, %v735, -2.3819763e+38
        %v766 = vsel %vm476, %v740, -2.3819763e+38
        %v767 = vsel %vm477, %v743, -2.3819763e+38
        %v768 = vsel %vm478, %v748, -2.3819763e+38
        %v769 = vsel %vm479, %v751, -2.3819763e+38
        %v770 = vld [vmem:[#allocation2] sm:$0xff]
        %v771 = vld [vmem:[#allocation2 + $0x8] sm:$0xff]
        %v772 = vld [vmem:[#allocation2 + $0x10] sm:$0xff]
        %v773 = vld [vmem:[#allocation2 + $0x18] sm:$0xff]
        %v774 = vld [vmem:[#allocation2 + $0x20] sm:$0xff]
        %v775 = vld [vmem:[#allocation2 + $0x28] sm:$0xff]
        %v776 = vld [vmem:[#allocation2 + $0x30] sm:$0xff]
        %v777 = vld [vmem:[#allocation2 + $0x38] sm:$0xff]
        %v778 = vld [vmem:[#allocation2 + $0x40] sm:$0xff]
        %v779 = vld [vmem:[#allocation2 + $0x48] sm:$0xff]
        %v780 = vld [vmem:[#allocation2 + $0x50] sm:$0xff]
        %v781 = vld [vmem:[#allocation2 + $0x58] sm:$0xff]
        %v782 = vld [vmem:[#allocation2 + $0x60] sm:$0xff]
        %v783 = vld [vmem:[#allocation2 + $0x68] sm:$0xff]
        %v784 = vld [vmem:[#allocation2 + $0x70] sm:$0xff]
        %v785 = vld [vmem:[#allocation2 + $0x78] sm:$0xff]
        %786 = vmax.xlane.f32.xlu0 %v754
        %v787 = vpop.xlane.xlu0 %786
        %788 = vmax.xlane.f32.xlu0 %v755
        %v789 = vpop.xlane.xlu0 %788
        %790 = vmax.xlane.f32.xlu0 %v756
        %v791 = vpop.xlane.xlu0 %790
        %792 = vmax.xlane.f32.xlu0 %v757
        %v793 = vpop.xlane.xlu0 %792
        %794 = vmax.xlane.f32.xlu0 %v758
        %v795 = vpop.xlane.xlu0 %794
        %796 = vmax.xlane.f32.xlu0 %v759
        %v797 = vpop.xlane.xlu0 %796
        %798 = vmax.xlane.f32.xlu0 %v760
        %v799 = vpop.xlane.xlu0 %798
        %800 = vmax.xlane.f32.xlu0 %v761
        %v801 = vpop.xlane.xlu0 %800
        %802 = vmax.xlane.f32.xlu0 %v762
        %v803 = vpop.xlane.xlu0 %802
        %804 = vmax.xlane.f32.xlu0 %v763
        %v805 = vpop.xlane.xlu0 %804
        %806 = vmax.xlane.f32.xlu0 %v764
        %v807 = vpop.xlane.xlu0 %806
        %808 = vmax.xlane.f32.xlu0 %v765
        %v809 = vpop.xlane.xlu0 %808
        %810 = vmax.xlane.f32.xlu0 %v766
        %v811 = vpop.xlane.xlu0 %810
        %812 = vmax.xlane.f32.xlu0 %v767
        %v813 = vpop.xlane.xlu0 %812
        %814 = vmax.xlane.f32.xlu0 %v768
        %v815 = vpop.xlane.xlu0 %814
        %816 = vmax.xlane.f32.xlu0 %v769
        %v817 = vpop.xlane.xlu0 %816
        %v818 = vmax.f32 %v770, %v787
        %v819 = vmax.f32 %v771, %v789
        %v820 = vmax.f32 %v772, %v791
        %v821 = vmax.f32 %v773, %v793
        %v822 = vmax.f32 %v774, %v795
        %v823 = vmax.f32 %v775, %v797
        %v824 = vmax.f32 %v776, %v799
        %v825 = vmax.f32 %v777, %v801
        %v826 = vmax.f32 %v778, %v803
        %v827 = vmax.f32 %v779, %v805
        %v828 = vmax.f32 %v780, %v807
        %v829 = vmax.f32 %v781, %v809
        %v830 = vmax.f32 %v782, %v811
        %v831 = vmax.f32 %v783, %v813
        %v832 = vmax.f32 %v784, %v815
        %v833 = vmax.f32 %v785, %v817
        %v834 = vsub.f32 %v770, %v818
        %v835 = vsub.f32 %v771, %v819
        %v836 = vsub.f32 %v772, %v820
        %v837 = vsub.f32 %v773, %v821
        %v838 = vsub.f32 %v774, %v822
        %v839 = vsub.f32 %v775, %v823
        %v840 = vsub.f32 %v776, %v824
        %v841 = vsub.f32 %v777, %v825
        %v842 = vsub.f32 %v778, %v826
        %v843 = vsub.f32 %v779, %v827
        %v844 = vsub.f32 %v780, %v828
        %v845 = vsub.f32 %v781, %v829
        %v846 = vsub.f32 %v782, %v830
        %v847 = vsub.f32 %v783, %v831
        %v848 = vsub.f32 %v784, %v832
        %v849 = vsub.f32 %v785, %v833
        %v850 = vmul.f32 %v834, 1.442695
        %v851 = vpow.pop %v850
        %v852 = vmul.f32 %v835, 1.442695
        %v853 = vpow.pop %v852
        %v854 = vmul.f32 %v836, 1.442695
        %v855 = vpow.pop %v854
        %v856 = vmul.f32 %v837, 1.442695
        %v857 = vpow.pop %v856
        %v858 = vmul.f32 %v838, 1.442695
        %v859 = vpow.pop %v858
        %v860 = vmul.f32 %v839, 1.442695
        %v861 = vpow.pop %v860
        %v862 = vmul.f32 %v840, 1.442695
        %v863 = vpow.pop %v862
        %v864 = vmul.f32 %v841, 1.442695
        %v865 = vpow.pop %v864
        %v866 = vmul.f32 %v842, 1.442695
        %v867 = vpow.pop %v866
        %v868 = vmul.f32 %v843, 1.442695
        %v869 = vpow.pop %v868
        %v870 = vmul.f32 %v844, 1.442695
        %v871 = vpow.pop %v870
        %v872 = vmul.f32 %v845, 1.442695
        %v873 = vpow.pop %v872
        %v874 = vmul.f32 %v846, 1.442695
        %v875 = vpow.pop %v874
        %v876 = vmul.f32 %v847, 1.442695
        %v877 = vpow.pop %v876
        %v878 = vmul.f32 %v848, 1.442695
        %v879 = vpow.pop %v878
        %v880 = vmul.f32 %v849, 1.442695
        %v881 = vpow.pop %v880
        %883 = vset.pattern.permute.xlu0 0
        %884 = vperm.xlu0 %883, %v818
        %v885 = vpop.permute.xlu0 %884
        %888 = vset.pattern.permute.xlu0 0
        %889 = vperm.xlu0 %888, %v819
        %v890 = vpop.permute.xlu0 %889
        %893 = vset.pattern.permute.xlu0 0
        %894 = vperm.xlu0 %893, %v820
        %v895 = vpop.permute.xlu0 %894
        %898 = vset.pattern.permute.xlu0 0
        %899 = vperm.xlu0 %898, %v821
        %v900 = vpop.permute.xlu0 %899
        %903 = vset.pattern.permute.xlu0 0
        %904 = vperm.xlu0 %903, %v822
        %v905 = vpop.permute.xlu0 %904
        %908 = vset.pattern.permute.xlu0 0
        %909 = vperm.xlu0 %908, %v823
        %v910 = vpop.permute.xlu0 %909
        %913 = vset.pattern.permute.xlu0 0
        %914 = vperm.xlu0 %913, %v824
        %v915 = vpop.permute.xlu0 %914
        %918 = vset.pattern.permute.xlu0 0
        %919 = vperm.xlu0 %918, %v825
        %v920 = vpop.permute.xlu0 %919
        %923 = vset.pattern.permute.xlu0 0
        %924 = vperm.xlu0 %923, %v826
        %v925 = vpop.permute.xlu0 %924
        %928 = vset.pattern.permute.xlu0 0
        %929 = vperm.xlu0 %928, %v827
        %v930 = vpop.permute.xlu0 %929
        %933 = vset.pattern.permute.xlu0 0
        %934 = vperm.xlu0 %933, %v828
        %v935 = vpop.permute.xlu0 %934
        %938 = vset.pattern.permute.xlu0 0
        %939 = vperm.xlu0 %938, %v829
        %v940 = vpop.permute.xlu0 %939
        %943 = vset.pattern.permute.xlu0 0
        %944 = vperm.xlu0 %943, %v830
        %v945 = vpop.permute.xlu0 %944
        %948 = vset.pattern.permute.xlu0 0
        %949 = vperm.xlu0 %948, %v831
        %v950 = vpop.permute.xlu0 %949
        %953 = vset.pattern.permute.xlu0 0
        %954 = vperm.xlu0 %953, %v832
        %v955 = vpop.permute.xlu0 %954
        %958 = vset.pattern.permute.xlu0 0
        %959 = vperm.xlu0 %958, %v833
        %v960 = vpop.permute.xlu0 %959
        %v962 = vsub.f32 %v754, %v885
        %v963 = vsub.f32 %v755, %v890
        %v964 = vsub.f32 %v756, %v895
        %v965 = vsub.f32 %v757, %v900
        %v966 = vsub.f32 %v758, %v905
        %v967 = vsub.f32 %v759, %v910
        %v968 = vsub.f32 %v760, %v915
        %v969 = vsub.f32 %v761, %v920
        %v970 = vsub.f32 %v762, %v925
        %v971 = vsub.f32 %v763, %v930
        %v972 = vsub.f32 %v764, %v935
        %v973 = vsub.f32 %v765, %v940
        %v974 = vsub.f32 %v766, %v945
        %v975 = vsub.f32 %v767, %v950
        %v976 = vsub.f32 %v768, %v955
        %v977 = vsub.f32 %v769, %v960
        %v978 = vmul.f32 %v962, 1.442695
        %v979 = vpow.pop %v978
        %v980 = vmul.f32 %v963, 1.442695
        %v981 = vpow.pop %v980
        %v982 = vmul.f32 %v964, 1.442695
        %v983 = vpow.pop %v982
        %v984 = vmul.f32 %v965, 1.442695
        %v985 = vpow.pop %v984
        %v986 = vmul.f32 %v966, 1.442695
        %v987 = vpow.pop %v986
        %v988 = vmul.f32 %v967, 1.442695
        %v989 = vpow.pop %v988
        %v990 = vmul.f32 %v968, 1.442695
        %v991 = vpow.pop %v990
        %v992 = vmul.f32 %v969, 1.442695
        %v993 = vpow.pop %v992
        %v994 = vmul.f32 %v970, 1.442695
        %v995 = vpow.pop %v994
        %v996 = vmul.f32 %v971, 1.442695
        %v997 = vpow.pop %v996
        %v998 = vmul.f32 %v972, 1.442695
        %v999 = vpow.pop %v998
        %v1000 = vmul.f32 %v973, 1.442695
        %v1001 = vpow.pop %v1000
        %v1002 = vmul.f32 %v974, 1.442695
        %v1003 = vpow.pop %v1002
        %v1004 = vmul.f32 %v975, 1.442695
        %v1005 = vpow.pop %v1004
        %v1006 = vmul.f32 %v976, 1.442695
        %v1007 = vpow.pop %v1006
        %v1008 = vmul.f32 %v977, 1.442695
        %v1009 = vpow.pop %v1008
        %v1010 = vld [vmem:[#allocation3] sm:$0xff]
        %v1011 = vld [vmem:[#allocation3 + $0x8] sm:$0xff]
        %v1012 = vld [vmem:[#allocation3 + $0x10] sm:$0xff]
        %v1013 = vld [vmem:[#allocation3 + $0x18] sm:$0xff]
        %v1014 = vld [vmem:[#allocation3 + $0x20] sm:$0xff]
        %v1015 = vld [vmem:[#allocation3 + $0x28] sm:$0xff]
        %v1016 = vld [vmem:[#allocation3 + $0x30] sm:$0xff]
        %v1017 = vld [vmem:[#allocation3 + $0x38] sm:$0xff]
        %v1018 = vld [vmem:[#allocation3 + $0x40] sm:$0xff]
        %v1019 = vld [vmem:[#allocation3 + $0x48] sm:$0xff]
        %v1020 = vld [vmem:[#allocation3 + $0x50] sm:$0xff]
        %v1021 = vld [vmem:[#allocation3 + $0x58] sm:$0xff]
        %v1022 = vld [vmem:[#allocation3 + $0x60] sm:$0xff]
        %v1023 = vld [vmem:[#allocation3 + $0x68] sm:$0xff]
        %v1024 = vld [vmem:[#allocation3 + $0x70] sm:$0xff]
        %v1025 = vld [vmem:[#allocation3 + $0x78] sm:$0xff]
        %v1026 = vmul.f32 %v851, %v1010
        %v1027 = vmul.f32 %v853, %v1011
        %v1028 = vmul.f32 %v855, %v1012
        %v1029 = vmul.f32 %v857, %v1013
        %v1030 = vmul.f32 %v859, %v1014
        %v1031 = vmul.f32 %v861, %v1015
        %v1032 = vmul.f32 %v863, %v1016
        %v1033 = vmul.f32 %v865, %v1017
        %v1034 = vmul.f32 %v867, %v1018
        %v1035 = vmul.f32 %v869, %v1019
        %v1036 = vmul.f32 %v871, %v1020
        %v1037 = vmul.f32 %v873, %v1021
        %v1038 = vmul.f32 %v875, %v1022
        %v1039 = vmul.f32 %v877, %v1023
        %v1040 = vmul.f32 %v879, %v1024
        %v1041 = vmul.f32 %v881, %v1025
        %1042 = vadd.xlane.f32.xlu0 %v979
        %v1043 = vpop.xlane.xlu0 %1042
        %1044 = vadd.xlane.f32.xlu0 %v981
        %v1045 = vpop.xlane.xlu0 %1044
        %1046 = vadd.xlane.f32.xlu0 %v983
        %v1047 = vpop.xlane.xlu0 %1046
        %1048 = vadd.xlane.f32.xlu0 %v985
        %v1049 = vpop.xlane.xlu0 %1048
        %1050 = vadd.xlane.f32.xlu0 %v987
        %v1051 = vpop.xlane.xlu0 %1050
        %1052 = vadd.xlane.f32.xlu0 %v989
        %v1053 = vpop.xlane.xlu0 %1052
        %1054 = vadd.xlane.f32.xlu0 %v991
        %v1055 = vpop.xlane.xlu0 %1054
        %1056 = vadd.xlane.f32.xlu0 %v993
        %v1057 = vpop.xlane.xlu0 %1056
        %1058 = vadd.xlane.f32.xlu0 %v995
        %v1059 = vpop.xlane.xlu0 %1058
        %1060 = vadd.xlane.f32.xlu0 %v997
        %v1061 = vpop.xlane.xlu0 %1060
        %1062 = vadd.xlane.f32.xlu0 %v999
        %v1063 = vpop.xlane.xlu0 %1062
        %1064 = vadd.xlane.f32.xlu0 %v1001
        %v1065 = vpop.xlane.xlu0 %1064
        %1066 = vadd.xlane.f32.xlu0 %v1003
        %v1067 = vpop.xlane.xlu0 %1066
        %1068 = vadd.xlane.f32.xlu0 %v1005
        %v1069 = vpop.xlane.xlu0 %1068
        %1070 = vadd.xlane.f32.xlu0 %v1007
        %v1071 = vpop.xlane.xlu0 %1070
        %1072 = vadd.xlane.f32.xlu0 %v1009
        %v1073 = vpop.xlane.xlu0 %1072
        %v1074 = vadd.f32 %v1026, %v1043
        %v1075 = vadd.f32 %v1027, %v1045
        %v1076 = vadd.f32 %v1028, %v1047
        %v1077 = vadd.f32 %v1029, %v1049
        %v1078 = vadd.f32 %v1030, %v1051
        %v1079 = vadd.f32 %v1031, %v1053
        %v1080 = vadd.f32 %v1032, %v1055
        %v1081 = vadd.f32 %v1033, %v1057
        %v1082 = vadd.f32 %v1034, %v1059
        %v1083 = vadd.f32 %v1035, %v1061
        %v1084 = vadd.f32 %v1036, %v1063
        %v1085 = vadd.f32 %v1037, %v1065
        %v1086 = vadd.f32 %v1038, %v1067
        %v1087 = vadd.f32 %v1039, %v1069
        %v1088 = vadd.f32 %v1040, %v1071
        %v1089 = vadd.f32 %v1041, %v1073
        %vm1090 = vcmask 7168
        %1091 = vst.msk [vmem:[#allocation3] sm:$0xff] %vm1090, %v1074
        %1092 = vst.msk [vmem:[#allocation3 + $0x8] sm:$0xff] %vm1090, %v1075
        %1093 = vst.msk [vmem:[#allocation3 + $0x10] sm:$0xff] %vm1090, %v1076
        %1094 = vst.msk [vmem:[#allocation3 + $0x18] sm:$0xff] %vm1090, %v1077
        %1095 = vst.msk [vmem:[#allocation3 + $0x20] sm:$0xff] %vm1090, %v1078
        %1096 = vst.msk [vmem:[#allocation3 + $0x28] sm:$0xff] %vm1090, %v1079
        %1097 = vst.msk [vmem:[#allocation3 + $0x30] sm:$0xff] %vm1090, %v1080
        %1098 = vst.msk [vmem:[#allocation3 + $0x38] sm:$0xff] %vm1090, %v1081
        %1099 = vst.msk [vmem:[#allocation3 + $0x40] sm:$0xff] %vm1090, %v1082
        %1100 = vst.msk [vmem:[#allocation3 + $0x48] sm:$0xff] %vm1090, %v1083
        %1101 = vst.msk [vmem:[#allocation3 + $0x50] sm:$0xff] %vm1090, %v1084
        %1102 = vst.msk [vmem:[#allocation3 + $0x58] sm:$0xff] %vm1090, %v1085
        %1103 = vst.msk [vmem:[#allocation3 + $0x60] sm:$0xff] %vm1090, %v1086
        %1104 = vst.msk [vmem:[#allocation3 + $0x68] sm:$0xff] %vm1090, %v1087
        %1105 = vst.msk [vmem:[#allocation3 + $0x70] sm:$0xff] %vm1090, %v1088
        %1106 = vst.msk [vmem:[#allocation3 + $0x78] sm:$0xff] %vm1090, %v1089
        %v1107 = vld [vmem:[#allocation4] sm:$0xff]
        %v1108 = vld [vmem:[#allocation4 + $0x8] sm:$0xff]
        %v1109 = vld [vmem:[#allocation4 + $0x10] sm:$0xff]
        %v1110 = vld [vmem:[#allocation4 + $0x18] sm:$0xff]
        %v1111 = vld [vmem:[#allocation4 + $0x20] sm:$0xff]
        %v1112 = vld [vmem:[#allocation4 + $0x28] sm:$0xff]
        %v1113 = vld [vmem:[#allocation4 + $0x30] sm:$0xff]
        %v1114 = vld [vmem:[#allocation4 + $0x38] sm:$0xff]
        %v1115 = vld [vmem:[#allocation4 + $0x40] sm:$0xff]
        %v1116 = vld [vmem:[#allocation4 + $0x48] sm:$0xff]
        %v1117 = vld [vmem:[#allocation4 + $0x50] sm:$0xff]
        %v1118 = vld [vmem:[#allocation4 + $0x58] sm:$0xff]
        %v1119 = vld [vmem:[#allocation4 + $0x60] sm:$0xff]
        %v1120 = vld [vmem:[#allocation4 + $0x68] sm:$0xff]
        %v1121 = vld [vmem:[#allocation4 + $0x70] sm:$0xff]
        %v1122 = vld [vmem:[#allocation4 + $0x78] sm:$0xff]
        %1124 = vset.pattern.permute.xlu0 0
        %1125 = vperm.xlu0 %1124, %v851
        %v1126 = vpop.permute.xlu0 %1125
        %1129 = vset.pattern.permute.xlu0 0
        %1130 = vperm.xlu0 %1129, %v853
        %v1131 = vpop.permute.xlu0 %1130
        %1134 = vset.pattern.permute.xlu0 0
        %1135 = vperm.xlu0 %1134, %v855
        %v1136 = vpop.permute.xlu0 %1135
        %1139 = vset.pattern.permute.xlu0 0
        %1140 = vperm.xlu0 %1139, %v857
        %v1141 = vpop.permute.xlu0 %1140
        %1144 = vset.pattern.permute.xlu0 0
        %1145 = vperm.xlu0 %1144, %v859
        %v1146 = vpop.permute.xlu0 %1145
        %1149 = vset.pattern.permute.xlu0 0
        %1150 = vperm.xlu0 %1149, %v861
        %v1151 = vpop.permute.xlu0 %1150
        %1154 = vset.pattern.permute.xlu0 0
        %1155 = vperm.xlu0 %1154, %v863
        %v1156 = vpop.permute.xlu0 %1155
        %1159 = vset.pattern.permute.xlu0 0
        %1160 = vperm.xlu0 %1159, %v865
        %v1161 = vpop.permute.xlu0 %1160
        %1164 = vset.pattern.permute.xlu0 0
        %1165 = vperm.xlu0 %1164, %v867
        %v1166 = vpop.permute.xlu0 %1165
        %1169 = vset.pattern.permute.xlu0 0
        %1170 = vperm.xlu0 %1169, %v869
        %v1171 = vpop.permute.xlu0 %1170
        %1174 = vset.pattern.permute.xlu0 0
        %1175 = vperm.xlu0 %1174, %v871
        %v1176 = vpop.permute.xlu0 %1175
        %1179 = vset.pattern.permute.xlu0 0
        %1180 = vperm.xlu0 %1179, %v873
        %v1181 = vpop.permute.xlu0 %1180
        %1184 = vset.pattern.permute.xlu0 0
        %1185 = vperm.xlu0 %1184, %v875
        %v1186 = vpop.permute.xlu0 %1185
        %1189 = vset.pattern.permute.xlu0 0
        %1190 = vperm.xlu0 %1189, %v877
        %v1191 = vpop.permute.xlu0 %1190
        %1194 = vset.pattern.permute.xlu0 0
        %1195 = vperm.xlu0 %1194, %v879
        %v1196 = vpop.permute.xlu0 %1195
        %1199 = vset.pattern.permute.xlu0 0
        %1200 = vperm.xlu0 %1199, %v881
        %v1201 = vpop.permute.xlu0 %1200
        %v1203 = vmul.f32 %v1126, %v1107
        %v1204 = vmul.f32 %v1131, %v1108
        %v1205 = vmul.f32 %v1136, %v1109
        %v1206 = vmul.f32 %v1141, %v1110
        %v1207 = vmul.f32 %v1146, %v1111
        %v1208 = vmul.f32 %v1151, %v1112
        %v1209 = vmul.f32 %v1156, %v1113
        %v1210 = vmul.f32 %v1161, %v1114
        %v1211 = vmul.f32 %v1166, %v1115
        %v1212 = vmul.f32 %v1171, %v1116
        %v1213 = vmul.f32 %v1176, %v1117
        %v1214 = vmul.f32 %v1181, %v1118
        %v1215 = vmul.f32 %v1186, %v1119
        %v1216 = vmul.f32 %v1191, %v1120
        %v1217 = vmul.f32 %v1196, %v1121
        %v1218 = vmul.f32 %v1201, %v1122
        %v1219 = vpack.c.bf16 %v981, %v979
        %v1220 = vpack.c.bf16 %v985, %v983
        %v1221 = vpack.c.bf16 %v989, %v987
        %v1222 = vpack.c.bf16 %v993, %v991
        %v1223 = vpack.c.bf16 %v997, %v995
        %v1224 = vpack.c.bf16 %v1001, %v999
        %v1225 = vpack.c.bf16 %v1005, %v1003
        %v1226 = vpack.c.bf16 %v1009, %v1007
        %1227 = vrot.lane.b32.xlu0 %v584, 64
        %v1228 = vpop.permute.xlu0 %1227
        %1229 = vrot.lane.b32.xlu0 %v585, 64
        %v1230 = vpop.permute.xlu0 %1229
        %1231 = vrot.lane.b32.xlu0 %v586, 64
        %v1232 = vpop.permute.xlu0 %1231
        %1233 = vrot.lane.b32.xlu0 %v587, 64
        %v1234 = vpop.permute.xlu0 %1233
        %1235 = vrot.lane.b32.xlu0 %v588, 64
        %v1236 = vpop.permute.xlu0 %1235
        %1237 = vrot.lane.b32.xlu0 %v589, 64
        %v1238 = vpop.permute.xlu0 %1237
        %1239 = vrot.lane.b32.xlu0 %v590, 64
        %v1240 = vpop.permute.xlu0 %1239
        %1241 = vrot.lane.b32.xlu0 %v591, 64
        %v1242 = vpop.permute.xlu0 %1241
        %1251 = vmatprep.subr.bf16.mxu0 0
        %1252 = vmatpush1.bf16.msra.mxu0 %v1242
        %1253 = vmatprep.subr.bf16.mxu0 0
        %1254 = vmatpush1.bf16.msra.mxu0 %v1240
        %1255 = vmatprep.subr.bf16.mxu0 0
        %1256 = vmatpush1.bf16.msra.mxu0 %v1238
        %1257 = vmatprep.subr.bf16.mxu0 0
        %1258 = vmatpush1.bf16.msra.mxu0 %v1236
        %1259 = vmatprep.subr.bf16.mxu0 0
        %1260 = vmatpush1.bf16.msra.mxu0 %v1234
        %1261 = vmatprep.subr.bf16.mxu0 0
        %1262 = vmatpush1.bf16.msra.mxu0 %v1232
        %1263 = vmatprep.subr.bf16.mxu0 0
        %1264 = vmatpush1.bf16.msra.mxu0 %v1230
        %1265 = vmatprep.subr.bf16.mxu0 0
        %1266 = vmatpush1.bf16.msra.mxu0 %v1228
        %1267 = vmatprep.subr.bf16.mxu0 0
        %1268 = vmatpush2.bf16.msra.mxu0 0
        %1269 = vmatprep.subr.bf16.mxu0 0
        %1270 = vmatpush2.bf16.msra.mxu0 0
        %1271 = vmatprep.subr.bf16.mxu0 0
        %1272 = vmatpush2.bf16.msra.mxu0 0
        %1273 = vmatprep.subr.bf16.mxu0 0
        %1274 = vmatpush2.bf16.msra.mxu0 0
        %1275 = vmatprep.subr.bf16.mxu0 0
        %1276 = vmatpush2.bf16.msra.mxu0 0
        %1277 = vmatprep.subr.bf16.mxu0 0
        %1278 = vmatpush2.bf16.msra.mxu0 0
        %1279 = vmatprep.subr.bf16.mxu0 0
        %1280 = vmatpush2.bf16.msra.mxu0 0
        %1281 = vmatprep.subr.bf16.mxu0 0
        %1282 = vmatpush2.bf16.msra.mxu0 0
        %1283 = vmatprep.mubr.bf16.mxu0 0
        %1284 = vmatmul.mubr.bf16.gmra.mxu0 %v1219
        %v1285 = vpop.f32.mrf.mxu0
        %v1286 = vadd.f32 0.0, %v1285
        %v1287 = vpop.f32.mrf.mxu0
        %v1288 = vpop.f32.mrf.mxu0
        %v1289 = vadd.f32 0.0, %v1288
        %v1290 = vpop.f32.mrf.mxu0
        %1291 = vmatprep.mubr.bf16.mxu0 0
        %1292 = vmatmul.mubr.bf16.gmra.mxu0 %v1220
        %v1293 = vpop.f32.mrf.mxu0
        %v1294 = vadd.f32 0.0, %v1293
        %v1295 = vpop.f32.mrf.mxu0
        %v1296 = vpop.f32.mrf.mxu0
        %v1297 = vadd.f32 0.0, %v1296
        %v1298 = vpop.f32.mrf.mxu0
        %1299 = vmatprep.mubr.bf16.mxu0 0
        %1300 = vmatmul.mubr.bf16.gmra.mxu0 %v1221
        %v1301 = vpop.f32.mrf.mxu0
        %v1302 = vadd.f32 0.0, %v1301
        %v1303 = vpop.f32.mrf.mxu0
        %v1304 = vpop.f32.mrf.mxu0
        %v1305 = vadd.f32 0.0, %v1304
        %v1306 = vpop.f32.mrf.mxu0
        %1307 = vmatprep.mubr.bf16.mxu0 0
        %1308 = vmatmul.mubr.bf16.gmra.mxu0 %v1222
        %v1309 = vpop.f32.mrf.mxu0
        %v1310 = vadd.f32 0.0, %v1309
        %v1311 = vpop.f32.mrf.mxu0
        %v1312 = vpop.f32.mrf.mxu0
        %v1313 = vadd.f32 0.0, %v1312
        %v1314 = vpop.f32.mrf.mxu0
        %1315 = vmatprep.mubr.bf16.mxu0 0
        %1316 = vmatmul.mubr.bf16.gmra.mxu0 %v1223
        %v1317 = vpop.f32.mrf.mxu0
        %v1318 = vadd.f32 0.0, %v1317
        %v1319 = vpop.f32.mrf.mxu0
        %v1320 = vpop.f32.mrf.mxu0
        %v1321 = vadd.f32 0.0, %v1320
        %v1322 = vpop.f32.mrf.mxu0
        %1323 = vmatprep.mubr.bf16.mxu0 0
        %1324 = vmatmul.mubr.bf16.gmra.mxu0 %v1224
        %v1325 = vpop.f32.mrf.mxu0
        %v1326 = vadd.f32 0.0, %v1325
        %v1327 = vpop.f32.mrf.mxu0
        %v1328 = vpop.f32.mrf.mxu0
        %v1329 = vadd.f32 0.0, %v1328
        %v1330 = vpop.f32.mrf.mxu0
        %1331 = vmatprep.mubr.bf16.mxu0 0
        %1332 = vmatmul.mubr.bf16.gmra.mxu0 %v1225
        %v1333 = vpop.f32.mrf.mxu0
        %v1334 = vadd.f32 0.0, %v1333
        %v1335 = vpop.f32.mrf.mxu0
        %v1336 = vpop.f32.mrf.mxu0
        %v1337 = vadd.f32 0.0, %v1336
        %v1338 = vpop.f32.mrf.mxu0
        %1339 = vmatprep.mubr.bf16.mxu0 0
        %1340 = vmatmul.mubr.bf16.gmra.mxu0 %v1226
        %v1341 = vpop.f32.mrf.mxu0
        %v1342 = vadd.f32 0.0, %v1341
        %v1343 = vpop.f32.mrf.mxu0
        %v1344 = vpop.f32.mrf.mxu0
        %v1345 = vadd.f32 0.0, %v1344
        %v1346 = vpop.f32.mrf.mxu0
        %1347 = vdwg.mxu0
        %v1348 = vadd.f32 %v1203, %v1286
        %v1349 = vadd.f32 %v1204, %v1289
        %v1350 = vadd.f32 %v1205, %v1294
        %v1351 = vadd.f32 %v1206, %v1297
        %v1352 = vadd.f32 %v1207, %v1302
        %v1353 = vadd.f32 %v1208, %v1305
        %v1354 = vadd.f32 %v1209, %v1310
        %v1355 = vadd.f32 %v1210, %v1313
        %v1356 = vadd.f32 %v1211, %v1318
        %v1357 = vadd.f32 %v1212, %v1321
        %v1358 = vadd.f32 %v1213, %v1326
        %v1359 = vadd.f32 %v1214, %v1329
        %v1360 = vadd.f32 %v1215, %v1334
        %v1361 = vadd.f32 %v1216, %v1337
        %v1362 = vadd.f32 %v1217, %v1342
        %v1363 = vadd.f32 %v1218, %v1345
        %1364 = vst.msk [vmem:[#allocation4] sm:$0xff] %vm608, %v1348
        %1365 = vst.msk [vmem:[#allocation4 + $0x8] sm:$0xff] %vm608, %v1349
        %1366 = vst.msk [vmem:[#allocation4 + $0x10] sm:$0xff] %vm608, %v1350
        %1367 = vst.msk [vmem:[#allocation4 + $0x18] sm:$0xff] %vm608, %v1351
        %1368 = vst.msk [vmem:[#allocation4 + $0x20] sm:$0xff] %vm608, %v1352
        %1369 = vst.msk [vmem:[#allocation4 + $0x28] sm:$0xff] %vm608, %v1353
        %1370 = vst.msk [vmem:[#allocation4 + $0x30] sm:$0xff] %vm608, %v1354
        %1371 = vst.msk [vmem:[#allocation4 + $0x38] sm:$0xff] %vm608, %v1355
        %1372 = vst.msk [vmem:[#allocation4 + $0x40] sm:$0xff] %vm608, %v1356
        %1373 = vst.msk [vmem:[#allocation4 + $0x48] sm:$0xff] %vm608, %v1357
        %1374 = vst.msk [vmem:[#allocation4 + $0x50] sm:$0xff] %vm608, %v1358
        %1375 = vst.msk [vmem:[#allocation4 + $0x58] sm:$0xff] %vm608, %v1359
        %1376 = vst.msk [vmem:[#allocation4 + $0x60] sm:$0xff] %vm608, %v1360
        %1377 = vst.msk [vmem:[#allocation4 + $0x68] sm:$0xff] %vm608, %v1361
        %1378 = vst.msk [vmem:[#allocation4 + $0x70] sm:$0xff] %vm608, %v1362
        %1379 = vst.msk [vmem:[#allocation4 + $0x78] sm:$0xff] %vm608, %v1363
        %1380 = vst.msk [vmem:[#allocation2] sm:$0xff] %vm1090, %v818
        %1381 = vst.msk [vmem:[#allocation2 + $0x8] sm:$0xff] %vm1090, %v819
        %1382 = vst.msk [vmem:[#allocation2 + $0x10] sm:$0xff] %vm1090, %v820
        %1383 = vst.msk [vmem:[#allocation2 + $0x18] sm:$0xff] %vm1090, %v821
        %1384 = vst.msk [vmem:[#allocation2 + $0x20] sm:$0xff] %vm1090, %v822
        %1385 = vst.msk [vmem:[#allocation2 + $0x28] sm:$0xff] %vm1090, %v823
        %1386 = vst.msk [vmem:[#allocation2 + $0x30] sm:$0xff] %vm1090, %v824
        %1387 = vst.msk [vmem:[#allocation2 + $0x38] sm:$0xff] %vm1090, %v825
        %1388 = vst.msk [vmem:[#allocation2 + $0x40] sm:$0xff] %vm1090, %v826
        %1389 = vst.msk [vmem:[#allocation2 + $0x48] sm:$0xff] %vm1090, %v827
        %1390 = vst.msk [vmem:[#allocation2 + $0x50] sm:$0xff] %vm1090, %v828
        %1391 = vst.msk [vmem:[#allocation2 + $0x58] sm:$0xff] %vm1090, %v829
        %1392 = vst.msk [vmem:[#allocation2 + $0x60] sm:$0xff] %vm1090, %v830
        %1393 = vst.msk [vmem:[#allocation2 + $0x68] sm:$0xff] %vm1090, %v831
        %1394 = vst.msk [vmem:[#allocation2 + $0x70] sm:$0xff] %vm1090, %v832
        %1395 = vst.msk [vmem:[#allocation2 + $0x78] sm:$0xff] %vm1090, %v833
        %v1396 = vld [vmem:[%s264] sm:$0xf]
        %v1397 = vld [vmem:[%s264 + $0x4] sm:$0xf]
        %v1398 = vld [vmem:[%s264 + $0x8] sm:$0xf]
        %v1399 = vld [vmem:[%s264 + $0xc] sm:$0xf]
        %v1400 = vld [vmem:[%s264 + $0x10] sm:$0xf]
        %v1401 = vld [vmem:[%s264 + $0x14] sm:$0xf]
        %v1402 = vld [vmem:[%s264 + $0x18] sm:$0xf]
        %v1403 = vld [vmem:[%s264 + $0x1c] sm:$0xf]
        %v1404 = vld [vmem:[%s264 + $0x20] sm:$0xf]
        %v1405 = vld [vmem:[%s264 + $0x24] sm:$0xf]
        %v1406 = vld [vmem:[%s264 + $0x28] sm:$0xf]
        %v1407 = vld [vmem:[%s264 + $0x2c] sm:$0xf]
        %v1408 = vld [vmem:[%s264 + $0x30] sm:$0xf]
        %v1409 = vld [vmem:[%s264 + $0x34] sm:$0xf]
        %v1410 = vld [vmem:[%s264 + $0x38] sm:$0xf]
        %v1411 = vld [vmem:[%s264 + $0x3c] sm:$0xf]
        %v1412 = vld [vmem:[%s270] sm:$0xf]
        %v1413 = vld [vmem:[%s270 + $0x4] sm:$0xf]
        %v1414 = vld [vmem:[%s270 + $0x8] sm:$0xf]
        %v1415 = vld [vmem:[%s270 + $0xc] sm:$0xf]
        %v1416 = vld [vmem:[%s270 + $0x10] sm:$0xf]
        %v1417 = vld [vmem:[%s270 + $0x14] sm:$0xf]
        %v1418 = vld [vmem:[%s270 + $0x18] sm:$0xf]
        %v1419 = vld [vmem:[%s270 + $0x1c] sm:$0xf]
        %v1420 = vld [vmem:[%s270 + $0x20] sm:$0xf]
        %v1421 = vld [vmem:[%s270 + $0x24] sm:$0xf]
        %v1422 = vld [vmem:[%s270 + $0x28] sm:$0xf]
        %v1423 = vld [vmem:[%s270 + $0x2c] sm:$0xf]
        %v1424 = vld [vmem:[%s270 + $0x30] sm:$0xf]
        %v1425 = vld [vmem:[%s270 + $0x34] sm:$0xf]
        %v1426 = vld [vmem:[%s270 + $0x38] sm:$0xf]
        %v1427 = vld [vmem:[%s270 + $0x3c] sm:$0xf]
        %v1444 = vunpack.c.l.b16 %v1396
        %v1445 = vunpack.c.l.b16 %v1397
        %v1446 = vunpack.c.l.b16 %v1398
        %v1447 = vunpack.c.l.b16 %v1399
        %v1448 = vunpack.c.l.b16 %v1400
        %v1449 = vunpack.c.l.b16 %v1401
        %v1450 = vunpack.c.l.b16 %v1402
        %v1451 = vunpack.c.l.b16 %v1403
        %v1452 = vunpack.c.l.b16 %v1404
        %v1453 = vunpack.c.l.b16 %v1405
        %v1454 = vunpack.c.l.b16 %v1406
        %v1455 = vunpack.c.l.b16 %v1407
        %v1456 = vunpack.c.l.b16 %v1408
        %v1457 = vunpack.c.l.b16 %v1409
        %v1458 = vunpack.c.l.b16 %v1410
        %v1459 = vunpack.c.l.b16 %v1411
        %v1460 = vpack.c.b16 %v1445, %v1444
        %v1461 = vpack.c.b16 %v1447, %v1446
        %v1462 = vpack.c.b16 %v1449, %v1448
        %v1463 = vpack.c.b16 %v1451, %v1450
        %v1464 = vpack.c.b16 %v1453, %v1452
        %v1465 = vpack.c.b16 %v1455, %v1454
        %v1466 = vpack.c.b16 %v1457, %v1456
        %v1467 = vpack.c.b16 %v1459, %v1458
        %1468 = vrot.lane.b32.xlu0 %v1460, 112
        %v1469 = vpop.permute.xlu0 %1468
        %1470 = vrot.lane.b32.xlu0 %v1461, 112
        %v1471 = vpop.permute.xlu0 %1470
        %1472 = vrot.lane.b32.xlu0 %v1462, 112
        %v1473 = vpop.permute.xlu0 %1472
        %1474 = vrot.lane.b32.xlu0 %v1463, 112
        %v1475 = vpop.permute.xlu0 %1474
        %1476 = vrot.lane.b32.xlu0 %v1464, 112
        %v1477 = vpop.permute.xlu0 %1476
        %1478 = vrot.lane.b32.xlu0 %v1465, 112
        %v1479 = vpop.permute.xlu0 %1478
        %1480 = vrot.lane.b32.xlu0 %v1466, 112
        %v1481 = vpop.permute.xlu0 %1480
        %1482 = vrot.lane.b32.xlu0 %v1467, 112
        %v1483 = vpop.permute.xlu0 %1482
        %v1500 = vunpack.c.l.b16 %v1412
        %v1501 = vunpack.c.l.b16 %v1413
        %v1502 = vunpack.c.l.b16 %v1414
        %v1503 = vunpack.c.l.b16 %v1415
        %v1504 = vunpack.c.l.b16 %v1416
        %v1505 = vunpack.c.l.b16 %v1417
        %v1506 = vunpack.c.l.b16 %v1418
        %v1507 = vunpack.c.l.b16 %v1419
        %v1508 = vunpack.c.l.b16 %v1420
        %v1509 = vunpack.c.l.b16 %v1421
        %v1510 = vunpack.c.l.b16 %v1422
        %v1511 = vunpack.c.l.b16 %v1423
        %v1512 = vunpack.c.l.b16 %v1424
        %v1513 = vunpack.c.l.b16 %v1425
        %v1514 = vunpack.c.l.b16 %v1426
        %v1515 = vunpack.c.l.b16 %v1427
        %v1516 = vpack.c.b16 %v1501, %v1500
        %v1517 = vpack.c.b16 %v1503, %v1502
        %v1518 = vpack.c.b16 %v1505, %v1504
        %v1519 = vpack.c.b16 %v1507, %v1506
        %v1520 = vpack.c.b16 %v1509, %v1508
        %v1521 = vpack.c.b16 %v1511, %v1510
        %v1522 = vpack.c.b16 %v1513, %v1512
        %v1523 = vpack.c.b16 %v1515, %v1514
        %1524 = vrot.lane.b32.xlu0 %v1516, 80
        %v1525 = vpop.permute.xlu0 %1524
        %1526 = vrot.lane.b32.xlu0 %v1517, 80
        %v1527 = vpop.permute.xlu0 %1526
        %1528 = vrot.lane.b32.xlu0 %v1518, 80
        %v1529 = vpop.permute.xlu0 %1528
        %1530 = vrot.lane.b32.xlu0 %v1519, 80
        %v1531 = vpop.permute.xlu0 %1530
        %1532 = vrot.lane.b32.xlu0 %v1520, 80
        %v1533 = vpop.permute.xlu0 %1532
        %1534 = vrot.lane.b32.xlu0 %v1521, 80
        %v1535 = vpop.permute.xlu0 %1534
        %1536 = vrot.lane.b32.xlu0 %v1522, 80
        %v1537 = vpop.permute.xlu0 %1536
        %1538 = vrot.lane.b32.xlu0 %v1523, 80
        %v1539 = vpop.permute.xlu0 %1538
        %v1541 = vsel %vm608, %v1469, 0
        %v1544 = vsel %vm608, %v1471, 0
        %v1547 = vsel %vm608, %v1473, 0
        %v1550 = vsel %vm608, %v1475, 0
        %v1553 = vsel %vm608, %v1477, 0
        %v1556 = vsel %vm608, %v1479, 0
        %v1559 = vsel %vm608, %v1481, 0
        %v1562 = vsel %vm608, %v1483, 0
        %v1565 = vsel %vm608, %v1525, 0
        %v1568 = vsel %vm608, %v1527, 0
        %v1571 = vsel %vm608, %v1529, 0
        %v1574 = vsel %vm608, %v1531, 0
        %v1577 = vsel %vm608, %v1533, 0
        %v1580 = vsel %vm608, %v1535, 0
        %v1583 = vsel %vm608, %v1537, 0
        %v1586 = vsel %vm608, %v1539, 0
        %1588 = vmatprep.subr.bf16.mxu0 0
        %1589 = vmatpush1.bf16.xpose.msra.mxu0 %v1586
        %1590 = vmatprep.subr.bf16.mxu0 0
        %1591 = vmatpush1.bf16.xpose.msra.mxu0 %v1583
        %1592 = vmatprep.subr.bf16.mxu0 0
        %1593 = vmatpush1.bf16.xpose.msra.mxu0 %v1580
        %1594 = vmatprep.subr.bf16.mxu0 0
        %1595 = vmatpush1.bf16.xpose.msra.mxu0 %v1577
        %1596 = vmatprep.subr.bf16.mxu0 0
        %1597 = vmatpush1.bf16.xpose.msra.mxu0 %v1574
        %1598 = vmatprep.subr.bf16.mxu0 0
        %1599 = vmatpush1.bf16.xpose.msra.mxu0 %v1571
        %1600 = vmatprep.subr.bf16.mxu0 0
        %1601 = vmatpush1.bf16.xpose.msra.mxu0 %v1568
        %1602 = vmatprep.subr.bf16.mxu0 0
        %1603 = vmatpush1.bf16.xpose.msra.mxu0 %v1565
        %1604 = vmatprep.subr.bf16.mxu0 0
        %1605 = vmatpush2.bf16.xpose.msra.mxu0 0
        %1606 = vmatprep.subr.bf16.mxu0 0
        %1607 = vmatpush2.bf16.xpose.msra.mxu0 0
        %1608 = vmatprep.subr.bf16.mxu0 0
        %1609 = vmatpush2.bf16.xpose.msra.mxu0 0
        %1610 = vmatprep.subr.bf16.mxu0 0
        %1611 = vmatpush2.bf16.xpose.msra.mxu0 0
        %1612 = vmatprep.subr.bf16.mxu0 0
        %1613 = vmatpush2.bf16.xpose.msra.mxu0 0
        %1614 = vmatprep.subr.bf16.mxu0 0
        %1615 = vmatpush2.bf16.xpose.msra.mxu0 0
        %1616 = vmatprep.subr.bf16.mxu0 0
        %1617 = vmatpush2.bf16.xpose.msra.mxu0 0
        %1618 = vmatprep.subr.bf16.mxu0 0
        %1619 = vmatpush2.bf16.xpose.msra.mxu0 0
        %1620 = vmatprep.mubr.bf16.mxu0 0
        %1621 = vmatmul.mubr.bf16.gmra.mxu0 %v1541
        %v1622 = vpop.f32.mrf.mxu0
        %v1623 = vadd.f32 0.0, %v1622
        %v1624 = vpop.f32.mrf.mxu0
        %v1625 = vpop.f32.mrf.mxu0
        %v1626 = vadd.f32 0.0, %v1625
        %v1627 = vpop.f32.mrf.mxu0
        %1628 = vmatprep.mubr.bf16.mxu0 0
        %1629 = vmatmul.mubr.bf16.gmra.mxu0 %v1544
        %v1630 = vpop.f32.mrf.mxu0
        %v1631 = vadd.f32 0.0, %v1630
        %v1632 = vpop.f32.mrf.mxu0
        %v1633 = vpop.f32.mrf.mxu0
        %v1634 = vadd.f32 0.0, %v1633
        %v1635 = vpop.f32.mrf.mxu0
        %1636 = vmatprep.mubr.bf16.mxu0 0
        %1637 = vmatmul.mubr.bf16.gmra.mxu0 %v1547
        %v1638 = vpop.f32.mrf.mxu0
        %v1639 = vadd.f32 0.0, %v1638
        %v1640 = vpop.f32.mrf.mxu0
        %v1641 = vpop.f32.mrf.mxu0
        %v1642 = vadd.f32 0.0, %v1641
        %v1643 = vpop.f32.mrf.mxu0
        %1644 = vmatprep.mubr.bf16.mxu0 0
        %1645 = vmatmul.mubr.bf16.gmra.mxu0 %v1550
        %v1646 = vpop.f32.mrf.mxu0
        %v1647 = vadd.f32 0.0, %v1646
        %v1648 = vpop.f32.mrf.mxu0
        %v1649 = vpop.f32.mrf.mxu0
        %v1650 = vadd.f32 0.0, %v1649
        %v1651 = vpop.f32.mrf.mxu0
        %1652 = vmatprep.mubr.bf16.mxu0 0
        %1653 = vmatmul.mubr.bf16.gmra.mxu0 %v1553
        %v1654 = vpop.f32.mrf.mxu0
        %v1655 = vadd.f32 0.0, %v1654
        %v1656 = vpop.f32.mrf.mxu0
        %v1657 = vpop.f32.mrf.mxu0
        %v1658 = vadd.f32 0.0, %v1657
        %v1659 = vpop.f32.mrf.mxu0
        %1660 = vmatprep.mubr.bf16.mxu0 0
        %1661 = vmatmul.mubr.bf16.gmra.mxu0 %v1556
        %v1662 = vpop.f32.mrf.mxu0
        %v1663 = vadd.f32 0.0, %v1662
        %v1664 = vpop.f32.mrf.mxu0
        %v1665 = vpop.f32.mrf.mxu0
        %v1666 = vadd.f32 0.0, %v1665
        %v1667 = vpop.f32.mrf.mxu0
        %1668 = vmatprep.mubr.bf16.mxu0 0
        %1669 = vmatmul.mubr.bf16.gmra.mxu0 %v1559
        %v1670 = vpop.f32.mrf.mxu0
        %v1671 = vadd.f32 0.0, %v1670
        %v1672 = vpop.f32.mrf.mxu0
        %v1673 = vpop.f32.mrf.mxu0
        %v1674 = vadd.f32 0.0, %v1673
        %v1675 = vpop.f32.mrf.mxu0
        %1676 = vmatprep.mubr.bf16.mxu0 0
        %1677 = vmatmul.mubr.bf16.gmra.mxu0 %v1562
        %v1678 = vpop.f32.mrf.mxu0
        %v1679 = vadd.f32 0.0, %v1678
        %v1680 = vpop.f32.mrf.mxu0
        %v1681 = vpop.f32.mrf.mxu0
        %v1682 = vadd.f32 0.0, %v1681
        %v1683 = vpop.f32.mrf.mxu0
        %1684 = vdwg.mxu0
        %v1685 = vsel %vm464, %v1623, -2.3819763e+38
        %v1686 = vsel %vm465, %v1626, -2.3819763e+38
        %v1687 = vsel %vm466, %v1631, -2.3819763e+38
        %v1688 = vsel %vm467, %v1634, -2.3819763e+38
        %v1689 = vsel %vm468, %v1639, -2.3819763e+38
        %v1690 = vsel %vm469, %v1642, -2.3819763e+38
        %v1691 = vsel %vm470, %v1647, -2.3819763e+38
        %v1692 = vsel %vm471, %v1650, -2.3819763e+38
        %v1693 = vsel %vm472, %v1655, -2.3819763e+38
        %v1694 = vsel %vm473, %v1658, -2.3819763e+38
        %v1695 = vsel %vm474, %v1663, -2.3819763e+38
        %v1696 = vsel %vm475, %v1666, -2.3819763e+38
        %v1697 = vsel %vm476, %v1671, -2.3819763e+38
        %v1698 = vsel %vm477, %v1674, -2.3819763e+38
        %v1699 = vsel %vm478, %v1679, -2.3819763e+38
        %v1700 = vsel %vm479, %v1682, -2.3819763e+38
        %s1701 = scalar_lea.vmem [#allocation2], 128
        %v1702 = vld [vmem:[%s1701] sm:$0xff]
        %v1703 = vld [vmem:[%s1701 + $0x8] sm:$0xff]
        %v1704 = vld [vmem:[%s1701 + $0x10] sm:$0xff]
        %v1705 = vld [vmem:[%s1701 + $0x18] sm:$0xff]
        %v1706 = vld [vmem:[%s1701 + $0x20] sm:$0xff]
        %v1707 = vld [vmem:[%s1701 + $0x28] sm:$0xff]
        %v1708 = vld [vmem:[%s1701 + $0x30] sm:$0xff]
        %v1709 = vld [vmem:[%s1701 + $0x38] sm:$0xff]
        %v1710 = vld [vmem:[%s1701 + $0x40] sm:$0xff]
        %v1711 = vld [vmem:[%s1701 + $0x48] sm:$0xff]
        %v1712 = vld [vmem:[%s1701 + $0x50] sm:$0xff]
        %v1713 = vld [vmem:[%s1701 + $0x58] sm:$0xff]
        %v1714 = vld [vmem:[%s1701 + $0x60] sm:$0xff]
        %v1715 = vld [vmem:[%s1701 + $0x68] sm:$0xff]
        %v1716 = vld [vmem:[%s1701 + $0x70] sm:$0xff]
        %v1717 = vld [vmem:[%s1701 + $0x78] sm:$0xff]
        %1718 = vmax.xlane.f32.xlu0 %v1685
        %v1719 = vpop.xlane.xlu0 %1718
        %1720 = vmax.xlane.f32.xlu0 %v1686
        %v1721 = vpop.xlane.xlu0 %1720
        %1722 = vmax.xlane.f32.xlu0 %v1687
        %v1723 = vpop.xlane.xlu0 %1722
        %1724 = vmax.xlane.f32.xlu0 %v1688
        %v1725 = vpop.xlane.xlu0 %1724
        %1726 = vmax.xlane.f32.xlu0 %v1689
        %v1727 = vpop.xlane.xlu0 %1726
        %1728 = vmax.xlane.f32.xlu0 %v1690
        %v1729 = vpop.xlane.xlu0 %1728
        %1730 = vmax.xlane.f32.xlu0 %v1691
        %v1731 = vpop.xlane.xlu0 %1730
        %1732 = vmax.xlane.f32.xlu0 %v1692
        %v1733 = vpop.xlane.xlu0 %1732
        %1734 = vmax.xlane.f32.xlu0 %v1693
        %v1735 = vpop.xlane.xlu0 %1734
        %1736 = vmax.xlane.f32.xlu0 %v1694
        %v1737 = vpop.xlane.xlu0 %1736
        %1738 = vmax.xlane.f32.xlu0 %v1695
        %v1739 = vpop.xlane.xlu0 %1738
        %1740 = vmax.xlane.f32.xlu0 %v1696
        %v1741 = vpop.xlane.xlu0 %1740
        %1742 = vmax.xlane.f32.xlu0 %v1697
        %v1743 = vpop.xlane.xlu0 %1742
        %1744 = vmax.xlane.f32.xlu0 %v1698
        %v1745 = vpop.xlane.xlu0 %1744
        %1746 = vmax.xlane.f32.xlu0 %v1699
        %v1747 = vpop.xlane.xlu0 %1746
        %1748 = vmax.xlane.f32.xlu0 %v1700
        %v1749 = vpop.xlane.xlu0 %1748
        %v1750 = vmax.f32 %v1702, %v1719
        %v1751 = vmax.f32 %v1703, %v1721
        %v1752 = vmax.f32 %v1704, %v1723
        %v1753 = vmax.f32 %v1705, %v1725
        %v1754 = vmax.f32 %v1706, %v1727
        %v1755 = vmax.f32 %v1707, %v1729
        %v1756 = vmax.f32 %v1708, %v1731
        %v1757 = vmax.f32 %v1709, %v1733
        %v1758 = vmax.f32 %v1710, %v1735
        %v1759 = vmax.f32 %v1711, %v1737
        %v1760 = vmax.f32 %v1712, %v1739
        %v1761 = vmax.f32 %v1713, %v1741
        %v1762 = vmax.f32 %v1714, %v1743
        %v1763 = vmax.f32 %v1715, %v1745
        %v1764 = vmax.f32 %v1716, %v1747
        %v1765 = vmax.f32 %v1717, %v1749
        %v1766 = vsub.f32 %v1702, %v1750
        %v1767 = vsub.f32 %v1703, %v1751
        %v1768 = vsub.f32 %v1704, %v1752
        %v1769 = vsub.f32 %v1705, %v1753
        %v1770 = vsub.f32 %v1706, %v1754
        %v1771 = vsub.f32 %v1707, %v1755
        %v1772 = vsub.f32 %v1708, %v1756
        %v1773 = vsub.f32 %v1709, %v1757
        %v1774 = vsub.f32 %v1710, %v1758
        %v1775 = vsub.f32 %v1711, %v1759
        %v1776 = vsub.f32 %v1712, %v1760
        %v1777 = vsub.f32 %v1713, %v1761
        %v1778 = vsub.f32 %v1714, %v1762
        %v1779 = vsub.f32 %v1715, %v1763
        %v1780 = vsub.f32 %v1716, %v1764
        %v1781 = vsub.f32 %v1717, %v1765
        %v1782 = vmul.f32 %v1766, 1.442695
        %v1783 = vpow.pop %v1782
        %v1784 = vmul.f32 %v1767, 1.442695
        %v1785 = vpow.pop %v1784
        %v1786 = vmul.f32 %v1768, 1.442695
        %v1787 = vpow.pop %v1786
        %v1788 = vmul.f32 %v1769, 1.442695
        %v1789 = vpow.pop %v1788
        %v1790 = vmul.f32 %v1770, 1.442695
        %v1791 = vpow.pop %v1790
        %v1792 = vmul.f32 %v1771, 1.442695
        %v1793 = vpow.pop %v1792
        %v1794 = vmul.f32 %v1772, 1.442695
        %v1795 = vpow.pop %v1794
        %v1796 = vmul.f32 %v1773, 1.442695
        %v1797 = vpow.pop %v1796
        %v1798 = vmul.f32 %v1774, 1.442695
        %v1799 = vpow.pop %v1798
        %v1800 = vmul.f32 %v1775, 1.442695
        %v1801 = vpow.pop %v1800
        %v1802 = vmul.f32 %v1776, 1.442695
        %v1803 = vpow.pop %v1802
        %v1804 = vmul.f32 %v1777, 1.442695
        %v1805 = vpow.pop %v1804
        %v1806 = vmul.f32 %v1778, 1.442695
        %v1807 = vpow.pop %v1806
        %v1808 = vmul.f32 %v1779, 1.442695
        %v1809 = vpow.pop %v1808
        %v1810 = vmul.f32 %v1780, 1.442695
        %v1811 = vpow.pop %v1810
        %v1812 = vmul.f32 %v1781, 1.442695
        %v1813 = vpow.pop %v1812
        %1815 = vset.pattern.permute.xlu0 0
        %1816 = vperm.xlu0 %1815, %v1750
        %v1817 = vpop.permute.xlu0 %1816
        %1820 = vset.pattern.permute.xlu0 0
        %1821 = vperm.xlu0 %1820, %v1751
        %v1822 = vpop.permute.xlu0 %1821
        %1825 = vset.pattern.permute.xlu0 0
        %1826 = vperm.xlu0 %1825, %v1752
        %v1827 = vpop.permute.xlu0 %1826
        %1830 = vset.pattern.permute.xlu0 0
        %1831 = vperm.xlu0 %1830, %v1753
        %v1832 = vpop.permute.xlu0 %1831
        %1835 = vset.pattern.permute.xlu0 0
        %1836 = vperm.xlu0 %1835, %v1754
        %v1837 = vpop.permute.xlu0 %1836
        %1840 = vset.pattern.permute.xlu0 0
        %1841 = vperm.xlu0 %1840, %v1755
        %v1842 = vpop.permute.xlu0 %1841
        %1845 = vset.pattern.permute.xlu0 0
        %1846 = vperm.xlu0 %1845, %v1756
        %v1847 = vpop.permute.xlu0 %1846
        %1850 = vset.pattern.permute.xlu0 0
        %1851 = vperm.xlu0 %1850, %v1757
        %v1852 = vpop.permute.xlu0 %1851
        %1855 = vset.pattern.permute.xlu0 0
        %1856 = vperm.xlu0 %1855, %v1758
        %v1857 = vpop.permute.xlu0 %1856
        %1860 = vset.pattern.permute.xlu0 0
        %1861 = vperm.xlu0 %1860, %v1759
        %v1862 = vpop.permute.xlu0 %1861
        %1865 = vset.pattern.permute.xlu0 0
        %1866 = vperm.xlu0 %1865, %v1760
        %v1867 = vpop.permute.xlu0 %1866
        %1870 = vset.pattern.permute.xlu0 0
        %1871 = vperm.xlu0 %1870, %v1761
        %v1872 = vpop.permute.xlu0 %1871
        %1875 = vset.pattern.permute.xlu0 0
        %1876 = vperm.xlu0 %1875, %v1762
        %v1877 = vpop.permute.xlu0 %1876
        %1880 = vset.pattern.permute.xlu0 0
        %1881 = vperm.xlu0 %1880, %v1763
        %v1882 = vpop.permute.xlu0 %1881
        %1885 = vset.pattern.permute.xlu0 0
        %1886 = vperm.xlu0 %1885, %v1764
        %v1887 = vpop.permute.xlu0 %1886
        %1890 = vset.pattern.permute.xlu0 0
        %1891 = vperm.xlu0 %1890, %v1765
        %v1892 = vpop.permute.xlu0 %1891
        %v1894 = vsub.f32 %v1685, %v1817
        %v1895 = vsub.f32 %v1686, %v1822
        %v1896 = vsub.f32 %v1687, %v1827
        %v1897 = vsub.f32 %v1688, %v1832
        %v1898 = vsub.f32 %v1689, %v1837
        %v1899 = vsub.f32 %v1690, %v1842
        %v1900 = vsub.f32 %v1691, %v1847
        %v1901 = vsub.f32 %v1692, %v1852
        %v1902 = vsub.f32 %v1693, %v1857
        %v1903 = vsub.f32 %v1694, %v1862
        %v1904 = vsub.f32 %v1695, %v1867
        %v1905 = vsub.f32 %v1696, %v1872
        %v1906 = vsub.f32 %v1697, %v1877
        %v1907 = vsub.f32 %v1698, %v1882
        %v1908 = vsub.f32 %v1699, %v1887
        %v1909 = vsub.f32 %v1700, %v1892
        %v1910 = vmul.f32 %v1894, 1.442695
        %v1911 = vpow.pop %v1910
        %v1912 = vmul.f32 %v1895, 1.442695
        %v1913 = vpow.pop %v1912
        %v1914 = vmul.f32 %v1896, 1.442695
        %v1915 = vpow.pop %v1914
        %v1916 = vmul.f32 %v1897, 1.442695
        %v1917 = vpow.pop %v1916
        %v1918 = vmul.f32 %v1898, 1.442695
        %v1919 = vpow.pop %v1918
        %v1920 = vmul.f32 %v1899, 1.442695
        %v1921 = vpow.pop %v1920
        %v1922 = vmul.f32 %v1900, 1.442695
        %v1923 = vpow.pop %v1922
        %v1924 = vmul.f32 %v1901, 1.442695
        %v1925 = vpow.pop %v1924
        %v1926 = vmul.f32 %v1902, 1.442695
        %v1927 = vpow.pop %v1926
        %v1928 = vmul.f32 %v1903, 1.442695
        %v1929 = vpow.pop %v1928
        %v1930 = vmul.f32 %v1904, 1.442695
        %v1931 = vpow.pop %v1930
        %v1932 = vmul.f32 %v1905, 1.442695
        %v1933 = vpow.pop %v1932
        %v1934 = vmul.f32 %v1906, 1.442695
        %v1935 = vpow.pop %v1934
        %v1936 = vmul.f32 %v1907, 1.442695
        %v1937 = vpow.pop %v1936
        %v1938 = vmul.f32 %v1908, 1.442695
        %v1939 = vpow.pop %v1938
        %v1940 = vmul.f32 %v1909, 1.442695
        %v1941 = vpow.pop %v1940
        %s1942 = scalar_lea.vmem [#allocation3], 128
        %v1943 = vld [vmem:[%s1942] sm:$0xff]
        %v1944 = vld [vmem:[%s1942 + $0x8] sm:$0xff]
        %v1945 = vld [vmem:[%s1942 + $0x10] sm:$0xff]
        %v1946 = vld [vmem:[%s1942 + $0x18] sm:$0xff]
        %v1947 = vld [vmem:[%s1942 + $0x20] sm:$0xff]
        %v1948 = vld [vmem:[%s1942 + $0x28] sm:$0xff]
        %v1949 = vld [vmem:[%s1942 + $0x30] sm:$0xff]
        %v1950 = vld [vmem:[%s1942 + $0x38] sm:$0xff]
        %v1951 = vld [vmem:[%s1942 + $0x40] sm:$0xff]
        %v1952 = vld [vmem:[%s1942 + $0x48] sm:$0xff]
        %v1953 = vld [vmem:[%s1942 + $0x50] sm:$0xff]
        %v1954 = vld [vmem:[%s1942 + $0x58] sm:$0xff]
        %v1955 = vld [vmem:[%s1942 + $0x60] sm:$0xff]
        %v1956 = vld [vmem:[%s1942 + $0x68] sm:$0xff]
        %v1957 = vld [vmem:[%s1942 + $0x70] sm:$0xff]
        %v1958 = vld [vmem:[%s1942 + $0x78] sm:$0xff]
        %v1959 = vmul.f32 %v1783, %v1943
        %v1960 = vmul.f32 %v1785, %v1944
        %v1961 = vmul.f32 %v1787, %v1945
        %v1962 = vmul.f32 %v1789, %v1946
        %v1963 = vmul.f32 %v1791, %v1947
        %v1964 = vmul.f32 %v1793, %v1948
        %v1965 = vmul.f32 %v1795, %v1949
        %v1966 = vmul.f32 %v1797, %v1950
        %v1967 = vmul.f32 %v1799, %v1951
        %v1968 = vmul.f32 %v1801, %v1952
        %v1969 = vmul.f32 %v1803, %v1953
        %v1970 = vmul.f32 %v1805, %v1954
        %v1971 = vmul.f32 %v1807, %v1955
        %v1972 = vmul.f32 %v1809, %v1956
        %v1973 = vmul.f32 %v1811, %v1957
        %v1974 = vmul.f32 %v1813, %v1958
        %1975 = vadd.xlane.f32.xlu0 %v1911
        %v1976 = vpop.xlane.xlu0 %1975
        %1977 = vadd.xlane.f32.xlu0 %v1913
        %v1978 = vpop.xlane.xlu0 %1977
        %1979 = vadd.xlane.f32.xlu0 %v1915
        %v1980 = vpop.xlane.xlu0 %1979
        %1981 = vadd.xlane.f32.xlu0 %v1917
        %v1982 = vpop.xlane.xlu0 %1981
        %1983 = vadd.xlane.f32.xlu0 %v1919
        %v1984 = vpop.xlane.xlu0 %1983
        %1985 = vadd.xlane.f32.xlu0 %v1921
        %v1986 = vpop.xlane.xlu0 %1985
        %1987 = vadd.xlane.f32.xlu0 %v1923
        %v1988 = vpop.xlane.xlu0 %1987
        %1989 = vadd.xlane.f32.xlu0 %v1925
        %v1990 = vpop.xlane.xlu0 %1989
        %1991 = vadd.xlane.f32.xlu0 %v1927
        %v1992 = vpop.xlane.xlu0 %1991
        %1993 = vadd.xlane.f32.xlu0 %v1929
        %v1994 = vpop.xlane.xlu0 %1993
        %1995 = vadd.xlane.f32.xlu0 %v1931
        %v1996 = vpop.xlane.xlu0 %1995
        %1997 = vadd.xlane.f32.xlu0 %v1933
        %v1998 = vpop.xlane.xlu0 %1997
        %1999 = vadd.xlane.f32.xlu0 %v1935
        %v2000 = vpop.xlane.xlu0 %1999
        %2001 = vadd.xlane.f32.xlu0 %v1937
        %v2002 = vpop.xlane.xlu0 %2001
        %2003 = vadd.xlane.f32.xlu0 %v1939
        %v2004 = vpop.xlane.xlu0 %2003
        %2005 = vadd.xlane.f32.xlu0 %v1941
        %v2006 = vpop.xlane.xlu0 %2005
        %v2007 = vadd.f32 %v1959, %v1976
        %v2008 = vadd.f32 %v1960, %v1978
        %v2009 = vadd.f32 %v1961, %v1980
        %v2010 = vadd.f32 %v1962, %v1982
        %v2011 = vadd.f32 %v1963, %v1984
        %v2012 = vadd.f32 %v1964, %v1986
        %v2013 = vadd.f32 %v1965, %v1988
        %v2014 = vadd.f32 %v1966, %v1990
        %v2015 = vadd.f32 %v1967, %v1992
        %v2016 = vadd.f32 %v1968, %v1994
        %v2017 = vadd.f32 %v1969, %v1996
        %v2018 = vadd.f32 %v1970, %v1998
        %v2019 = vadd.f32 %v1971, %v2000
        %v2020 = vadd.f32 %v1972, %v2002
        %v2021 = vadd.f32 %v1973, %v2004
        %v2022 = vadd.f32 %v1974, %v2006
        %2023 = vst.msk [vmem:[%s1942] sm:$0xff] %vm1090, %v2007
        %2024 = vst.msk [vmem:[%s1942 + $0x8] sm:$0xff] %vm1090, %v2008
        %2025 = vst.msk [vmem:[%s1942 + $0x10] sm:$0xff] %vm1090, %v2009
        %2026 = vst.msk [vmem:[%s1942 + $0x18] sm:$0xff] %vm1090, %v2010
        %2027 = vst.msk [vmem:[%s1942 + $0x20] sm:$0xff] %vm1090, %v2011
        %2028 = vst.msk [vmem:[%s1942 + $0x28] sm:$0xff] %vm1090, %v2012
        %2029 = vst.msk [vmem:[%s1942 + $0x30] sm:$0xff] %vm1090, %v2013
        %2030 = vst.msk [vmem:[%s1942 + $0x38] sm:$0xff] %vm1090, %v2014
        %2031 = vst.msk [vmem:[%s1942 + $0x40] sm:$0xff] %vm1090, %v2015
        %2032 = vst.msk [vmem:[%s1942 + $0x48] sm:$0xff] %vm1090, %v2016
        %2033 = vst.msk [vmem:[%s1942 + $0x50] sm:$0xff] %vm1090, %v2017
        %2034 = vst.msk [vmem:[%s1942 + $0x58] sm:$0xff] %vm1090, %v2018
        %2035 = vst.msk [vmem:[%s1942 + $0x60] sm:$0xff] %vm1090, %v2019
        %2036 = vst.msk [vmem:[%s1942 + $0x68] sm:$0xff] %vm1090, %v2020
        %2037 = vst.msk [vmem:[%s1942 + $0x70] sm:$0xff] %vm1090, %v2021
        %2038 = vst.msk [vmem:[%s1942 + $0x78] sm:$0xff] %vm1090, %v2022
        %s2039 = scalar_lea.vmem [#allocation4], 128
        %v2040 = vld [vmem:[%s2039] sm:$0xff]
        %v2041 = vld [vmem:[%s2039 + $0x8] sm:$0xff]
        %v2042 = vld [vmem:[%s2039 + $0x10] sm:$0xff]
        %v2043 = vld [vmem:[%s2039 + $0x18] sm:$0xff]
        %v2044 = vld [vmem:[%s2039 + $0x20] sm:$0xff]
        %v2045 = vld [vmem:[%s2039 + $0x28] sm:$0xff]
        %v2046 = vld [vmem:[%s2039 + $0x30] sm:$0xff]
        %v2047 = vld [vmem:[%s2039 + $0x38] sm:$0xff]
        %v2048 = vld [vmem:[%s2039 + $0x40] sm:$0xff]
        %v2049 = vld [vmem:[%s2039 + $0x48] sm:$0xff]
        %v2050 = vld [vmem:[%s2039 + $0x50] sm:$0xff]
        %v2051 = vld [vmem:[%s2039 + $0x58] sm:$0xff]
        %v2052 = vld [vmem:[%s2039 + $0x60] sm:$0xff]
        %v2053 = vld [vmem:[%s2039 + $0x68] sm:$0xff]
        %v2054 = vld [vmem:[%s2039 + $0x70] sm:$0xff]
        %v2055 = vld [vmem:[%s2039 + $0x78] sm:$0xff]
        %2057 = vset.pattern.permute.xlu0 0
        %2058 = vperm.xlu0 %2057, %v1783
        %v2059 = vpop.permute.xlu0 %2058
        %2062 = vset.pattern.permute.xlu0 0
        %2063 = vperm.xlu0 %2062, %v1785
        %v2064 = vpop.permute.xlu0 %2063
        %2067 = vset.pattern.permute.xlu0 0
        %2068 = vperm.xlu0 %2067, %v1787
        %v2069 = vpop.permute.xlu0 %2068
        %2072 = vset.pattern.permute.xlu0 0
        %2073 = vperm.xlu0 %2072, %v1789
        %v2074 = vpop.permute.xlu0 %2073
        %2077 = vset.pattern.permute.xlu0 0
        %2078 = vperm.xlu0 %2077, %v1791
        %v2079 = vpop.permute.xlu0 %2078
        %2082 = vset.pattern.permute.xlu0 0
        %2083 = vperm.xlu0 %2082, %v1793
        %v2084 = vpop.permute.xlu0 %2083
        %2087 = vset.pattern.permute.xlu0 0
        %2088 = vperm.xlu0 %2087, %v1795
        %v2089 = vpop.permute.xlu0 %2088
        %2092 = vset.pattern.permute.xlu0 0
        %2093 = vperm.xlu0 %2092, %v1797
        %v2094 = vpop.permute.xlu0 %2093
        %2097 = vset.pattern.permute.xlu0 0
        %2098 = vperm.xlu0 %2097, %v1799
        %v2099 = vpop.permute.xlu0 %2098
        %2102 = vset.pattern.permute.xlu0 0
        %2103 = vperm.xlu0 %2102, %v1801
        %v2104 = vpop.permute.xlu0 %2103
        %2107 = vset.pattern.permute.xlu0 0
        %2108 = vperm.xlu0 %2107, %v1803
        %v2109 = vpop.permute.xlu0 %2108
        %2112 = vset.pattern.permute.xlu0 0
        %2113 = vperm.xlu0 %2112, %v1805
        %v2114 = vpop.permute.xlu0 %2113
        %2117 = vset.pattern.permute.xlu0 0
        %2118 = vperm.xlu0 %2117, %v1807
        %v2119 = vpop.permute.xlu0 %2118
        %2122 = vset.pattern.permute.xlu0 0
        %2123 = vperm.xlu0 %2122, %v1809
        %v2124 = vpop.permute.xlu0 %2123
        %2127 = vset.pattern.permute.xlu0 0
        %2128 = vperm.xlu0 %2127, %v1811
        %v2129 = vpop.permute.xlu0 %2128
        %2132 = vset.pattern.permute.xlu0 0
        %2133 = vperm.xlu0 %2132, %v1813
        %v2134 = vpop.permute.xlu0 %2133
        %v2136 = vmul.f32 %v2059, %v2040
        %v2137 = vmul.f32 %v2064, %v2041
        %v2138 = vmul.f32 %v2069, %v2042
        %v2139 = vmul.f32 %v2074, %v2043
        %v2140 = vmul.f32 %v2079, %v2044
        %v2141 = vmul.f32 %v2084, %v2045
        %v2142 = vmul.f32 %v2089, %v2046
        %v2143 = vmul.f32 %v2094, %v2047
        %v2144 = vmul.f32 %v2099, %v2048
        %v2145 = vmul.f32 %v2104, %v2049
        %v2146 = vmul.f32 %v2109, %v2050
        %v2147 = vmul.f32 %v2114, %v2051
        %v2148 = vmul.f32 %v2119, %v2052
        %v2149 = vmul.f32 %v2124, %v2053
        %v2150 = vmul.f32 %v2129, %v2054
        %v2151 = vmul.f32 %v2134, %v2055
        %v2152 = vpack.c.bf16 %v1913, %v1911
        %v2153 = vpack.c.bf16 %v1917, %v1915
        %v2154 = vpack.c.bf16 %v1921, %v1919
        %v2155 = vpack.c.bf16 %v1925, %v1923
        %v2156 = vpack.c.bf16 %v1929, %v1927
        %v2157 = vpack.c.bf16 %v1933, %v1931
        %v2158 = vpack.c.bf16 %v1937, %v1935
        %v2159 = vpack.c.bf16 %v1941, %v1939
        %2160 = vrot.lane.b32.xlu0 %v1516, 48
        %v2161 = vpop.permute.xlu0 %2160
        %2162 = vrot.lane.b32.xlu0 %v1517, 48
        %v2163 = vpop.permute.xlu0 %2162
        %2164 = vrot.lane.b32.xlu0 %v1518, 48
        %v2165 = vpop.permute.xlu0 %2164
        %2166 = vrot.lane.b32.xlu0 %v1519, 48
        %v2167 = vpop.permute.xlu0 %2166
        %2168 = vrot.lane.b32.xlu0 %v1520, 48
        %v2169 = vpop.permute.xlu0 %2168
        %2170 = vrot.lane.b32.xlu0 %v1521, 48
        %v2171 = vpop.permute.xlu0 %2170
        %2172 = vrot.lane.b32.xlu0 %v1522, 48
        %v2173 = vpop.permute.xlu0 %2172
        %2174 = vrot.lane.b32.xlu0 %v1523, 48
        %v2175 = vpop.permute.xlu0 %2174
        %2184 = vmatprep.subr.bf16.mxu0 0
        %2185 = vmatpush1.bf16.msra.mxu0 %v2175
        %2186 = vmatprep.subr.bf16.mxu0 0
        %2187 = vmatpush1.bf16.msra.mxu0 %v2173
        %2188 = vmatprep.subr.bf16.mxu0 0
        %2189 = vmatpush1.bf16.msra.mxu0 %v2171
        %2190 = vmatprep.subr.bf16.mxu0 0
        %2191 = vmatpush1.bf16.msra.mxu0 %v2169
        %2192 = vmatprep.subr.bf16.mxu0 0
        %2193 = vmatpush1.bf16.msra.mxu0 %v2167
        %2194 = vmatprep.subr.bf16.mxu0 0
        %2195 = vmatpush1.bf16.msra.mxu0 %v2165
        %2196 = vmatprep.subr.bf16.mxu0 0
        %2197 = vmatpush1.bf16.msra.mxu0 %v2163
        %2198 = vmatprep.subr.bf16.mxu0 0
        %2199 = vmatpush1.bf16.msra.mxu0 %v2161
        %2200 = vmatprep.subr.bf16.mxu0 0
        %2201 = vmatpush2.bf16.msra.mxu0 0
        %2202 = vmatprep.subr.bf16.mxu0 0
        %2203 = vmatpush2.bf16.msra.mxu0 0
        %2204 = vmatprep.subr.bf16.mxu0 0
        %2205 = vmatpush2.bf16.msra.mxu0 0
        %2206 = vmatprep.subr.bf16.mxu0 0
        %2207 = vmatpush2.bf16.msra.mxu0 0
        %2208 = vmatprep.subr.bf16.mxu0 0
        %2209 = vmatpush2.bf16.msra.mxu0 0
        %2210 = vmatprep.subr.bf16.mxu0 0
        %2211 = vmatpush2.bf16.msra.mxu0 0
        %2212 = vmatprep.subr.bf16.mxu0 0
        %2213 = vmatpush2.bf16.msra.mxu0 0
        %2214 = vmatprep.subr.bf16.mxu0 0
        %2215 = vmatpush2.bf16.msra.mxu0 0
        %2216 = vmatprep.mubr.bf16.mxu0 0
        %2217 = vmatmul.mubr.bf16.gmra.mxu0 %v2152
        %v2218 = vpop.f32.mrf.mxu0
        %v2219 = vadd.f32 0.0, %v2218
        %v2220 = vpop.f32.mrf.mxu0
        %v2221 = vpop.f32.mrf.mxu0
        %v2222 = vadd.f32 0.0, %v2221
        %v2223 = vpop.f32.mrf.mxu0
        %2224 = vmatprep.mubr.bf16.mxu0 0
        %2225 = vmatmul.mubr.bf16.gmra.mxu0 %v2153
        %v2226 = vpop.f32.mrf.mxu0
        %v2227 = vadd.f32 0.0, %v2226
        %v2228 = vpop.f32.mrf.mxu0
        %v2229 = vpop.f32.mrf.mxu0
        %v2230 = vadd.f32 0.0, %v2229
        %v2231 = vpop.f32.mrf.mxu0
        %2232 = vmatprep.mubr.bf16.mxu0 0
        %2233 = vmatmul.mubr.bf16.gmra.mxu0 %v2154
        %v2234 = vpop.f32.mrf.mxu0
        %v2235 = vadd.f32 0.0, %v2234
        %v2236 = vpop.f32.mrf.mxu0
        %v2237 = vpop.f32.mrf.mxu0
        %v2238 = vadd.f32 0.0, %v2237
        %v2239 = vpop.f32.mrf.mxu0
        %2240 = vmatprep.mubr.bf16.mxu0 0
        %2241 = vmatmul.mubr.bf16.gmra.mxu0 %v2155
        %v2242 = vpop.f32.mrf.mxu0
        %v2243 = vadd.f32 0.0, %v2242
        %v2244 = vpop.f32.mrf.mxu0
        %v2245 = vpop.f32.mrf.mxu0
        %v2246 = vadd.f32 0.0, %v2245
        %v2247 = vpop.f32.mrf.mxu0
        %2248 = vmatprep.mubr.bf16.mxu0 0
        %2249 = vmatmul.mubr.bf16.gmra.mxu0 %v2156
        %v2250 = vpop.f32.mrf.mxu0
        %v2251 = vadd.f32 0.0, %v2250
        %v2252 = vpop.f32.mrf.mxu0
        %v2253 = vpop.f32.mrf.mxu0
        %v2254 = vadd.f32 0.0, %v2253
        %v2255 = vpop.f32.mrf.mxu0
        %2256 = vmatprep.mubr.bf16.mxu0 0
        %2257 = vmatmul.mubr.bf16.gmra.mxu0 %v2157
        %v2258 = vpop.f32.mrf.mxu0
        %v2259 = vadd.f32 0.0, %v2258
        %v2260 = vpop.f32.mrf.mxu0
        %v2261 = vpop.f32.mrf.mxu0
        %v2262 = vadd.f32 0.0, %v2261
        %v2263 = vpop.f32.mrf.mxu0
        %2264 = vmatprep.mubr.bf16.mxu0 0
        %2265 = vmatmul.mubr.bf16.gmra.mxu0 %v2158
        %v2266 = vpop.f32.mrf.mxu0
        %v2267 = vadd.f32 0.0, %v2266
        %v2268 = vpop.f32.mrf.mxu0
        %v2269 = vpop.f32.mrf.mxu0
        %v2270 = vadd.f32 0.0, %v2269
        %v2271 = vpop.f32.mrf.mxu0
        %2272 = vmatprep.mubr.bf16.mxu0 0
        %2273 = vmatmul.mubr.bf16.gmra.mxu0 %v2159
        %v2274 = vpop.f32.mrf.mxu0
        %v2275 = vadd.f32 0.0, %v2274
        %v2276 = vpop.f32.mrf.mxu0
        %v2277 = vpop.f32.mrf.mxu0
        %v2278 = vadd.f32 0.0, %v2277
        %v2279 = vpop.f32.mrf.mxu0
        %2280 = vdwg.mxu0
        %v2281 = vadd.f32 %v2136, %v2219
        %v2282 = vadd.f32 %v2137, %v2222
        %v2283 = vadd.f32 %v2138, %v2227
        %v2284 = vadd.f32 %v2139, %v2230
        %v2285 = vadd.f32 %v2140, %v2235
        %v2286 = vadd.f32 %v2141, %v2238
        %v2287 = vadd.f32 %v2142, %v2243
        %v2288 = vadd.f32 %v2143, %v2246
        %v2289 = vadd.f32 %v2144, %v2251
        %v2290 = vadd.f32 %v2145, %v2254
        %v2291 = vadd.f32 %v2146, %v2259
        %v2292 = vadd.f32 %v2147, %v2262
        %v2293 = vadd.f32 %v2148, %v2267
        %v2294 = vadd.f32 %v2149, %v2270
        %v2295 = vadd.f32 %v2150, %v2275
        %v2296 = vadd.f32 %v2151, %v2278
        %2297 = vst.msk [vmem:[%s2039] sm:$0xff] %vm608, %v2281
        %2298 = vst.msk [vmem:[%s2039 + $0x8] sm:$0xff] %vm608, %v2282
        %2299 = vst.msk [vmem:[%s2039 + $0x10] sm:$0xff] %vm608, %v2283
        %2300 = vst.msk [vmem:[%s2039 + $0x18] sm:$0xff] %vm608, %v2284
        %2301 = vst.msk [vmem:[%s2039 + $0x20] sm:$0xff] %vm608, %v2285
        %2302 = vst.msk [vmem:[%s2039 + $0x28] sm:$0xff] %vm608, %v2286
        %2303 = vst.msk [vmem:[%s2039 + $0x30] sm:$0xff] %vm608, %v2287
        %2304 = vst.msk [vmem:[%s2039 + $0x38] sm:$0xff] %vm608, %v2288
        %2305 = vst.msk [vmem:[%s2039 + $0x40] sm:$0xff] %vm608, %v2289
        %2306 = vst.msk [vmem:[%s2039 + $0x48] sm:$0xff] %vm608, %v2290
        %2307 = vst.msk [vmem:[%s2039 + $0x50] sm:$0xff] %vm608, %v2291
        %2308 = vst.msk [vmem:[%s2039 + $0x58] sm:$0xff] %vm608, %v2292
        %2309 = vst.msk [vmem:[%s2039 + $0x60] sm:$0xff] %vm608, %v2293
        %2310 = vst.msk [vmem:[%s2039 + $0x68] sm:$0xff] %vm608, %v2294
        %2311 = vst.msk [vmem:[%s2039 + $0x70] sm:$0xff] %vm608, %v2295
        %2312 = vst.msk [vmem:[%s2039 + $0x78] sm:$0xff] %vm608, %v2296
        %2313 = vst.msk [vmem:[%s1701] sm:$0xff] %vm1090, %v1750
        %2314 = vst.msk [vmem:[%s1701 + $0x8] sm:$0xff] %vm1090, %v1751
        %2315 = vst.msk [vmem:[%s1701 + $0x10] sm:$0xff] %vm1090, %v1752
        %2316 = vst.msk [vmem:[%s1701 + $0x18] sm:$0xff] %vm1090, %v1753
        %2317 = vst.msk [vmem:[%s1701 + $0x20] sm:$0xff] %vm1090, %v1754
        %2318 = vst.msk [vmem:[%s1701 + $0x28] sm:$0xff] %vm1090, %v1755
        %2319 = vst.msk [vmem:[%s1701 + $0x30] sm:$0xff] %vm1090, %v1756
        %2320 = vst.msk [vmem:[%s1701 + $0x38] sm:$0xff] %vm1090, %v1757
        %2321 = vst.msk [vmem:[%s1701 + $0x40] sm:$0xff] %vm1090, %v1758
        %2322 = vst.msk [vmem:[%s1701 + $0x48] sm:$0xff] %vm1090, %v1759
        %2323 = vst.msk [vmem:[%s1701 + $0x50] sm:$0xff] %vm1090, %v1760
        %2324 = vst.msk [vmem:[%s1701 + $0x58] sm:$0xff] %vm1090, %v1761
        %2325 = vst.msk [vmem:[%s1701 + $0x60] sm:$0xff] %vm1090, %v1762
        %2326 = vst.msk [vmem:[%s1701 + $0x68] sm:$0xff] %vm1090, %v1763
        %2327 = vst.msk [vmem:[%s1701 + $0x70] sm:$0xff] %vm1090, %v1764
        %2328 = vst.msk [vmem:[%s1701 + $0x78] sm:$0xff] %vm1090, %v1765
      $region44: #{xformers_model_forward.4} parent=35 // pred_fallthru
        _
      %p2329 = scmp.eq.s32.totalorder %s27, 1
      // Predicated region
      $region45: #{xformers_model_forward.4} parent=35 // pred_check
        %p2330 = pneg %p2329
      $region46: #{xformers_model_forward.4} parent=35 // pred_check_branch
        %2332 = sbr.rel (%p2330) target = $region48
      $region47: #{xformers_model_forward.4} parent=35 // pred_region
        %v2333 = vld [vmem:[#allocation3] sm:$0xff]
        %v2334 = vld [vmem:[#allocation3 + $0x8] sm:$0xff]
        %v2335 = vld [vmem:[#allocation3 + $0x10] sm:$0xff]
        %v2336 = vld [vmem:[#allocation3 + $0x18] sm:$0xff]
        %v2337 = vld [vmem:[#allocation3 + $0x20] sm:$0xff]
        %v2338 = vld [vmem:[#allocation3 + $0x28] sm:$0xff]
        %v2339 = vld [vmem:[#allocation3 + $0x30] sm:$0xff]
        %v2340 = vld [vmem:[#allocation3 + $0x38] sm:$0xff]
        %v2341 = vld [vmem:[#allocation3 + $0x40] sm:$0xff]
        %v2342 = vld [vmem:[#allocation3 + $0x48] sm:$0xff]
        %v2343 = vld [vmem:[#allocation3 + $0x50] sm:$0xff]
        %v2344 = vld [vmem:[#allocation3 + $0x58] sm:$0xff]
        %v2345 = vld [vmem:[#allocation3 + $0x60] sm:$0xff]
        %v2346 = vld [vmem:[#allocation3 + $0x68] sm:$0xff]
        %v2347 = vld [vmem:[#allocation3 + $0x70] sm:$0xff]
        %v2348 = vld [vmem:[#allocation3 + $0x78] sm:$0xff]
        %vm2349 = vcmp.eq.f32.partialorder %v2333, 0.0
        %vm2350 = vcmp.eq.f32.partialorder %v2334, 0.0
        %vm2351 = vcmp.eq.f32.partialorder %v2335, 0.0
        %vm2352 = vcmp.eq.f32.partialorder %v2336, 0.0
        %vm2353 = vcmp.eq.f32.partialorder %v2337, 0.0
        %vm2354 = vcmp.eq.f32.partialorder %v2338, 0.0
        %vm2355 = vcmp.eq.f32.partialorder %v2339, 0.0
        %vm2356 = vcmp.eq.f32.partialorder %v2340, 0.0
        %vm2357 = vcmp.eq.f32.partialorder %v2341, 0.0
        %vm2358 = vcmp.eq.f32.partialorder %v2342, 0.0
        %vm2359 = vcmp.eq.f32.partialorder %v2343, 0.0
        %vm2360 = vcmp.eq.f32.partialorder %v2344, 0.0
        %vm2361 = vcmp.eq.f32.partialorder %v2345, 0.0
        %vm2362 = vcmp.eq.f32.partialorder %v2346, 0.0
        %vm2363 = vcmp.eq.f32.partialorder %v2347, 0.0
        %vm2364 = vcmp.eq.f32.partialorder %v2348, 0.0
        %v2365 = vsel %vm2349, 1.0, %v2333
        %v2366 = vsel %vm2350, 1.0, %v2334
        %v2367 = vsel %vm2351, 1.0, %v2335
        %v2368 = vsel %vm2352, 1.0, %v2336
        %v2369 = vsel %vm2353, 1.0, %v2337
        %v2370 = vsel %vm2354, 1.0, %v2338
        %v2371 = vsel %vm2355, 1.0, %v2339
        %v2372 = vsel %vm2356, 1.0, %v2340
        %v2373 = vsel %vm2357, 1.0, %v2341
        %v2374 = vsel %vm2358, 1.0, %v2342
        %v2375 = vsel %vm2359, 1.0, %v2343
        %v2376 = vsel %vm2360, 1.0, %v2344
        %v2377 = vsel %vm2361, 1.0, %v2345
        %v2378 = vsel %vm2362, 1.0, %v2346
        %v2379 = vsel %vm2363, 1.0, %v2347
        %v2380 = vsel %vm2364, 1.0, %v2348
        %v2381 = vld [vmem:[#allocation4] sm:$0xff]
        %v2382 = vld [vmem:[#allocation4 + $0x8] sm:$0xff]
        %v2383 = vld [vmem:[#allocation4 + $0x10] sm:$0xff]
        %v2384 = vld [vmem:[#allocation4 + $0x18] sm:$0xff]
        %v2385 = vld [vmem:[#allocation4 + $0x20] sm:$0xff]
        %v2386 = vld [vmem:[#allocation4 + $0x28] sm:$0xff]
        %v2387 = vld [vmem:[#allocation4 + $0x30] sm:$0xff]
        %v2388 = vld [vmem:[#allocation4 + $0x38] sm:$0xff]
        %v2389 = vld [vmem:[#allocation4 + $0x40] sm:$0xff]
        %v2390 = vld [vmem:[#allocation4 + $0x48] sm:$0xff]
        %v2391 = vld [vmem:[#allocation4 + $0x50] sm:$0xff]
        %v2392 = vld [vmem:[#allocation4 + $0x58] sm:$0xff]
        %v2393 = vld [vmem:[#allocation4 + $0x60] sm:$0xff]
        %v2394 = vld [vmem:[#allocation4 + $0x68] sm:$0xff]
        %v2395 = vld [vmem:[#allocation4 + $0x70] sm:$0xff]
        %v2396 = vld [vmem:[#allocation4 + $0x78] sm:$0xff]
        %v2397 = vrcp.pop %v2365
        %v2398 = vrcp.pop %v2366
        %v2399 = vrcp.pop %v2367
        %v2400 = vrcp.pop %v2368
        %v2401 = vrcp.pop %v2369
        %v2402 = vrcp.pop %v2370
        %v2403 = vrcp.pop %v2371
        %v2404 = vrcp.pop %v2372
        %v2405 = vrcp.pop %v2373
        %v2406 = vrcp.pop %v2374
        %v2407 = vrcp.pop %v2375
        %v2408 = vrcp.pop %v2376
        %v2409 = vrcp.pop %v2377
        %v2410 = vrcp.pop %v2378
        %v2411 = vrcp.pop %v2379
        %v2412 = vrcp.pop %v2380
        %2414 = vset.pattern.permute.xlu0 0
        %2415 = vperm.xlu0 %2414, %v2397
        %v2416 = vpop.permute.xlu0 %2415
        %2419 = vset.pattern.permute.xlu0 0
        %2420 = vperm.xlu0 %2419, %v2398
        %v2421 = vpop.permute.xlu0 %2420
        %2424 = vset.pattern.permute.xlu0 0
        %2425 = vperm.xlu0 %2424, %v2399
        %v2426 = vpop.permute.xlu0 %2425
        %2429 = vset.pattern.permute.xlu0 0
        %2430 = vperm.xlu0 %2429, %v2400
        %v2431 = vpop.permute.xlu0 %2430
        %2434 = vset.pattern.permute.xlu0 0
        %2435 = vperm.xlu0 %2434, %v2401
        %v2436 = vpop.permute.xlu0 %2435
        %2439 = vset.pattern.permute.xlu0 0
        %2440 = vperm.xlu0 %2439, %v2402
        %v2441 = vpop.permute.xlu0 %2440
        %2444 = vset.pattern.permute.xlu0 0
        %2445 = vperm.xlu0 %2444, %v2403
        %v2446 = vpop.permute.xlu0 %2445
        %2449 = vset.pattern.permute.xlu0 0
        %2450 = vperm.xlu0 %2449, %v2404
        %v2451 = vpop.permute.xlu0 %2450
        %2454 = vset.pattern.permute.xlu0 0
        %2455 = vperm.xlu0 %2454, %v2405
        %v2456 = vpop.permute.xlu0 %2455
        %2459 = vset.pattern.permute.xlu0 0
        %2460 = vperm.xlu0 %2459, %v2406
        %v2461 = vpop.permute.xlu0 %2460
        %2464 = vset.pattern.permute.xlu0 0
        %2465 = vperm.xlu0 %2464, %v2407
        %v2466 = vpop.permute.xlu0 %2465
        %2469 = vset.pattern.permute.xlu0 0
        %2470 = vperm.xlu0 %2469, %v2408
        %v2471 = vpop.permute.xlu0 %2470
        %2474 = vset.pattern.permute.xlu0 0
        %2475 = vperm.xlu0 %2474, %v2409
        %v2476 = vpop.permute.xlu0 %2475
        %2479 = vset.pattern.permute.xlu0 0
        %2480 = vperm.xlu0 %2479, %v2410
        %v2481 = vpop.permute.xlu0 %2480
        %2484 = vset.pattern.permute.xlu0 0
        %2485 = vperm.xlu0 %2484, %v2411
        %v2486 = vpop.permute.xlu0 %2485
        %2489 = vset.pattern.permute.xlu0 0
        %2490 = vperm.xlu0 %2489, %v2412
        %v2491 = vpop.permute.xlu0 %2490
        %v2493 = vmul.f32 %v2381, %v2416
        %v2494 = vmul.f32 %v2382, %v2421
        %v2495 = vmul.f32 %v2383, %v2426
        %v2496 = vmul.f32 %v2384, %v2431
        %v2497 = vmul.f32 %v2385, %v2436
        %v2498 = vmul.f32 %v2386, %v2441
        %v2499 = vmul.f32 %v2387, %v2446
        %v2500 = vmul.f32 %v2388, %v2451
        %v2501 = vmul.f32 %v2389, %v2456
        %v2502 = vmul.f32 %v2390, %v2461
        %v2503 = vmul.f32 %v2391, %v2466
        %v2504 = vmul.f32 %v2392, %v2471
        %v2505 = vmul.f32 %v2393, %v2476
        %v2506 = vmul.f32 %v2394, %v2481
        %v2507 = vmul.f32 %v2395, %v2486
        %v2508 = vmul.f32 %v2396, %v2491
        %s2509 = scalar_lea.vmem [#allocation3], 128
        %v2510 = vld [vmem:[%s2509] sm:$0xff]
        %v2511 = vld [vmem:[%s2509 + $0x8] sm:$0xff]
        %v2512 = vld [vmem:[%s2509 + $0x10] sm:$0xff]
        %v2513 = vld [vmem:[%s2509 + $0x18] sm:$0xff]
        %v2514 = vld [vmem:[%s2509 + $0x20] sm:$0xff]
        %v2515 = vld [vmem:[%s2509 + $0x28] sm:$0xff]
        %v2516 = vld [vmem:[%s2509 + $0x30] sm:$0xff]
        %v2517 = vld [vmem:[%s2509 + $0x38] sm:$0xff]
        %v2518 = vld [vmem:[%s2509 + $0x40] sm:$0xff]
        %v2519 = vld [vmem:[%s2509 + $0x48] sm:$0xff]
        %v2520 = vld [vmem:[%s2509 + $0x50] sm:$0xff]
        %v2521 = vld [vmem:[%s2509 + $0x58] sm:$0xff]
        %v2522 = vld [vmem:[%s2509 + $0x60] sm:$0xff]
        %v2523 = vld [vmem:[%s2509 + $0x68] sm:$0xff]
        %v2524 = vld [vmem:[%s2509 + $0x70] sm:$0xff]
        %v2525 = vld [vmem:[%s2509 + $0x78] sm:$0xff]
        %vm2526 = vcmp.eq.f32.partialorder %v2510, 0.0
        %vm2527 = vcmp.eq.f32.partialorder %v2511, 0.0
        %vm2528 = vcmp.eq.f32.partialorder %v2512, 0.0
        %vm2529 = vcmp.eq.f32.partialorder %v2513, 0.0
        %vm2530 = vcmp.eq.f32.partialorder %v2514, 0.0
        %vm2531 = vcmp.eq.f32.partialorder %v2515, 0.0
        %vm2532 = vcmp.eq.f32.partialorder %v2516, 0.0
        %vm2533 = vcmp.eq.f32.partialorder %v2517, 0.0
        %vm2534 = vcmp.eq.f32.partialorder %v2518, 0.0
        %vm2535 = vcmp.eq.f32.partialorder %v2519, 0.0
        %vm2536 = vcmp.eq.f32.partialorder %v2520, 0.0
        %vm2537 = vcmp.eq.f32.partialorder %v2521, 0.0
        %vm2538 = vcmp.eq.f32.partialorder %v2522, 0.0
        %vm2539 = vcmp.eq.f32.partialorder %v2523, 0.0
        %vm2540 = vcmp.eq.f32.partialorder %v2524, 0.0
        %vm2541 = vcmp.eq.f32.partialorder %v2525, 0.0
        %v2542 = vsel %vm2526, 1.0, %v2510
        %v2543 = vsel %vm2527, 1.0, %v2511
        %v2544 = vsel %vm2528, 1.0, %v2512
        %v2545 = vsel %vm2529, 1.0, %v2513
        %v2546 = vsel %vm2530, 1.0, %v2514
        %v2547 = vsel %vm2531, 1.0, %v2515
        %v2548 = vsel %vm2532, 1.0, %v2516
        %v2549 = vsel %vm2533, 1.0, %v2517
        %v2550 = vsel %vm2534, 1.0, %v2518
        %v2551 = vsel %vm2535, 1.0, %v2519
        %v2552 = vsel %vm2536, 1.0, %v2520
        %v2553 = vsel %vm2537, 1.0, %v2521
        %v2554 = vsel %vm2538, 1.0, %v2522
        %v2555 = vsel %vm2539, 1.0, %v2523
        %v2556 = vsel %vm2540, 1.0, %v2524
        %v2557 = vsel %vm2541, 1.0, %v2525
        %s2558 = scalar_lea.vmem [#allocation4], 128
        %v2559 = vld [vmem:[%s2558] sm:$0xff]
        %v2560 = vld [vmem:[%s2558 + $0x8] sm:$0xff]
        %v2561 = vld [vmem:[%s2558 + $0x10] sm:$0xff]
        %v2562 = vld [vmem:[%s2558 + $0x18] sm:$0xff]
        %v2563 = vld [vmem:[%s2558 + $0x20] sm:$0xff]
        %v2564 = vld [vmem:[%s2558 + $0x28] sm:$0xff]
        %v2565 = vld [vmem:[%s2558 + $0x30] sm:$0xff]
        %v2566 = vld [vmem:[%s2558 + $0x38] sm:$0xff]
        %v2567 = vld [vmem:[%s2558 + $0x40] sm:$0xff]
        %v2568 = vld [vmem:[%s2558 + $0x48] sm:$0xff]
        %v2569 = vld [vmem:[%s2558 + $0x50] sm:$0xff]
        %v2570 = vld [vmem:[%s2558 + $0x58] sm:$0xff]
        %v2571 = vld [vmem:[%s2558 + $0x60] sm:$0xff]
        %v2572 = vld [vmem:[%s2558 + $0x68] sm:$0xff]
        %v2573 = vld [vmem:[%s2558 + $0x70] sm:$0xff]
        %v2574 = vld [vmem:[%s2558 + $0x78] sm:$0xff]
        %v2575 = vrcp.pop %v2542
        %v2576 = vrcp.pop %v2543
        %v2577 = vrcp.pop %v2544
        %v2578 = vrcp.pop %v2545
        %v2579 = vrcp.pop %v2546
        %v2580 = vrcp.pop %v2547
        %v2581 = vrcp.pop %v2548
        %v2582 = vrcp.pop %v2549
        %v2583 = vrcp.pop %v2550
        %v2584 = vrcp.pop %v2551
        %v2585 = vrcp.pop %v2552
        %v2586 = vrcp.pop %v2553
        %v2587 = vrcp.pop %v2554
        %v2588 = vrcp.pop %v2555
        %v2589 = vrcp.pop %v2556
        %v2590 = vrcp.pop %v2557
        %2592 = vset.pattern.permute.xlu0 0
        %2593 = vperm.xlu0 %2592, %v2575
        %v2594 = vpop.permute.xlu0 %2593
        %2597 = vset.pattern.permute.xlu0 0
        %2598 = vperm.xlu0 %2597, %v2576
        %v2599 = vpop.permute.xlu0 %2598
        %2602 = vset.pattern.permute.xlu0 0
        %2603 = vperm.xlu0 %2602, %v2577
        %v2604 = vpop.permute.xlu0 %2603
        %2607 = vset.pattern.permute.xlu0 0
        %2608 = vperm.xlu0 %2607, %v2578
        %v2609 = vpop.permute.xlu0 %2608
        %2612 = vset.pattern.permute.xlu0 0
        %2613 = vperm.xlu0 %2612, %v2579
        %v2614 = vpop.permute.xlu0 %2613
        %2617 = vset.pattern.permute.xlu0 0
        %2618 = vperm.xlu0 %2617, %v2580
        %v2619 = vpop.permute.xlu0 %2618
        %2622 = vset.pattern.permute.xlu0 0
        %2623 = vperm.xlu0 %2622, %v2581
        %v2624 = vpop.permute.xlu0 %2623
        %2627 = vset.pattern.permute.xlu0 0
        %2628 = vperm.xlu0 %2627, %v2582
        %v2629 = vpop.permute.xlu0 %2628
        %2632 = vset.pattern.permute.xlu0 0
        %2633 = vperm.xlu0 %2632, %v2583
        %v2634 = vpop.permute.xlu0 %2633
        %2637 = vset.pattern.permute.xlu0 0
        %2638 = vperm.xlu0 %2637, %v2584
        %v2639 = vpop.permute.xlu0 %2638
        %2642 = vset.pattern.permute.xlu0 0
        %2643 = vperm.xlu0 %2642, %v2585
        %v2644 = vpop.permute.xlu0 %2643
        %2647 = vset.pattern.permute.xlu0 0
        %2648 = vperm.xlu0 %2647, %v2586
        %v2649 = vpop.permute.xlu0 %2648
        %2652 = vset.pattern.permute.xlu0 0
        %2653 = vperm.xlu0 %2652, %v2587
        %v2654 = vpop.permute.xlu0 %2653
        %2657 = vset.pattern.permute.xlu0 0
        %2658 = vperm.xlu0 %2657, %v2588
        %v2659 = vpop.permute.xlu0 %2658
        %2662 = vset.pattern.permute.xlu0 0
        %2663 = vperm.xlu0 %2662, %v2589
        %v2664 = vpop.permute.xlu0 %2663
        %2667 = vset.pattern.permute.xlu0 0
        %2668 = vperm.xlu0 %2667, %v2590
        %v2669 = vpop.permute.xlu0 %2668
        %v2671 = vmul.f32 %v2559, %v2594
        %v2672 = vmul.f32 %v2560, %v2599
        %v2673 = vmul.f32 %v2561, %v2604
        %v2674 = vmul.f32 %v2562, %v2609
        %v2675 = vmul.f32 %v2563, %v2614
        %v2676 = vmul.f32 %v2564, %v2619
        %v2677 = vmul.f32 %v2565, %v2624
        %v2678 = vmul.f32 %v2566, %v2629
        %v2679 = vmul.f32 %v2567, %v2634
        %v2680 = vmul.f32 %v2568, %v2639
        %v2681 = vmul.f32 %v2569, %v2644
        %v2682 = vmul.f32 %v2570, %v2649
        %v2683 = vmul.f32 %v2571, %v2654
        %v2684 = vmul.f32 %v2572, %v2659
        %v2685 = vmul.f32 %v2573, %v2664
        %v2686 = vmul.f32 %v2574, %v2669
        %2703 = vrot.lane.b32.xlu0 %v2671, 16
        %v2704 = vpop.permute.xlu0 %2703
        %2705 = vrot.lane.b32.xlu0 %v2672, 16
        %v2706 = vpop.permute.xlu0 %2705
        %2707 = vrot.lane.b32.xlu0 %v2673, 16
        %v2708 = vpop.permute.xlu0 %2707
        %2709 = vrot.lane.b32.xlu0 %v2674, 16
        %v2710 = vpop.permute.xlu0 %2709
        %2711 = vrot.lane.b32.xlu0 %v2675, 16
        %v2712 = vpop.permute.xlu0 %2711
        %2713 = vrot.lane.b32.xlu0 %v2676, 16
        %v2714 = vpop.permute.xlu0 %2713
        %2715 = vrot.lane.b32.xlu0 %v2677, 16
        %v2716 = vpop.permute.xlu0 %2715
        %2717 = vrot.lane.b32.xlu0 %v2678, 16
        %v2718 = vpop.permute.xlu0 %2717
        %2719 = vrot.lane.b32.xlu0 %v2679, 16
        %v2720 = vpop.permute.xlu0 %2719
        %2721 = vrot.lane.b32.xlu0 %v2680, 16
        %v2722 = vpop.permute.xlu0 %2721
        %2723 = vrot.lane.b32.xlu0 %v2681, 16
        %v2724 = vpop.permute.xlu0 %2723
        %2725 = vrot.lane.b32.xlu0 %v2682, 16
        %v2726 = vpop.permute.xlu0 %2725
        %2727 = vrot.lane.b32.xlu0 %v2683, 16
        %v2728 = vpop.permute.xlu0 %2727
        %2729 = vrot.lane.b32.xlu0 %v2684, 16
        %v2730 = vpop.permute.xlu0 %2729
        %2731 = vrot.lane.b32.xlu0 %v2685, 16
        %v2732 = vpop.permute.xlu0 %2731
        %2733 = vrot.lane.b32.xlu0 %v2686, 16
        %v2734 = vpop.permute.xlu0 %2733
        %vm2751 = vcmask 130048
        %v2752 = vsel %vm2751, %v2493, %v2704
        %v2753 = vsel %vm2751, %v2494, %v2706
        %v2754 = vsel %vm2751, %v2495, %v2708
        %v2755 = vsel %vm2751, %v2496, %v2710
        %v2756 = vsel %vm2751, %v2497, %v2712
        %v2757 = vsel %vm2751, %v2498, %v2714
        %v2758 = vsel %vm2751, %v2499, %v2716
        %v2759 = vsel %vm2751, %v2500, %v2718
        %v2760 = vsel %vm2751, %v2501, %v2720
        %v2761 = vsel %vm2751, %v2502, %v2722
        %v2762 = vsel %vm2751, %v2503, %v2724
        %v2763 = vsel %vm2751, %v2504, %v2726
        %v2764 = vsel %vm2751, %v2505, %v2728
        %v2765 = vsel %vm2751, %v2506, %v2730
        %v2766 = vsel %vm2751, %v2507, %v2732
        %v2767 = vsel %vm2751, %v2508, %v2734
        %vm2768 = vcmask 261120
        %v2769 = vsel %vm2768, %v2752, 0.0
        %v2770 = vsel %vm2768, %v2753, 0.0
        %v2771 = vsel %vm2768, %v2754, 0.0
        %v2772 = vsel %vm2768, %v2755, 0.0
        %v2773 = vsel %vm2768, %v2756, 0.0
        %v2774 = vsel %vm2768, %v2757, 0.0
        %v2775 = vsel %vm2768, %v2758, 0.0
        %v2776 = vsel %vm2768, %v2759, 0.0
        %v2777 = vsel %vm2768, %v2760, 0.0
        %v2778 = vsel %vm2768, %v2761, 0.0
        %v2779 = vsel %vm2768, %v2762, 0.0
        %v2780 = vsel %vm2768, %v2763, 0.0
        %v2781 = vsel %vm2768, %v2764, 0.0
        %v2782 = vsel %vm2768, %v2765, 0.0
        %v2783 = vsel %vm2768, %v2766, 0.0
        %v2784 = vsel %vm2768, %v2767, 0.0
        %v2785 = vpack.c.bf16 %v2770, %v2769
        %v2786 = vpack.c.bf16 %v2772, %v2771
        %v2787 = vpack.c.bf16 %v2774, %v2773
        %v2788 = vpack.c.bf16 %v2776, %v2775
        %v2789 = vpack.c.bf16 %v2778, %v2777
        %v2790 = vpack.c.bf16 %v2780, %v2779
        %v2791 = vpack.c.bf16 %v2782, %v2781
        %v2792 = vpack.c.bf16 %v2784, %v2783
        %v2801 = vunpack.c.l.b16 %v2785
        %v2802 = vunpack.c.h.b16 %v2785
        %v2803 = vunpack.c.l.b16 %v2786
        %v2804 = vunpack.c.h.b16 %v2786
        %v2805 = vunpack.c.l.b16 %v2787
        %v2806 = vunpack.c.h.b16 %v2787
        %v2807 = vunpack.c.l.b16 %v2788
        %v2808 = vunpack.c.h.b16 %v2788
        %v2809 = vunpack.c.l.b16 %v2789
        %v2810 = vunpack.c.h.b16 %v2789
        %v2811 = vunpack.c.l.b16 %v2790
        %v2812 = vunpack.c.h.b16 %v2790
        %v2813 = vunpack.c.l.b16 %v2791
        %v2814 = vunpack.c.h.b16 %v2791
        %v2815 = vunpack.c.l.b16 %v2792
        %v2816 = vunpack.c.h.b16 %v2792
        %v2817 = vpack.c.b16 %v2801, %v2801
        %v2818 = vpack.c.b16 %v2802, %v2802
        %v2819 = vpack.c.b16 %v2803, %v2803
        %v2820 = vpack.c.b16 %v2804, %v2804
        %v2821 = vpack.c.b16 %v2805, %v2805
        %v2822 = vpack.c.b16 %v2806, %v2806
        %v2823 = vpack.c.b16 %v2807, %v2807
        %v2824 = vpack.c.b16 %v2808, %v2808
        %v2825 = vpack.c.b16 %v2809, %v2809
        %v2826 = vpack.c.b16 %v2810, %v2810
        %v2827 = vpack.c.b16 %v2811, %v2811
        %v2828 = vpack.c.b16 %v2812, %v2812
        %v2829 = vpack.c.b16 %v2813, %v2813
        %v2830 = vpack.c.b16 %v2814, %v2814
        %v2831 = vpack.c.b16 %v2815, %v2815
        %v2832 = vpack.c.b16 %v2816, %v2816
        %2849 = vst [vmem:[%s276] sm:$0xf] %v2817
        %2850 = vst [vmem:[%s276 + $0x4] sm:$0xf] %v2818
        %2851 = vst [vmem:[%s276 + $0x8] sm:$0xf] %v2819
        %2852 = vst [vmem:[%s276 + $0xc] sm:$0xf] %v2820
        %2853 = vst [vmem:[%s276 + $0x10] sm:$0xf] %v2821
        %2854 = vst [vmem:[%s276 + $0x14] sm:$0xf] %v2822
        %2855 = vst [vmem:[%s276 + $0x18] sm:$0xf] %v2823
        %2856 = vst [vmem:[%s276 + $0x1c] sm:$0xf] %v2824
        %2857 = vst [vmem:[%s276 + $0x20] sm:$0xf] %v2825
        %2858 = vst [vmem:[%s276 + $0x24] sm:$0xf] %v2826
        %2859 = vst [vmem:[%s276 + $0x28] sm:$0xf] %v2827
        %2860 = vst [vmem:[%s276 + $0x2c] sm:$0xf] %v2828
        %2861 = vst [vmem:[%s276 + $0x30] sm:$0xf] %v2829
        %2862 = vst [vmem:[%s276 + $0x34] sm:$0xf] %v2830
        %2863 = vst [vmem:[%s276 + $0x38] sm:$0xf] %v2831
        %2864 = vst [vmem:[%s276 + $0x3c] sm:$0xf] %v2832
      $region48: #{xformers_model_forward.4} parent=35 // pred_fallthru
        _
      %s2865 = smul.u32 16, %s26
      %p2866 = scmp.lt.s32.totalorder %s2865, 31
      %s2867 = scalar_select %p2866, %s2865, 31
      %s2868 = smul.addr %s2867, 4
      %s2869 = scalar_lea.vmem %s5, %s2868
      // Predicated region
      $region49: #{xformers_model_forward.4} parent=35 // pred_check
        %p2870 = pneg %p156
      $region50: #{xformers_model_forward.4} parent=35 // pred_check_branch
        %2872 = sbr.rel (%p2870) target = $region52
      $region51: #{xformers_model_forward.4} parent=35 // pred_region
        %s2873 = smul.u32 16, %s26
      $region52: #{xformers_model_forward.4} parent=35 // pred_fallthru
        _
    $region36: #{xformers_model_forward.4} parent=5 // pred_fallthru
      _
    %p2874 = scmp.le.s32.totalorder 2, %s17
    // Predicated region
    $region53: #{xformers_model_forward.4} parent=5 // pred_check
      %p2875 = pneg %p2874
    $region54: #{xformers_model_forward.4} parent=5 // pred_check_branch
      %2877 = sbr.rel (%p2875) target = $region56
    $region55: #{xformers_model_forward.4} parent=5 // pred_region
      %s2878 = ssub.s32 %s17, 2
      // Predicated region
      $region57: #{xformers_model_forward.4} parent=55 // pred_check
        %p2879 = pneg %p162
      $region58: #{xformers_model_forward.4} parent=55 // pred_check_branch
        %2881 = sbr.rel (%p2879) target = $region60
      $region59: #{xformers_model_forward.4} parent=55 // pred_region
        %s2882 = smul.u32 16, %s28
        %p2883 = scmp.lt.s32.totalorder %s2882, 31
        %s2884 = scalar_select %p2883, %s2882, 31
        %s2885 = smul.addr %s2884, 4
        %s2886 = scalar_lea.vmem %s5, %s2885
      $region60: #{xformers_model_forward.4} parent=55 // pred_fallthru
        _
    $region56: #{xformers_model_forward.4} parent=5 // pred_fallthru
      _
  $region6: #{xformers_model_forward.4} parent=0 // loop_footer
    %s21 = sadd.s32 1, %s17
  $region7: #{xformers_model_forward.4} parent=0 // loop_footer_branch
    %16 = sbr.rel target = $region3
  $region8: #{xformers_model_forward.4} parent=0 // loop_exit
    _

</llo_original>
